<compile_context>
chip_gen: v7x
topology: tpu7x:2x2x1
jax: 0.10.0
libtpu: 0.0.40
codegen_flags: <defaults>
</compile_context>

<pallas_src>
import jax
import jax.numpy as jnp
from jax.experimental import pallas as pl
from jax.experimental.pallas import tpu as pltpu


def _round_up(x, m):
    return ((x + m - 1) // m) * m


# ----------------------------------------------------------------------------
# Pallas kernels
# ----------------------------------------------------------------------------
def _conv_pool_kernel(a00_ref, a01_ref, a10_ref, a11_ref, w_ref, b_ref, o_ref):
    """Fused conv (im2col matmul) + bias + 2x2 max-pool + ReLU.

    a{dh}{dw}_ref : [tm, K]  bf16  im2col rows of pool-window corner (dh, dw)
    w_ref         : [K, Co]  bf16  conv weight, [kh*kw*Cin, Cout] layout
    b_ref         : [1, Co]  f32
    o_ref         : [tm, Co] bf16  pooled + ReLU'd conv output rows (b, ph, pw)
    """
    w = w_ref[...]
    y = jnp.dot(a00_ref[...], w, preferred_element_type=jnp.float32)
    y = jnp.maximum(y, jnp.dot(a01_ref[...], w, preferred_element_type=jnp.float32))
    y = jnp.maximum(y, jnp.dot(a10_ref[...], w, preferred_element_type=jnp.float32))
    y = jnp.maximum(y, jnp.dot(a11_ref[...], w, preferred_element_type=jnp.float32))
    # max-pool commutes with the shared bias add and the monotone ReLU:
    # max(relu(A_i@W + b)) == relu(max(A_i@W) + b)
    y = jnp.maximum(y + b_ref[...], 0.0)
    o_ref[...] = y.astype(o_ref.dtype)


def _fc_head_kernel(x_ref, w1_ref, b1_ref, w2_ref, b2_ref, w3_ref, b3_ref, o_ref):
    """Fused fc1 -> relu -> fc2 -> relu -> fc3 -> log_softmax (f32 accumulate)."""
    h = jnp.dot(x_ref[...], w1_ref[...], preferred_element_type=jnp.float32) + b1_ref[...]
    h = jnp.maximum(h, 0.0).astype(jnp.bfloat16)
    h = jnp.dot(h, w2_ref[...], preferred_element_type=jnp.float32) + b2_ref[...]
    h = jnp.maximum(h, 0.0).astype(jnp.bfloat16)
    y = jnp.dot(h, w3_ref[...], preferred_element_type=jnp.float32) + b3_ref[...]
    m = jnp.max(y, axis=-1, keepdims=True)
    z = y - m
    lse = jnp.log(jnp.sum(jnp.exp(z), axis=-1, keepdims=True))
    o_ref[...] = (z - lse).astype(o_ref.dtype)


# ----------------------------------------------------------------------------
# pallas_call wrappers
# ----------------------------------------------------------------------------
_PARALLEL_1D = pltpu.CompilerParams(dimension_semantics=("parallel",))


def conv_relu_pool(corners, w, b, *, max_rows_per_tile=1024):
    """corners: four bf16 [R, K] im2col matrices (one per 2x2 pool corner)."""
    R, K = corners[0].shape
    Co = w.shape[1]
    tm = min(max_rows_per_tile, _round_up(R, 32))   # 32: safe sublane multiple for bf16/f32
    grid = (pl.cdiv(R, tm),)
    a_spec = pl.BlockSpec((tm, K), lambda i: (i, 0))
    return pl.pallas_call(
        _conv_pool_kernel,
        out_shape=jax.ShapeDtypeStruct((R, Co), jnp.bfloat16),
        grid=grid,
        in_specs=[a_spec, a_spec, a_spec, a_spec,
                  pl.BlockSpec((K, Co), lambda i: (0, 0)),    # weights: constant block,
                  pl.BlockSpec((1, Co), lambda i: (0, 0))],   # fetched once across grid
        out_specs=pl.BlockSpec((tm, Co), lambda i: (i, 0)),
        compiler_params=_PARALLEL_1D,
    )(*corners, w, b)


def fc_head(x, params, *, max_rows_per_tile=512):
    M, K = x.shape
    C = params["fc3_w"].shape[1]
    tm = min(max_rows_per_tile, _round_up(M, 32))
    grid = (pl.cdiv(M, tm),)

    def const(shape):
        return pl.BlockSpec(shape, lambda i: (0, 0))

    return pl.pallas_call(
        _fc_head_kernel,
        out_shape=jax.ShapeDtypeStruct((M, C), jnp.float32),
        grid=grid,
        in_specs=[pl.BlockSpec((tm, K), lambda i: (i, 0)),
                  const(params["fc1_w"].shape), const(params["fc1_b"].shape),
                  const(params["fc2_w"].shape), const(params["fc2_b"].shape),
                  const(params["fc3_w"].shape), const(params["fc3_b"].shape)],
        out_specs=pl.BlockSpec((tm, C), lambda i: (i, 0)),
        compiler_params=_PARALLEL_1D,
    )(x, params["fc1_w"], params["fc1_b"], params["fc2_w"], params["fc2_b"],
      params["fc3_w"], params["fc3_b"])


# ----------------------------------------------------------------------------
# XLA glue: im2col rows for one 2x2 pool-window corner
# ----------------------------------------------------------------------------
def _pool_corner_patches(x, kh, kw, dh, dw, po):
    """im2col rows for conv output positions (2*ph+dh, 2*pw+dw), ph/pw in [0, po).

    x: [B, H, W, C] NHWC. Returns [B*po*po, kh*kw*C] with patch index
    (i*kw + j) major / input-channel minor (matches the weight layout).
    """
    B, H, W, C = x.shape
    pieces = []
    for i in range(kh):
        for j in range(kw):
            r0, c0 = dh + i, dw + j
            pieces.append(x[:, r0:r0 + 2 * po - 1:2, c0:c0 + 2 * po - 1:2, :])
    p = jnp.stack(pieces, axis=3)                    # [B, po, po, kh*kw, C]
    return p.reshape(B * po * po, kh * kw * C)


# ----------------------------------------------------------------------------
# Model: parameter init + forward
# ----------------------------------------------------------------------------
def init_params(key, num_classes=10):
    ks = jax.random.split(key, 10)
    f32 = jnp.float32
    bf16 = jnp.bfloat16

    def rnd(k, shape, fan_in):
        return jax.random.normal(k, shape, dtype=f32) / jnp.sqrt(f32(fan_in))

    # Conv weights stored as [kh*kw*Cin, Cout] (patch-index major / channel minor).
    w1 = rnd(ks[0], (5 * 5 * 3, 6), 5 * 5 * 3)
    w2 = rnd(ks[2], (5 * 5 * 6, 16), 5 * 5 * 6)

    # fc1 in torch row order (c*25 + h*5 + w), then permute rows ONCE so the kernel
    # consumes the pooled NHWC activations flattened as (h, w, c) with no runtime
    # transpose. (torch fc1.weight is [120, 400]; this array is its transpose.)
    fc1_w_torch = rnd(ks[4], (16 * 5 * 5, 120), 400)
    f = jnp.arange(16 * 5 * 5)
    h_idx, w_idx, c_idx = f // 80, (f % 80) // 16, f % 16
    fc1_w = fc1_w_torch[c_idx * 25 + h_idx * 5 + w_idx, :]

    return {
        "w1": w1.astype(bf16), "b1": rnd(ks[1], (1, 6), 5 * 5 * 3),
        "w2": w2.astype(bf16), "b2": rnd(ks[3], (1, 16), 5 * 5 * 6),
        "fc1_w": fc1_w.astype(bf16), "fc1_b": rnd(ks[5], (1, 120), 400),
        "fc2_w": rnd(ks[6], (120, 84), 120).astype(bf16),
        "fc2_b": rnd(ks[7], (1, 84), 120),
        "fc3_w": rnd(ks[8], (84, num_classes), 84).astype(bf16),
        "fc3_b": rnd(ks[9], (1, num_classes), 84),
    }


@jax.jit
def cnn_cifar_forward(x_nchw, params):
    # NCHW (PyTorch) -> NHWC; bf16 MXU inputs, f32 accumulation inside kernels.
    x = jnp.transpose(x_nchw, (0, 2, 3, 1)).astype(jnp.bfloat16)
    B = x.shape[0]

    # conv1 (3->6, 5x5) + ReLU + 2x2 max-pool  -> one fused kernel
    corners = [_pool_corner_patches(x, 5, 5, dh, dw, 14)
               for dh in (0, 1) for dw in (0, 1)]
    y = conv_relu_pool(corners, params["w1"], params["b1"])      # [B*14*14, 6]
    y = y.reshape(B, 14, 14, 6)

    # conv2 (6->16, 5x5) + ReLU + 2x2 max-pool -> one fused kernel
    corners = [_pool_corner_patches(y, 5, 5, dh, dw, 5)
               for dh in (0, 1) for dw in (0, 1)]
    y = conv_relu_pool(corners, params["w2"], params["b2"])      # [B*5*5, 16]

    # Flatten in (h, w, c) order; the NCHW permutation implied by torch's
    # x.view(-1, 400) is folded into fc1_w's rows at init (no transpose here).
    y = y.reshape(B, 5 * 5 * 16)

    # fc1 -> relu -> fc2 -> relu -> fc3 -> log_softmax -> one fused kernel
    return fc_head(y, params)                                    # [B, num_classes] f32


if __name__ == "__main__":
    key = jax.random.PRNGKey(0)
    k_x, k_p = jax.random.split(key)

    # CIFAR-shaped input (32x32 required for the 16*5*5 flatten), batch=2
    x = jax.random.normal(k_x, (2, 3, 32, 32), dtype=jnp.float32)
    params = init_params(k_p, num_classes=10)

    out = jax.block_until_ready(cnn_cifar_forward(x, params))

    assert out.shape == (2, 10)
    # log_softmax rows must exponentiate-sum to ~1
    row_sums = jnp.exp(out).sum(axis=1)
    assert bool(jnp.all(jnp.abs(row_sums - 1.0) < 1e-4))

    print("KERNEL_OK")
</pallas_src>

<mosaic_0001>
module attributes {stable_mosaic.version = 11 : i64} {
  func.func @_conv_pool_kernel(%arg0: i32, %arg1: memref<416x75xbf16, #tpu.memory_space<vmem>>, %arg2: memref<416x75xbf16, #tpu.memory_space<vmem>>, %arg3: memref<416x75xbf16, #tpu.memory_space<vmem>>, %arg4: memref<416x75xbf16, #tpu.memory_space<vmem>>, %arg5: memref<75x6xbf16, #tpu.memory_space<vmem>>, %arg6: memref<1x6xf32, #tpu.memory_space<vmem>>, %arg7: memref<416x6xbf16, #tpu.memory_space<vmem>>) attributes {dimension_semantics = [#tpu.dimension_semantics<parallel>], iteration_bounds = array<i64: 1>, scalar_prefetch = 0 : i64, scratch_operands = 0 : i64, tpu.core_type = #tpu.core_type<tc>, window_params = [{transform_indices = @transform_0, window_bounds = array<i64: 416, 75>}, {transform_indices = @transform_1, window_bounds = array<i64: 416, 75>}, {transform_indices = @transform_2, window_bounds = array<i64: 416, 75>}, {transform_indices = @transform_3, window_bounds = array<i64: 416, 75>}, {pipeline_mode = #tpu.pipeline_mode<synchronous>, transform_indices = @transform_4, window_bounds = array<i64: 75, 6>}, {pipeline_mode = #tpu.pipeline_mode<synchronous>, transform_indices = @transform_5, window_bounds = array<i64: 1, 6>}, {transform_indices = @transform_6, window_bounds = array<i64: 416, 6>}]} {
    %c0 = arith.constant 0 : index
    %c0_0 = arith.constant 0 : index
    %0 = vector.load %arg5[%c0, %c0_0] : memref<75x6xbf16, #tpu.memory_space<vmem>>, vector<75x6xbf16>
    %c0_1 = arith.constant 0 : index
    %c0_2 = arith.constant 0 : index
    %1 = vector.load %arg1[%c0_1, %c0_2] : memref<416x75xbf16, #tpu.memory_space<vmem>>, vector<416x75xbf16>
    %cst = arith.constant dense<0.000000e+00> : vector<416x6xf32>
    %2 = tpu.matmul %1, %0, %cst {dimension_numbers = #tpu.dot_dimension_numbers<[1], [0], [0], [1], [0, 0, 1, 1], [], []>} : vector<416x75xbf16>, vector<75x6xbf16>, vector<416x6xf32> -> vector<416x6xf32>
    %c0_3 = arith.constant 0 : index
    %c0_4 = arith.constant 0 : index
    %3 = vector.load %arg2[%c0_3, %c0_4] : memref<416x75xbf16, #tpu.memory_space<vmem>>, vector<416x75xbf16>
    %cst_5 = arith.constant dense<0.000000e+00> : vector<416x6xf32>
    %4 = tpu.matmul %3, %0, %cst_5 {dimension_numbers = #tpu.dot_dimension_numbers<[1], [0], [0], [1], [0, 0, 1, 1], [], []>} : vector<416x75xbf16>, vector<75x6xbf16>, vector<416x6xf32> -> vector<416x6xf32>
    %5 = arith.maximumf %2, %4 : vector<416x6xf32>
    %c0_6 = arith.constant 0 : index
    %c0_7 = arith.constant 0 : index
    %6 = vector.load %arg3[%c0_6, %c0_7] : memref<416x75xbf16, #tpu.memory_space<vmem>>, vector<416x75xbf16>
    %cst_8 = arith.constant dense<0.000000e+00> : vector<416x6xf32>
    %7 = tpu.matmul %6, %0, %cst_8 {dimension_numbers = #tpu.dot_dimension_numbers<[1], [0], [0], [1], [0, 0, 1, 1], [], []>} : vector<416x75xbf16>, vector<75x6xbf16>, vector<416x6xf32> -> vector<416x6xf32>
    %8 = arith.maximumf %5, %7 : vector<416x6xf32>
    %c0_9 = arith.constant 0 : index
    %c0_10 = arith.constant 0 : index
    %9 = vector.load %arg4[%c0_9, %c0_10] : memref<416x75xbf16, #tpu.memory_space<vmem>>, vector<416x75xbf16>
    %cst_11 = arith.constant dense<0.000000e+00> : vector<416x6xf32>
    %10 = tpu.matmul %9, %0, %cst_11 {dimension_numbers = #tpu.dot_dimension_numbers<[1], [0], [0], [1], [0, 0, 1, 1], [], []>} : vector<416x75xbf16>, vector<75x6xbf16>, vector<416x6xf32> -> vector<416x6xf32>
    %11 = arith.maximumf %8, %10 : vector<416x6xf32>
    %c0_12 = arith.constant 0 : index
    %c0_13 = arith.constant 0 : index
    %12 = vector.load %arg6[%c0_12, %c0_13] : memref<1x6xf32, #tpu.memory_space<vmem>>, vector<1x6xf32>
    %13 = vector.broadcast %12 : vector<1x6xf32> to vector<416x6xf32>
    %14 = arith.addf %11, %13 : vector<416x6xf32>
    %cst_14 = arith.constant 0.000000e+00 : f32
    %15 = vector.broadcast %cst_14 : f32 to vector<416x6xf32>
    %16 = arith.maximumf %14, %15 : vector<416x6xf32>
    %17 = arith.truncf %16 : vector<416x6xf32> to vector<416x6xbf16>
    %c0_15 = arith.constant 0 : index
    %c0_16 = arith.constant 0 : index
    %18 = vector.load %arg7[%c0_15, %c0_16] : memref<416x6xbf16, #tpu.memory_space<vmem>>, vector<416x6xbf16>
    tpu.vector_store %arg7[%c0_15, %c0_16], %17 {strides = array<i32>} : memref<416x6xbf16, #tpu.memory_space<vmem>>, vector<416x6xbf16>,
    return
  }
  func.func @transform_0(%arg0: i32) -> (i32, i32) {
    %c0_i32 = arith.constant 0 : i32
    %c0_i32_0 = arith.constant 0 : i32
    return %arg0, %c0_i32 : i32, i32
  }
  func.func @transform_1(%arg0: i32) -> (i32, i32) {
    %c0_i32 = arith.constant 0 : i32
    %c0_i32_0 = arith.constant 0 : i32
    return %arg0, %c0_i32 : i32, i32
  }
  func.func @transform_2(%arg0: i32) -> (i32, i32) {
    %c0_i32 = arith.constant 0 : i32
    %c0_i32_0 = arith.constant 0 : i32
    return %arg0, %c0_i32 : i32, i32
  }
  func.func @transform_3(%arg0: i32) -> (i32, i32) {
    %c0_i32 = arith.constant 0 : i32
    %c0_i32_0 = arith.constant 0 : i32
    return %arg0, %c0_i32 : i32, i32
  }
  func.func @transform_4(%arg0: i32) -> (i32, i32) {
    %c0_i32 = arith.constant 0 : i32
    %c0_i32_0 = arith.constant 0 : i32
    %c0_i32_1 = arith.constant 0 : i32
    return %c0_i32, %c0_i32_0 : i32, i32
  }
  func.func @transform_5(%arg0: i32) -> (i32, i32) {
    %c0_i32 = arith.constant 0 : i32
    %c0_i32_0 = arith.constant 0 : i32
    %c0_i32_1 = arith.constant 0 : i32
    return %c0_i32, %c0_i32_0 : i32, i32
  }
  func.func @transform_6(%arg0: i32) -> (i32, i32) {
    %c0_i32 = arith.constant 0 : i32
    %c0_i32_0 = arith.constant 0 : i32
    return %arg0, %c0_i32 : i32, i32
  }
}

module attributes {stable_mosaic.version = 11 : i64} {
  func.func @_conv_pool_kernel(%arg0: i32, %arg1: memref<64x150xbf16, #tpu.memory_space<vmem>>, %arg2: memref<64x150xbf16, #tpu.memory_space<vmem>>, %arg3: memref<64x150xbf16, #tpu.memory_space<vmem>>, %arg4: memref<64x150xbf16, #tpu.memory_space<vmem>>, %arg5: memref<150x16xbf16, #tpu.memory_space<vmem>>, %arg6: memref<1x16xf32, #tpu.memory_space<vmem>>, %arg7: memref<64x16xbf16, #tpu.memory_space<vmem>>) attributes {dimension_semantics = [#tpu.dimension_semantics<parallel>], iteration_bounds = array<i64: 1>, scalar_prefetch = 0 : i64, scratch_operands = 0 : i64, tpu.core_type = #tpu.core_type<tc>, window_params = [{transform_indices = @transform_0, window_bounds = array<i64: 64, 150>}, {transform_indices = @transform_1, window_bounds = array<i64: 64, 150>}, {transform_indices = @transform_2, window_bounds = array<i64: 64, 150>}, {transform_indices = @transform_3, window_bounds = array<i64: 64, 150>}, {pipeline_mode = #tpu.pipeline_mode<synchronous>, transform_indices = @transform_4, window_bounds = array<i64: 150, 16>}, {pipeline_mode = #tpu.pipeline_mode<synchronous>, transform_indices = @transform_5, window_bounds = array<i64: 1, 16>}, {transform_indices = @transform_6, window_bounds = array<i64: 64, 16>}]} {
    %c0 = arith.constant 0 : index
    %c0_0 = arith.constant 0 : index
    %0 = vector.load %arg5[%c0, %c0_0] : memref<150x16xbf16, #tpu.memory_space<vmem>>, vector<150x16xbf16>
    %c0_1 = arith.constant 0 : index
    %c0_2 = arith.constant 0 : index
    %1 = vector.load %arg1[%c0_1, %c0_2] : memref<64x150xbf16, #tpu.memory_space<vmem>>, vector<64x150xbf16>
    %cst = arith.constant dense<0.000000e+00> : vector<64x16xf32>
    %2 = tpu.matmul %1, %0, %cst {dimension_numbers = #tpu.dot_dimension_numbers<[1], [0], [0], [1], [0, 0, 1, 1], [], []>} : vector<64x150xbf16>, vector<150x16xbf16>, vector<64x16xf32> -> vector<64x16xf32>
    %c0_3 = arith.constant 0 : index
    %c0_4 = arith.constant 0 : index
    %3 = vector.load %arg2[%c0_3, %c0_4] : memref<64x150xbf16, #tpu.memory_space<vmem>>, vector<64x150xbf16>
    %cst_5 = arith.constant dense<0.000000e+00> : vector<64x16xf32>
    %4 = tpu.matmul %3, %0, %cst_5 {dimension_numbers = #tpu.dot_dimension_numbers<[1], [0], [0], [1], [0, 0, 1, 1], [], []>} : vector<64x150xbf16>, vector<150x16xbf16>, vector<64x16xf32> -> vector<64x16xf32>
    %5 = arith.maximumf %2, %4 : vector<64x16xf32>
    %c0_6 = arith.constant 0 : index
    %c0_7 = arith.constant 0 : index
    %6 = vector.load %arg3[%c0_6, %c0_7] : memref<64x150xbf16, #tpu.memory_space<vmem>>, vector<64x150xbf16>
    %cst_8 = arith.constant dense<0.000000e+00> : vector<64x16xf32>
    %7 = tpu.matmul %6, %0, %cst_8 {dimension_numbers = #tpu.dot_dimension_numbers<[1], [0], [0], [1], [0, 0, 1, 1], [], []>} : vector<64x150xbf16>, vector<150x16xbf16>, vector<64x16xf32> -> vector<64x16xf32>
    %8 = arith.maximumf %5, %7 : vector<64x16xf32>
    %c0_9 = arith.constant 0 : index
    %c0_10 = arith.constant 0 : index
    %9 = vector.load %arg4[%c0_9, %c0_10] : memref<64x150xbf16, #tpu.memory_space<vmem>>, vector<64x150xbf16>
    %cst_11 = arith.constant dense<0.000000e+00> : vector<64x16xf32>
    %10 = tpu.matmul %9, %0, %cst_11 {dimension_numbers = #tpu.dot_dimension_numbers<[1], [0], [0], [1], [0, 0, 1, 1], [], []>} : vector<64x150xbf16>, vector<150x16xbf16>, vector<64x16xf32> -> vector<64x16xf32>
    %11 = arith.maximumf %8, %10 : vector<64x16xf32>
    %c0_12 = arith.constant 0 : index
    %c0_13 = arith.constant 0 : index
    %12 = vector.load %arg6[%c0_12, %c0_13] : memref<1x16xf32, #tpu.memory_space<vmem>>, vector<1x16xf32>
    %13 = vector.broadcast %12 : vector<1x16xf32> to vector<64x16xf32>
    %14 = arith.addf %11, %13 : vector<64x16xf32>
    %cst_14 = arith.constant 0.000000e+00 : f32
    %15 = vector.broadcast %cst_14 : f32 to vector<64x16xf32>
    %16 = arith.maximumf %14, %15 : vector<64x16xf32>
    %17 = arith.truncf %16 : vector<64x16xf32> to vector<64x16xbf16>
    %c0_15 = arith.constant 0 : index
    %c0_16 = arith.constant 0 : index
    %18 = vector.load %arg7[%c0_15, %c0_16] : memref<64x16xbf16, #tpu.memory_space<vmem>>, vector<64x16xbf16>
    tpu.vector_store %arg7[%c0_15, %c0_16], %17 {strides = array<i32>} : memref<64x16xbf16, #tpu.memory_space<vmem>>, vector<64x16xbf16>,
    return
  }
  func.func @transform_0(%arg0: i32) -> (i32, i32) {
    %c0_i32 = arith.constant 0 : i32
    %c0_i32_0 = arith.constant 0 : i32
    return %arg0, %c0_i32 : i32, i32
  }
  func.func @transform_1(%arg0: i32) -> (i32, i32) {
    %c0_i32 = arith.constant 0 : i32
    %c0_i32_0 = arith.constant 0 : i32
    return %arg0, %c0_i32 : i32, i32
  }
  func.func @transform_2(%arg0: i32) -> (i32, i32) {
    %c0_i32 = arith.constant 0 : i32
    %c0_i32_0 = arith.constant 0 : i32
    return %arg0, %c0_i32 : i32, i32
  }
  func.func @transform_3(%arg0: i32) -> (i32, i32) {
    %c0_i32 = arith.constant 0 : i32
    %c0_i32_0 = arith.constant 0 : i32
    return %arg0, %c0_i32 : i32, i32
  }
  func.func @transform_4(%arg0: i32) -> (i32, i32) {
    %c0_i32 = arith.constant 0 : i32
    %c0_i32_0 = arith.constant 0 : i32
    %c0_i32_1 = arith.constant 0 : i32
    return %c0_i32, %c0_i32_0 : i32, i32
  }
  func.func @transform_5(%arg0: i32) -> (i32, i32) {
    %c0_i32 = arith.constant 0 : i32
    %c0_i32_0 = arith.constant 0 : i32
    %c0_i32_1 = arith.constant 0 : i32
    return %c0_i32, %c0_i32_0 : i32, i32
  }
  func.func @transform_6(%arg0: i32) -> (i32, i32) {
    %c0_i32 = arith.constant 0 : i32
    %c0_i32_0 = arith.constant 0 : i32
    return %arg0, %c0_i32 : i32, i32
  }
}

module attributes {stable_mosaic.version = 11 : i64} {
  func.func @_fc_head_kernel(%arg0: i32, %arg1: memref<32x400xbf16, #tpu.memory_space<vmem>>, %arg2: memref<400x120xbf16, #tpu.memory_space<vmem>>, %arg3: memref<1x120xf32, #tpu.memory_space<vmem>>, %arg4: memref<120x84xbf16, #tpu.memory_space<vmem>>, %arg5: memref<1x84xf32, #tpu.memory_space<vmem>>, %arg6: memref<84x10xbf16, #tpu.memory_space<vmem>>, %arg7: memref<1x10xf32, #tpu.memory_space<vmem>>, %arg8: memref<32x10xf32, #tpu.memory_space<vmem>>) attributes {dimension_semantics = [#tpu.dimension_semantics<parallel>], iteration_bounds = array<i64: 1>, scalar_prefetch = 0 : i64, scratch_operands = 0 : i64, tpu.core_type = #tpu.core_type<tc>, window_params = [{transform_indices = @transform_0, window_bounds = array<i64: 32, 400>}, {pipeline_mode = #tpu.pipeline_mode<synchronous>, transform_indices = @transform_1, window_bounds = array<i64: 400, 120>}, {pipeline_mode = #tpu.pipeline_mode<synchronous>, transform_indices = @transform_2, window_bounds = array<i64: 1, 120>}, {pipeline_mode = #tpu.pipeline_mode<synchronous>, transform_indices = @transform_3, window_bounds = array<i64: 120, 84>}, {pipeline_mode = #tpu.pipeline_mode<synchronous>, transform_indices = @transform_4, window_bounds = array<i64: 1, 84>}, {pipeline_mode = #tpu.pipeline_mode<synchronous>, transform_indices = @transform_5, window_bounds = array<i64: 84, 10>}, {pipeline_mode = #tpu.pipeline_mode<synchronous>, transform_indices = @transform_6, window_bounds = array<i64: 1, 10>}, {transform_indices = @transform_7, window_bounds = array<i64: 32, 10>}]} {
    %c0 = arith.constant 0 : index
    %c0_0 = arith.constant 0 : index
    %0 = vector.load %arg1[%c0, %c0_0] : memref<32x400xbf16, #tpu.memory_space<vmem>>, vector<32x400xbf16>
    %c0_1 = arith.constant 0 : index
    %c0_2 = arith.constant 0 : index
    %1 = vector.load %arg2[%c0_1, %c0_2] : memref<400x120xbf16, #tpu.memory_space<vmem>>, vector<400x120xbf16>
    %cst = arith.constant dense<0.000000e+00> : vector<32x120xf32>
    %2 = tpu.matmul %0, %1, %cst {dimension_numbers = #tpu.dot_dimension_numbers<[1], [0], [0], [1], [0, 0, 1, 1], [], []>} : vector<32x400xbf16>, vector<400x120xbf16>, vector<32x120xf32> -> vector<32x120xf32>
    %c0_3 = arith.constant 0 : index
    %c0_4 = arith.constant 0 : index
    %3 = vector.load %arg3[%c0_3, %c0_4] : memref<1x120xf32, #tpu.memory_space<vmem>>, vector<1x120xf32>
    %4 = vector.broadcast %3 : vector<1x120xf32> to vector<32x120xf32>
    %5 = arith.addf %2, %4 : vector<32x120xf32>
    %cst_5 = arith.constant 0.000000e+00 : f32
    %6 = vector.broadcast %cst_5 : f32 to vector<32x120xf32>
    %7 = arith.maximumf %5, %6 : vector<32x120xf32>
    %8 = arith.truncf %7 : vector<32x120xf32> to vector<32x120xbf16>
    %c0_6 = arith.constant 0 : index
    %c0_7 = arith.constant 0 : index
    %9 = vector.load %arg4[%c0_6, %c0_7] : memref<120x84xbf16, #tpu.memory_space<vmem>>, vector<120x84xbf16>
    %cst_8 = arith.constant dense<0.000000e+00> : vector<32x84xf32>
    %10 = tpu.matmul %8, %9, %cst_8 {dimension_numbers = #tpu.dot_dimension_numbers<[1], [0], [0], [1], [0, 0, 1, 1], [], []>} : vector<32x120xbf16>, vector<120x84xbf16>, vector<32x84xf32> -> vector<32x84xf32>
    %c0_9 = arith.constant 0 : index
    %c0_10 = arith.constant 0 : index
    %11 = vector.load %arg5[%c0_9, %c0_10] : memref<1x84xf32, #tpu.memory_space<vmem>>, vector<1x84xf32>
    %12 = vector.broadcast %11 : vector<1x84xf32> to vector<32x84xf32>
    %13 = arith.addf %10, %12 : vector<32x84xf32>
    %cst_11 = arith.constant 0.000000e+00 : f32
    %14 = vector.broadcast %cst_11 : f32 to vector<32x84xf32>
    %15 = arith.maximumf %13, %14 : vector<32x84xf32>
    %16 = arith.truncf %15 : vector<32x84xf32> to vector<32x84xbf16>
    %c0_12 = arith.constant 0 : index
    %c0_13 = arith.constant 0 : index
    %17 = vector.load %arg6[%c0_12, %c0_13] : memref<84x10xbf16, #tpu.memory_space<vmem>>, vector<84x10xbf16>
    %cst_14 = arith.constant dense<0.000000e+00> : vector<32x10xf32>
    %18 = tpu.matmul %16, %17, %cst_14 {dimension_numbers = #tpu.dot_dimension_numbers<[1], [0], [0], [1], [0, 0, 1, 1], [], []>} : vector<32x84xbf16>, vector<84x10xbf16>, vector<32x10xf32> -> vector<32x10xf32>
    %c0_15 = arith.constant 0 : index
    %c0_16 = arith.constant 0 : index
    %19 = vector.load %arg7[%c0_15, %c0_16] : memref<1x10xf32, #tpu.memory_space<vmem>>, vector<1x10xf32>
    %20 = vector.broadcast %19 : vector<1x10xf32> to vector<32x10xf32>
    %21 = arith.addf %18, %20 : vector<32x10xf32>
    %cst_17 = arith.constant dense<0xFF800000> : vector<32xf32>
    %22 = vector.multi_reduction <maximumf>, %21, %cst_17 [1] : vector<32x10xf32> to vector<32xf32>
    %23 = vector.shape_cast %22 : vector<32xf32> to vector<32x1xf32>
    %24 = vector.broadcast %23 : vector<32x1xf32> to vector<32x10xf32>
    %25 = arith.subf %21, %24 : vector<32x10xf32>
    %26 = math.exp %25 : vector<32x10xf32>
    %cst_18 = arith.constant dense<0.000000e+00> : vector<32xf32>
    %27 = vector.multi_reduction <add>, %26, %cst_18 [1] : vector<32x10xf32> to vector<32xf32>
    %28 = vector.shape_cast %27 : vector<32xf32> to vector<32x1xf32>
    %29 = math.log %28 : vector<32x1xf32>
    %30 = vector.broadcast %29 : vector<32x1xf32> to vector<32x10xf32>
    %31 = arith.subf %25, %30 : vector<32x10xf32>
    %c0_19 = arith.constant 0 : index
    %c0_20 = arith.constant 0 : index
    %32 = vector.load %arg8[%c0_19, %c0_20] : memref<32x10xf32, #tpu.memory_space<vmem>>, vector<32x10xf32>
    tpu.vector_store %arg8[%c0_19, %c0_20], %31 {strides = array<i32>} : memref<32x10xf32, #tpu.memory_space<vmem>>, vector<32x10xf32>,
    return
  }
  func.func @transform_0(%arg0: i32) -> (i32, i32) {
    %c0_i32 = arith.constant 0 : i32
    %c0_i32_0 = arith.constant 0 : i32
    return %arg0, %c0_i32 : i32, i32
  }
  func.func @transform_1(%arg0: i32) -> (i32, i32) {
    %c0_i32 = arith.constant 0 : i32
    %c0_i32_0 = arith.constant 0 : i32
    %c0_i32_1 = arith.constant 0 : i32
    return %c0_i32, %c0_i32_0 : i32, i32
  }
  func.func @transform_2(%arg0: i32) -> (i32, i32) {
    %c0_i32 = arith.constant 0 : i32
    %c0_i32_0 = arith.constant 0 : i32
    %c0_i32_1 = arith.constant 0 : i32
    return %c0_i32, %c0_i32_0 : i32, i32
  }
  func.func @transform_3(%arg0: i32) -> (i32, i32) {
    %c0_i32 = arith.constant 0 : i32
    %c0_i32_0 = arith.constant 0 : i32
    %c0_i32_1 = arith.constant 0 : i32
    return %c0_i32, %c0_i32_0 : i32, i32
  }
  func.func @transform_4(%arg0: i32) -> (i32, i32) {
    %c0_i32 = arith.constant 0 : i32
    %c0_i32_0 = arith.constant 0 : i32
    %c0_i32_1 = arith.constant 0 : i32
    return %c0_i32, %c0_i32_0 : i32, i32
  }
  func.func @transform_5(%arg0: i32) -> (i32, i32) {
    %c0_i32 = arith.constant 0 : i32
    %c0_i32_0 = arith.constant 0 : i32
    %c0_i32_1 = arith.constant 0 : i32
    return %c0_i32, %c0_i32_0 : i32, i32
  }
  func.func @transform_6(%arg0: i32) -> (i32, i32) {
    %c0_i32 = arith.constant 0 : i32
    %c0_i32_0 = arith.constant 0 : i32
    %c0_i32_1 = arith.constant 0 : i32
    return %c0_i32, %c0_i32_0 : i32, i32
  }
  func.func @transform_7(%arg0: i32) -> (i32, i32) {
    %c0_i32 = arith.constant 0 : i32
    %c0_i32_0 = arith.constant 0 : i32
    return %arg0, %c0_i32 : i32, i32
  }
}

</mosaic_0001>

<llo_original>
// kernel: cnn_cifar_forward.3
$region0: #{cnn_cifar_forward.3}
  #allocation0 [shape = 'u32[]', space=smem, size = 0x4, offset = 0x4, fixed_abs, tag = 'smem constant byte address 0x4 - core index']
  #allocation1 [shape = 'u32[144,128]{1,0:T(1,128)}', space=vmem, size = 0x12000, scoped, tag = 'internal scratch']
  %s0 = inlined_call_operand.vmem [shape: bf16[392,75], index: 0, kind: input, shape index: {}]
  %s1 = inlined_call_operand.vmem [shape: bf16[392,75], index: 1, kind: input, shape index: {}]
  %s2 = inlined_call_operand.vmem [shape: bf16[392,75], index: 2, kind: input, shape index: {}]
  %s3 = inlined_call_operand.vmem [shape: bf16[392,75], index: 3, kind: input, shape index: {}]
  %s4 = inlined_call_operand.vmem [shape: bf16[75,6], index: 4, kind: input, shape index: {}]
  %s5 = inlined_call_operand.vmem [shape: f32[1,6], index: 5, kind: input, shape index: {}]
  %s6 = inlined_call_operand.vmem [shape: bf16[392,6], index: 6, kind: output, shape index: {}]
  %s7 = sld [smem:[#allocation0]]
  $region71: #{cnn_cifar_forward.3} parent=0
    _
  %s9 = ssub.s32 1, %s7
  %s10 = scalar_select 0, %s9, %s7
  $region1: #{cnn_cifar_forward.3} parent=0
    #allocation2 [shape = 'u8[106496]{0}', space=vmem, size = 0x1a000, scoped, tag = 'output window, operand 0, single buffered']
    // Predicated region
    $region2: #{cnn_cifar_forward.3} parent=1 // pred_check
      _
    $region3: #{cnn_cifar_forward.3} parent=1 // pred_check_branch
      %12 = sbr.rel (0) target = $region5
    $region4: #{cnn_cifar_forward.3} parent=1 // pred_region
      _
    $region5: #{cnn_cifar_forward.3} parent=1 // pred_fallthru
      _
    // Predicated region
    $region6: #{cnn_cifar_forward.3} parent=1 // pred_check
      _
    $region7: #{cnn_cifar_forward.3} parent=1 // pred_check_branch
      %14 = sbr.rel (0) target = $region9
    $region8: #{cnn_cifar_forward.3} parent=1 // pred_region
      _
    $region9: #{cnn_cifar_forward.3} parent=1 // pred_fallthru
      _
    // Predicated region
    $region10: #{cnn_cifar_forward.3} parent=1 // pred_check
      _
    $region11: #{cnn_cifar_forward.3} parent=1 // pred_check_branch
      %16 = sbr.rel (0) target = $region13
    $region12: #{cnn_cifar_forward.3} parent=1 // pred_region
      _
    $region13: #{cnn_cifar_forward.3} parent=1 // pred_fallthru
      _
    // Predicated region
    $region14: #{cnn_cifar_forward.3} parent=1 // pred_check
      _
    $region15: #{cnn_cifar_forward.3} parent=1 // pred_check_branch
      %18 = sbr.rel (0) target = $region17
    $region16: #{cnn_cifar_forward.3} parent=1 // pred_region
      _
    $region17: #{cnn_cifar_forward.3} parent=1 // pred_fallthru
      _
    // Predicated region
    $region18: #{cnn_cifar_forward.3} parent=1 // pred_check
      _
    $region19: #{cnn_cifar_forward.3} parent=1 // pred_check_branch
      %20 = sbr.rel (0) target = $region21
    $region20: #{cnn_cifar_forward.3} parent=1 // pred_region
      _
    $region21: #{cnn_cifar_forward.3} parent=1 // pred_fallthru
      _
    // Predicated region
    $region22: #{cnn_cifar_forward.3} parent=1 // pred_check
      _
    $region23: #{cnn_cifar_forward.3} parent=1 // pred_check_branch
      %22 = sbr.rel (0) target = $region25
    $region24: #{cnn_cifar_forward.3} parent=1 // pred_region
      _
    $region25: #{cnn_cifar_forward.3} parent=1 // pred_fallthru
      _
    %v24 = vld [vmem:[%s4] sm:$0xf]
    %v25 = vld [vmem:[%s4 + $0x4] sm:$0xf]
    %v26 = vld [vmem:[%s4 + $0x8] sm:$0xf]
    %v27 = vld [vmem:[%s4 + $0xc] sm:$0xf]
    %v28 = vld [vmem:[%s4 + $0x10] sm:$0xf]
    %v29 = vld [vmem:[%s4 + $0x14] sm:$0xf]
    %v30 = vld [vmem:[%s4 + $0x18] sm:$0xf]
    %v31 = vld [vmem:[%s4 + $0x1c] sm:$0xf]
    %v32 = vld [vmem:[%s4 + $0x20] sm:$0xf]
    %v33 = vld [vmem:[%s4 + $0x24] sm:$0x3]
    %v34 = vld [vmem:[%s0] sm:$0xf]
    %v35 = vld [vmem:[%s0 + $0x4] sm:$0xf]
    %v36 = vld [vmem:[%s0 + $0x8] sm:$0xf]
    %v37 = vld [vmem:[%s0 + $0xc] sm:$0xf]
    %v38 = vld [vmem:[%s0 + $0x10] sm:$0xf]
    %v39 = vld [vmem:[%s0 + $0x14] sm:$0xf]
    %v40 = vld [vmem:[%s0 + $0x18] sm:$0xf]
    %v41 = vld [vmem:[%s0 + $0x1c] sm:$0xf]
    %v42 = vld [vmem:[%s0 + $0x20] sm:$0xf]
    %v43 = vld [vmem:[%s0 + $0x24] sm:$0xf]
    %v44 = vld [vmem:[%s0 + $0x28] sm:$0xf]
    %v45 = vld [vmem:[%s0 + $0x2c] sm:$0xf]
    %v46 = vld [vmem:[%s0 + $0x30] sm:$0xf]
    %v47 = vld [vmem:[%s0 + $0x34] sm:$0xf]
    %v48 = vld [vmem:[%s0 + $0x38] sm:$0xf]
    %v49 = vld [vmem:[%s0 + $0x3c] sm:$0xf]
    %v50 = vld [vmem:[%s0 + $0x40] sm:$0xf]
    %v51 = vld [vmem:[%s0 + $0x44] sm:$0xf]
    %v52 = vld [vmem:[%s0 + $0x48] sm:$0xf]
    %v53 = vld [vmem:[%s0 + $0x4c] sm:$0xf]
    %v54 = vld [vmem:[%s0 + $0x50] sm:$0xf]
    %v55 = vld [vmem:[%s0 + $0x54] sm:$0xf]
    %v56 = vld [vmem:[%s0 + $0x58] sm:$0xf]
    %v57 = vld [vmem:[%s0 + $0x5c] sm:$0xf]
    %v58 = vld [vmem:[%s0 + $0x60] sm:$0xf]
    %v59 = vld [vmem:[%s0 + $0x64] sm:$0xf]
    %v60 = vld [vmem:[%s0 + $0x68] sm:$0xf]
    %v61 = vld [vmem:[%s0 + $0x6c] sm:$0xf]
    %v62 = vld [vmem:[%s0 + $0x70] sm:$0xf]
    %v63 = vld [vmem:[%s0 + $0x74] sm:$0xf]
    %v64 = vld [vmem:[%s0 + $0x78] sm:$0xf]
    %v65 = vld [vmem:[%s0 + $0x7c] sm:$0xf]
    %v66 = vld [vmem:[%s0 + $0x80] sm:$0xf]
    %v67 = vld [vmem:[%s0 + $0x84] sm:$0xf]
    %v68 = vld [vmem:[%s0 + $0x88] sm:$0xf]
    %v69 = vld [vmem:[%s0 + $0x8c] sm:$0xf]
    %v70 = vld [vmem:[%s0 + $0x90] sm:$0xf]
    %v71 = vld [vmem:[%s0 + $0x94] sm:$0xf]
    %v72 = vld [vmem:[%s0 + $0x98] sm:$0xf]
    %v73 = vld [vmem:[%s0 + $0x9c] sm:$0xf]
    %v74 = vld [vmem:[%s0 + $0xa0] sm:$0xf]
    %v75 = vld [vmem:[%s0 + $0xa4] sm:$0xf]
    %v76 = vld [vmem:[%s0 + $0xa8] sm:$0xf]
    %v77 = vld [vmem:[%s0 + $0xac] sm:$0xf]
    %v78 = vld [vmem:[%s0 + $0xb0] sm:$0xf]
    %v79 = vld [vmem:[%s0 + $0xb4] sm:$0xf]
    %v80 = vld [vmem:[%s0 + $0xb8] sm:$0xf]
    %v81 = vld [vmem:[%s0 + $0xbc] sm:$0xf]
    %v82 = vld [vmem:[%s0 + $0xc0] sm:$0xf]
    %v83 = vld [vmem:[%s0 + $0xc4] sm:$0xf]
    %v84 = vld [vmem:[%s0 + $0xc8] sm:$0xf]
    %v85 = vld [vmem:[%s0 + $0xcc] sm:$0xf]
    %v138 = vunpack.c.l.b16 %v34
    %v139 = vunpack.c.l.b16 %v35
    %v140 = vunpack.c.l.b16 %v36
    %v141 = vunpack.c.l.b16 %v37
    %v142 = vunpack.c.l.b16 %v38
    %v143 = vunpack.c.l.b16 %v39
    %v144 = vunpack.c.l.b16 %v40
    %v145 = vunpack.c.l.b16 %v41
    %v146 = vunpack.c.l.b16 %v42
    %v147 = vunpack.c.l.b16 %v43
    %v148 = vunpack.c.l.b16 %v44
    %v149 = vunpack.c.l.b16 %v45
    %v150 = vunpack.c.l.b16 %v46
    %v151 = vunpack.c.l.b16 %v47
    %v152 = vunpack.c.l.b16 %v48
    %v153 = vunpack.c.l.b16 %v49
    %v154 = vunpack.c.l.b16 %v50
    %v155 = vunpack.c.l.b16 %v51
    %v156 = vunpack.c.l.b16 %v52
    %v157 = vunpack.c.l.b16 %v53
    %v158 = vunpack.c.l.b16 %v54
    %v159 = vunpack.c.l.b16 %v55
    %v160 = vunpack.c.l.b16 %v56
    %v161 = vunpack.c.l.b16 %v57
    %v162 = vunpack.c.l.b16 %v58
    %v163 = vunpack.c.l.b16 %v59
    %v164 = vunpack.c.l.b16 %v60
    %v165 = vunpack.c.l.b16 %v61
    %v166 = vunpack.c.l.b16 %v62
    %v167 = vunpack.c.l.b16 %v63
    %v168 = vunpack.c.l.b16 %v64
    %v169 = vunpack.c.l.b16 %v65
    %v170 = vunpack.c.l.b16 %v66
    %v171 = vunpack.c.l.b16 %v67
    %v172 = vunpack.c.l.b16 %v68
    %v173 = vunpack.c.l.b16 %v69
    %v174 = vunpack.c.l.b16 %v70
    %v175 = vunpack.c.l.b16 %v71
    %v176 = vunpack.c.l.b16 %v72
    %v177 = vunpack.c.l.b16 %v73
    %v178 = vunpack.c.l.b16 %v74
    %v179 = vunpack.c.l.b16 %v75
    %v180 = vunpack.c.l.b16 %v76
    %v181 = vunpack.c.l.b16 %v77
    %v182 = vunpack.c.l.b16 %v78
    %v183 = vunpack.c.l.b16 %v79
    %v184 = vunpack.c.l.b16 %v80
    %v185 = vunpack.c.l.b16 %v81
    %v186 = vunpack.c.l.b16 %v82
    %v187 = vunpack.c.l.b16 %v83
    %v188 = vunpack.c.l.b16 %v84
    %v189 = vunpack.c.l.b16 %v85
    %v190 = vpack.c.b16 %v139, %v138
    %v191 = vpack.c.b16 %v141, %v140
    %v192 = vpack.c.b16 %v143, %v142
    %v193 = vpack.c.b16 %v145, %v144
    %v194 = vpack.c.b16 %v147, %v146
    %v195 = vpack.c.b16 %v149, %v148
    %v196 = vpack.c.b16 %v151, %v150
    %v197 = vpack.c.b16 %v153, %v152
    %v198 = vpack.c.b16 %v155, %v154
    %v199 = vpack.c.b16 %v157, %v156
    %v200 = vpack.c.b16 %v159, %v158
    %v201 = vpack.c.b16 %v161, %v160
    %v202 = vpack.c.b16 %v163, %v162
    %v203 = vpack.c.b16 %v165, %v164
    %v204 = vpack.c.b16 %v167, %v166
    %v205 = vpack.c.b16 %v169, %v168
    %v206 = vpack.c.b16 %v171, %v170
    %v207 = vpack.c.b16 %v173, %v172
    %v208 = vpack.c.b16 %v175, %v174
    %v209 = vpack.c.b16 %v177, %v176
    %v210 = vpack.c.b16 %v179, %v178
    %v211 = vpack.c.b16 %v181, %v180
    %v212 = vpack.c.b16 %v183, %v182
    %v213 = vpack.c.b16 %v185, %v184
    %v214 = vpack.c.b16 %v187, %v186
    %v215 = vpack.c.b16 %v189, %v188
    %v226 = vunpack.c.l.b16 %v24
    %v227 = vunpack.c.l.b16 %v25
    %v228 = vunpack.c.l.b16 %v26
    %v229 = vunpack.c.l.b16 %v27
    %v230 = vunpack.c.l.b16 %v28
    %v231 = vunpack.c.l.b16 %v29
    %v232 = vunpack.c.l.b16 %v30
    %v233 = vunpack.c.l.b16 %v31
    %v234 = vunpack.c.l.b16 %v32
    %v235 = vunpack.c.l.b16 %v33
    %v236 = vpack.c.b16 %v227, %v226
    %v237 = vpack.c.b16 %v229, %v228
    %v238 = vpack.c.b16 %v231, %v230
    %v239 = vpack.c.b16 %v233, %v232
    %v240 = vpack.c.b16 %v235, %v234
    %vm245 = vcmask 613376
    %v247 = vsel %vm245, %v190, 0
    %v250 = vsel %vm245, %v191, 0
    %v253 = vsel %vm245, %v192, 0
    %v256 = vsel %vm245, %v193, 0
    %v259 = vsel %vm245, %v194, 0
    %v262 = vsel %vm245, %v195, 0
    %v265 = vsel %vm245, %v196, 0
    %v268 = vsel %vm245, %v197, 0
    %v271 = vsel %vm245, %v198, 0
    %v274 = vsel %vm245, %v199, 0
    %v277 = vsel %vm245, %v200, 0
    %v280 = vsel %vm245, %v201, 0
    %v283 = vsel %vm245, %v202, 0
    %v286 = vsel %vm245, %v203, 0
    %v289 = vsel %vm245, %v204, 0
    %v292 = vsel %vm245, %v205, 0
    %v295 = vsel %vm245, %v206, 0
    %v298 = vsel %vm245, %v207, 0
    %v301 = vsel %vm245, %v208, 0
    %v304 = vsel %vm245, %v209, 0
    %v307 = vsel %vm245, %v210, 0
    %v310 = vsel %vm245, %v211, 0
    %v313 = vsel %vm245, %v212, 0
    %v316 = vsel %vm245, %v213, 0
    %v319 = vsel %vm245, %v214, 0
    %v322 = vsel %vm245, %v215, 0
    %vm324 = vcmask 1044480
    %vm325 = vcmask 1045504
    %v326 = vsel %vm324, 4294967295, 65535
    %v327 = vsel %vm325, %v326, 0
    %v329 = vand.u32 %v240, %v327
    %331 = vmatprep.subr.bf16.mxu0 0
    %332 = vmatpush1.bf16.msra.mxu0 %v236
    %333 = vmatprep.subr.bf16.mxu0 0
    %334 = vmatpush1.bf16.msra.mxu0 %v237
    %335 = vmatprep.subr.bf16.mxu0 0
    %336 = vmatpush1.bf16.msra.mxu0 %v238
    %337 = vmatprep.subr.bf16.mxu0 0
    %338 = vmatpush1.bf16.msra.mxu0 %v239
    %339 = vmatprep.subr.bf16.mxu0 0
    %340 = vmatpush1.bf16.msra.mxu0 %v329
    %341 = vmatprep.subr.bf16.mxu0 0
    %342 = vmatpush1.bf16.msra.mxu0 0
    %343 = vmatprep.subr.bf16.mxu0 0
    %344 = vmatpush1.bf16.msra.mxu0 0
    %345 = vmatprep.subr.bf16.mxu0 0
    %346 = vmatpush1.bf16.msra.mxu0 0
    %347 = vmatprep.subr.bf16.mxu0 0
    %348 = vmatpush1.bf16.msra.mxu0 0
    %349 = vmatprep.subr.bf16.mxu0 0
    %350 = vmatpush1.bf16.msra.mxu0 0
    %351 = vmatprep.subr.bf16.mxu0 0
    %352 = vmatpush1.bf16.msra.mxu0 0
    %353 = vmatprep.subr.bf16.mxu0 0
    %354 = vmatpush1.bf16.msra.mxu0 0
    %355 = vmatprep.subr.bf16.mxu0 0
    %356 = vmatpush1.bf16.msra.mxu0 0
    %357 = vmatprep.subr.bf16.mxu0 0
    %358 = vmatpush1.bf16.msra.mxu0 0
    %359 = vmatprep.subr.bf16.mxu0 0
    %360 = vmatpush1.bf16.msra.mxu0 0
    %361 = vmatprep.subr.bf16.mxu0 0
    %362 = vmatpush1.bf16.msra.mxu0 0
    %363 = vmatprep.mubr.bf16.mxu0 0
    %364 = vmatmul.mubr.bf16.gmra.mrb[0].mxu0 %v247
    %v365 = vpop.f32.mrb[0].mxu0
    %v366 = vadd.f32 0.0, %v365
    %v367 = vpop.f32.mrb[0].mxu0
    %v368 = vpop.f32.mrb[0].mxu0
    %v369 = vadd.f32 0.0, %v368
    %v370 = vpop.f32.mrb[0].mxu0
    %371 = vmatprep.mubr.bf16.mxu0 0
    %372 = vmatmul.mubr.bf16.gmra.mrb[0].mxu0 %v250
    %v373 = vpop.f32.mrb[0].mxu0
    %v374 = vadd.f32 0.0, %v373
    %v375 = vpop.f32.mrb[0].mxu0
    %v376 = vpop.f32.mrb[0].mxu0
    %v377 = vadd.f32 0.0, %v376
    %v378 = vpop.f32.mrb[0].mxu0
    %379 = vmatprep.mubr.bf16.mxu0 0
    %380 = vmatmul.mubr.bf16.gmra.mrb[0].mxu0 %v253
    %v381 = vpop.f32.mrb[0].mxu0
    %v382 = vadd.f32 0.0, %v381
    %v383 = vpop.f32.mrb[0].mxu0
    %v384 = vpop.f32.mrb[0].mxu0
    %v385 = vadd.f32 0.0, %v384
    %v386 = vpop.f32.mrb[0].mxu0
    %387 = vmatprep.mubr.bf16.mxu0 0
    %388 = vmatmul.mubr.bf16.gmra.mrb[0].mxu0 %v256
    %v389 = vpop.f32.mrb[0].mxu0
    %v390 = vadd.f32 0.0, %v389
    %v391 = vpop.f32.mrb[0].mxu0
    %v392 = vpop.f32.mrb[0].mxu0
    %v393 = vadd.f32 0.0, %v392
    %v394 = vpop.f32.mrb[0].mxu0
    %395 = vmatprep.mubr.bf16.mxu0 0
    %396 = vmatmul.mubr.bf16.gmra.mrb[0].mxu0 %v259
    %v397 = vpop.f32.mrb[0].mxu0
    %v398 = vadd.f32 0.0, %v397
    %v399 = vpop.f32.mrb[0].mxu0
    %v400 = vpop.f32.mrb[0].mxu0
    %v401 = vadd.f32 0.0, %v400
    %v402 = vpop.f32.mrb[0].mxu0
    %403 = vmatprep.mubr.bf16.mxu0 0
    %404 = vmatmul.mubr.bf16.gmra.mrb[0].mxu0 %v262
    %v405 = vpop.f32.mrb[0].mxu0
    %v406 = vadd.f32 0.0, %v405
    %v407 = vpop.f32.mrb[0].mxu0
    %v408 = vpop.f32.mrb[0].mxu0
    %v409 = vadd.f32 0.0, %v408
    %v410 = vpop.f32.mrb[0].mxu0
    %411 = vmatprep.mubr.bf16.mxu0 0
    %412 = vmatmul.mubr.bf16.gmra.mrb[0].mxu0 %v265
    %v413 = vpop.f32.mrb[0].mxu0
    %v414 = vadd.f32 0.0, %v413
    %v415 = vpop.f32.mrb[0].mxu0
    %v416 = vpop.f32.mrb[0].mxu0
    %v417 = vadd.f32 0.0, %v416
    %v418 = vpop.f32.mrb[0].mxu0
    %419 = vmatprep.mubr.bf16.mxu0 0
    %420 = vmatmul.mubr.bf16.gmra.mrb[0].mxu0 %v268
    %v421 = vpop.f32.mrb[0].mxu0
    %v422 = vadd.f32 0.0, %v421
    %v423 = vpop.f32.mrb[0].mxu0
    %v424 = vpop.f32.mrb[0].mxu0
    %v425 = vadd.f32 0.0, %v424
    %v426 = vpop.f32.mrb[0].mxu0
    %427 = vmatprep.mubr.bf16.mxu0 0
    %428 = vmatmul.mubr.bf16.gmra.mrb[0].mxu0 %v271
    %v429 = vpop.f32.mrb[0].mxu0
    %v430 = vadd.f32 0.0, %v429
    %v431 = vpop.f32.mrb[0].mxu0
    %v432 = vpop.f32.mrb[0].mxu0
    %v433 = vadd.f32 0.0, %v432
    %v434 = vpop.f32.mrb[0].mxu0
    %435 = vmatprep.mubr.bf16.mxu0 0
    %436 = vmatmul.mubr.bf16.gmra.mrb[0].mxu0 %v274
    %v437 = vpop.f32.mrb[0].mxu0
    %v438 = vadd.f32 0.0, %v437
    %v439 = vpop.f32.mrb[0].mxu0
    %v440 = vpop.f32.mrb[0].mxu0
    %v441 = vadd.f32 0.0, %v440
    %v442 = vpop.f32.mrb[0].mxu0
    %443 = vmatprep.mubr.bf16.mxu0 0
    %444 = vmatmul.mubr.bf16.gmra.mrb[0].mxu0 %v277
    %v445 = vpop.f32.mrb[0].mxu0
    %v446 = vadd.f32 0.0, %v445
    %v447 = vpop.f32.mrb[0].mxu0
    %v448 = vpop.f32.mrb[0].mxu0
    %v449 = vadd.f32 0.0, %v448
    %v450 = vpop.f32.mrb[0].mxu0
    %451 = vmatprep.mubr.bf16.mxu0 0
    %452 = vmatmul.mubr.bf16.gmra.mrb[0].mxu0 %v280
    %v453 = vpop.f32.mrb[0].mxu0
    %v454 = vadd.f32 0.0, %v453
    %v455 = vpop.f32.mrb[0].mxu0
    %v456 = vpop.f32.mrb[0].mxu0
    %v457 = vadd.f32 0.0, %v456
    %v458 = vpop.f32.mrb[0].mxu0
    %459 = vmatprep.mubr.bf16.mxu0 0
    %460 = vmatmul.mubr.bf16.gmra.mrb[0].mxu0 %v283
    %v461 = vpop.f32.mrb[0].mxu0
    %v462 = vadd.f32 0.0, %v461
    %v463 = vpop.f32.mrb[0].mxu0
    %v464 = vpop.f32.mrb[0].mxu0
    %v465 = vadd.f32 0.0, %v464
    %v466 = vpop.f32.mrb[0].mxu0
    %467 = vmatprep.mubr.bf16.mxu0 0
    %468 = vmatmul.mubr.bf16.gmra.mrb[0].mxu0 %v286
    %v469 = vpop.f32.mrb[0].mxu0
    %v470 = vadd.f32 0.0, %v469
    %v471 = vpop.f32.mrb[0].mxu0
    %v472 = vpop.f32.mrb[0].mxu0
    %v473 = vadd.f32 0.0, %v472
    %v474 = vpop.f32.mrb[0].mxu0
    %475 = vmatprep.mubr.bf16.mxu0 0
    %476 = vmatmul.mubr.bf16.gmra.mrb[0].mxu0 %v289
    %v477 = vpop.f32.mrb[0].mxu0
    %v478 = vadd.f32 0.0, %v477
    %v479 = vpop.f32.mrb[0].mxu0
    %v480 = vpop.f32.mrb[0].mxu0
    %v481 = vadd.f32 0.0, %v480
    %v482 = vpop.f32.mrb[0].mxu0
    %483 = vmatprep.mubr.bf16.mxu0 0
    %484 = vmatmul.mubr.bf16.gmra.mrb[0].mxu0 %v292
    %v485 = vpop.f32.mrb[0].mxu0
    %v486 = vadd.f32 0.0, %v485
    %v487 = vpop.f32.mrb[0].mxu0
    %v488 = vpop.f32.mrb[0].mxu0
    %v489 = vadd.f32 0.0, %v488
    %v490 = vpop.f32.mrb[0].mxu0
    %491 = vmatprep.mubr.bf16.mxu0 0
    %492 = vmatmul.mubr.bf16.gmra.mrb[0].mxu0 %v295
    %v493 = vpop.f32.mrb[0].mxu0
    %v494 = vadd.f32 0.0, %v493
    %v495 = vpop.f32.mrb[0].mxu0
    %v496 = vpop.f32.mrb[0].mxu0
    %v497 = vadd.f32 0.0, %v496
    %v498 = vpop.f32.mrb[0].mxu0
    %499 = vmatprep.mubr.bf16.mxu0 0
    %500 = vmatmul.mubr.bf16.gmra.mrb[0].mxu0 %v298
    %v501 = vpop.f32.mrb[0].mxu0
    %v502 = vadd.f32 0.0, %v501
    %v503 = vpop.f32.mrb[0].mxu0
    %v504 = vpop.f32.mrb[0].mxu0
    %v505 = vadd.f32 0.0, %v504
    %v506 = vpop.f32.mrb[0].mxu0
    %507 = vmatprep.mubr.bf16.mxu0 0
    %508 = vmatmul.mubr.bf16.gmra.mrb[0].mxu0 %v301
    %v509 = vpop.f32.mrb[0].mxu0
    %v510 = vadd.f32 0.0, %v509
    %v511 = vpop.f32.mrb[0].mxu0
    %v512 = vpop.f32.mrb[0].mxu0
    %v513 = vadd.f32 0.0, %v512
    %v514 = vpop.f32.mrb[0].mxu0
    %515 = vmatprep.mubr.bf16.mxu0 0
    %516 = vmatmul.mubr.bf16.gmra.mrb[0].mxu0 %v304
    %v517 = vpop.f32.mrb[0].mxu0
    %v518 = vadd.f32 0.0, %v517
    %v519 = vpop.f32.mrb[0].mxu0
    %v520 = vpop.f32.mrb[0].mxu0
    %v521 = vadd.f32 0.0, %v520
    %v522 = vpop.f32.mrb[0].mxu0
    %523 = vmatprep.mubr.bf16.mxu0 0
    %524 = vmatmul.mubr.bf16.gmra.mrb[0].mxu0 %v307
    %v525 = vpop.f32.mrb[0].mxu0
    %v526 = vadd.f32 0.0, %v525
    %v527 = vpop.f32.mrb[0].mxu0
    %v528 = vpop.f32.mrb[0].mxu0
    %v529 = vadd.f32 0.0, %v528
    %v530 = vpop.f32.mrb[0].mxu0
    %531 = vmatprep.mubr.bf16.mxu0 0
    %532 = vmatmul.mubr.bf16.gmra.mrb[0].mxu0 %v310
    %v533 = vpop.f32.mrb[0].mxu0
    %v534 = vadd.f32 0.0, %v533
    %v535 = vpop.f32.mrb[0].mxu0
    %v536 = vpop.f32.mrb[0].mxu0
    %v537 = vadd.f32 0.0, %v536
    %v538 = vpop.f32.mrb[0].mxu0
    %539 = vmatprep.mubr.bf16.mxu0 0
    %540 = vmatmul.mubr.bf16.gmra.mrb[0].mxu0 %v313
    %v541 = vpop.f32.mrb[0].mxu0
    %v542 = vadd.f32 0.0, %v541
    %v543 = vpop.f32.mrb[0].mxu0
    %v544 = vpop.f32.mrb[0].mxu0
    %v545 = vadd.f32 0.0, %v544
    %v546 = vpop.f32.mrb[0].mxu0
    %547 = vmatprep.mubr.bf16.mxu0 0
    %548 = vmatmul.mubr.bf16.gmra.mrb[0].mxu0 %v316
    %v549 = vpop.f32.mrb[0].mxu0
    %v550 = vadd.f32 0.0, %v549
    %v551 = vpop.f32.mrb[0].mxu0
    %v552 = vpop.f32.mrb[0].mxu0
    %v553 = vadd.f32 0.0, %v552
    %v554 = vpop.f32.mrb[0].mxu0
    %555 = vmatprep.mubr.bf16.mxu0 0
    %556 = vmatmul.mubr.bf16.gmra.mrb[0].mxu0 %v319
    %v557 = vpop.f32.mrb[0].mxu0
    %v558 = vadd.f32 0.0, %v557
    %v559 = vpop.f32.mrb[0].mxu0
    %v560 = vpop.f32.mrb[0].mxu0
    %v561 = vadd.f32 0.0, %v560
    %v562 = vpop.f32.mrb[0].mxu0
    %563 = vmatprep.mubr.bf16.mxu0 0
    %564 = vmatmul.mubr.bf16.gmra.mrb[0].mxu0 %v322
    %v565 = vpop.f32.mrb[0].mxu0
    %v566 = vadd.f32 0.0, %v565
    %v567 = vpop.f32.mrb[0].mxu0
    %v568 = vpop.f32.mrb[0].mxu0
    %v569 = vadd.f32 0.0, %v568
    %v570 = vpop.f32.mrb[0].mxu0
    %571 = vdwg.mxu0
    %v572 = vld [vmem:[%s1] sm:$0xf]
    %v573 = vld [vmem:[%s1 + $0x4] sm:$0xf]
    %v574 = vld [vmem:[%s1 + $0x8] sm:$0xf]
    %v575 = vld [vmem:[%s1 + $0xc] sm:$0xf]
    %v576 = vld [vmem:[%s1 + $0x10] sm:$0xf]
    %v577 = vld [vmem:[%s1 + $0x14] sm:$0xf]
    %v578 = vld [vmem:[%s1 + $0x18] sm:$0xf]
    %v579 = vld [vmem:[%s1 + $0x1c] sm:$0xf]
    %v580 = vld [vmem:[%s1 + $0x20] sm:$0xf]
    %v581 = vld [vmem:[%s1 + $0x24] sm:$0xf]
    %v582 = vld [vmem:[%s1 + $0x28] sm:$0xf]
    %v583 = vld [vmem:[%s1 + $0x2c] sm:$0xf]
    %v584 = vld [vmem:[%s1 + $0x30] sm:$0xf]
    %v585 = vld [vmem:[%s1 + $0x34] sm:$0xf]
    %v586 = vld [vmem:[%s1 + $0x38] sm:$0xf]
    %v587 = vld [vmem:[%s1 + $0x3c] sm:$0xf]
    %v588 = vld [vmem:[%s1 + $0x40] sm:$0xf]
    %v589 = vld [vmem:[%s1 + $0x44] sm:$0xf]
    %v590 = vld [vmem:[%s1 + $0x48] sm:$0xf]
    %v591 = vld [vmem:[%s1 + $0x4c] sm:$0xf]
    %v592 = vld [vmem:[%s1 + $0x50] sm:$0xf]
    %v593 = vld [vmem:[%s1 + $0x54] sm:$0xf]
    %v594 = vld [vmem:[%s1 + $0x58] sm:$0xf]
    %v595 = vld [vmem:[%s1 + $0x5c] sm:$0xf]
    %v596 = vld [vmem:[%s1 + $0x60] sm:$0xf]
    %v597 = vld [vmem:[%s1 + $0x64] sm:$0xf]
    %v598 = vld [vmem:[%s1 + $0x68] sm:$0xf]
    %v599 = vld [vmem:[%s1 + $0x6c] sm:$0xf]
    %v600 = vld [vmem:[%s1 + $0x70] sm:$0xf]
    %v601 = vld [vmem:[%s1 + $0x74] sm:$0xf]
    %v602 = vld [vmem:[%s1 + $0x78] sm:$0xf]
    %v603 = vld [vmem:[%s1 + $0x7c] sm:$0xf]
    %v604 = vld [vmem:[%s1 + $0x80] sm:$0xf]
    %v605 = vld [vmem:[%s1 + $0x84] sm:$0xf]
    %v606 = vld [vmem:[%s1 + $0x88] sm:$0xf]
    %v607 = vld [vmem:[%s1 + $0x8c] sm:$0xf]
    %v608 = vld [vmem:[%s1 + $0x90] sm:$0xf]
    %v609 = vld [vmem:[%s1 + $0x94] sm:$0xf]
    %v610 = vld [vmem:[%s1 + $0x98] sm:$0xf]
    %v611 = vld [vmem:[%s1 + $0x9c] sm:$0xf]
    %v612 = vld [vmem:[%s1 + $0xa0] sm:$0xf]
    %v613 = vld [vmem:[%s1 + $0xa4] sm:$0xf]
    %v614 = vld [vmem:[%s1 + $0xa8] sm:$0xf]
    %v615 = vld [vmem:[%s1 + $0xac] sm:$0xf]
    %v616 = vld [vmem:[%s1 + $0xb0] sm:$0xf]
    %v617 = vld [vmem:[%s1 + $0xb4] sm:$0xf]
    %v618 = vld [vmem:[%s1 + $0xb8] sm:$0xf]
    %v619 = vld [vmem:[%s1 + $0xbc] sm:$0xf]
    %v620 = vld [vmem:[%s1 + $0xc0] sm:$0xf]
    %v621 = vld [vmem:[%s1 + $0xc4] sm:$0xf]
    %v622 = vld [vmem:[%s1 + $0xc8] sm:$0xf]
    %v623 = vld [vmem:[%s1 + $0xcc] sm:$0xf]
    %v676 = vunpack.c.l.b16 %v572
    %v677 = vunpack.c.l.b16 %v573
    %v678 = vunpack.c.l.b16 %v574
    %v679 = vunpack.c.l.b16 %v575
    %v680 = vunpack.c.l.b16 %v576
    %v681 = vunpack.c.l.b16 %v577
    %v682 = vunpack.c.l.b16 %v578
    %v683 = vunpack.c.l.b16 %v579
    %v684 = vunpack.c.l.b16 %v580
    %v685 = vunpack.c.l.b16 %v581
    %v686 = vunpack.c.l.b16 %v582
    %v687 = vunpack.c.l.b16 %v583
    %v688 = vunpack.c.l.b16 %v584
    %v689 = vunpack.c.l.b16 %v585
    %v690 = vunpack.c.l.b16 %v586
    %v691 = vunpack.c.l.b16 %v587
    %v692 = vunpack.c.l.b16 %v588
    %v693 = vunpack.c.l.b16 %v589
    %v694 = vunpack.c.l.b16 %v590
    %v695 = vunpack.c.l.b16 %v591
    %v696 = vunpack.c.l.b16 %v592
    %v697 = vunpack.c.l.b16 %v593
    %v698 = vunpack.c.l.b16 %v594
    %v699 = vunpack.c.l.b16 %v595
    %v700 = vunpack.c.l.b16 %v596
    %v701 = vunpack.c.l.b16 %v597
    %v702 = vunpack.c.l.b16 %v598
    %v703 = vunpack.c.l.b16 %v599
    %v704 = vunpack.c.l.b16 %v600
    %v705 = vunpack.c.l.b16 %v601
    %v706 = vunpack.c.l.b16 %v602
    %v707 = vunpack.c.l.b16 %v603
    %v708 = vunpack.c.l.b16 %v604
    %v709 = vunpack.c.l.b16 %v605
    %v710 = vunpack.c.l.b16 %v606
    %v711 = vunpack.c.l.b16 %v607
    %v712 = vunpack.c.l.b16 %v608
    %v713 = vunpack.c.l.b16 %v609
    %v714 = vunpack.c.l.b16 %v610
    %v715 = vunpack.c.l.b16 %v611
    %v716 = vunpack.c.l.b16 %v612
    %v717 = vunpack.c.l.b16 %v613
    %v718 = vunpack.c.l.b16 %v614
    %v719 = vunpack.c.l.b16 %v615
    %v720 = vunpack.c.l.b16 %v616
    %v721 = vunpack.c.l.b16 %v617
    %v722 = vunpack.c.l.b16 %v618
    %v723 = vunpack.c.l.b16 %v619
    %v724 = vunpack.c.l.b16 %v620
    %v725 = vunpack.c.l.b16 %v621
    %v726 = vunpack.c.l.b16 %v622
    %v727 = vunpack.c.l.b16 %v623
    %v728 = vpack.c.b16 %v677, %v676
    %v729 = vpack.c.b16 %v679, %v678
    %v730 = vpack.c.b16 %v681, %v680
    %v731 = vpack.c.b16 %v683, %v682
    %v732 = vpack.c.b16 %v685, %v684
    %v733 = vpack.c.b16 %v687, %v686
    %v734 = vpack.c.b16 %v689, %v688
    %v735 = vpack.c.b16 %v691, %v690
    %v736 = vpack.c.b16 %v693, %v692
    %v737 = vpack.c.b16 %v695, %v694
    %v738 = vpack.c.b16 %v697, %v696
    %v739 = vpack.c.b16 %v699, %v698
    %v740 = vpack.c.b16 %v701, %v700
    %v741 = vpack.c.b16 %v703, %v702
    %v742 = vpack.c.b16 %v705, %v704
    %v743 = vpack.c.b16 %v707, %v706
    %v744 = vpack.c.b16 %v709, %v708
    %v745 = vpack.c.b16 %v711, %v710
    %v746 = vpack.c.b16 %v713, %v712
    %v747 = vpack.c.b16 %v715, %v714
    %v748 = vpack.c.b16 %v717, %v716
    %v749 = vpack.c.b16 %v719, %v718
    %v750 = vpack.c.b16 %v721, %v720
    %v751 = vpack.c.b16 %v723, %v722
    %v752 = vpack.c.b16 %v725, %v724
    %v753 = vpack.c.b16 %v727, %v726
    %v755 = vsel %vm245, %v728, 0
    %v758 = vsel %vm245, %v729, 0
    %v761 = vsel %vm245, %v730, 0
    %v764 = vsel %vm245, %v731, 0
    %v767 = vsel %vm245, %v732, 0
    %v770 = vsel %vm245, %v733, 0
    %v773 = vsel %vm245, %v734, 0
    %v776 = vsel %vm245, %v735, 0
    %v779 = vsel %vm245, %v736, 0
    %v782 = vsel %vm245, %v737, 0
    %v785 = vsel %vm245, %v738, 0
    %v788 = vsel %vm245, %v739, 0
    %v791 = vsel %vm245, %v740, 0
    %v794 = vsel %vm245, %v741, 0
    %v797 = vsel %vm245, %v742, 0
    %v800 = vsel %vm245, %v743, 0
    %v803 = vsel %vm245, %v744, 0
    %v806 = vsel %vm245, %v745, 0
    %v809 = vsel %vm245, %v746, 0
    %v812 = vsel %vm245, %v747, 0
    %v815 = vsel %vm245, %v748, 0
    %v818 = vsel %vm245, %v749, 0
    %v821 = vsel %vm245, %v750, 0
    %v824 = vsel %vm245, %v751, 0
    %v827 = vsel %vm245, %v752, 0
    %v830 = vsel %vm245, %v753, 0
    %832 = vmatprep.subr.bf16.mxu0 0
    %833 = vmatpush1.bf16.msra.mxu0 %v236
    %834 = vmatprep.subr.bf16.mxu0 0
    %835 = vmatpush1.bf16.msra.mxu0 %v237
    %836 = vmatprep.subr.bf16.mxu0 0
    %837 = vmatpush1.bf16.msra.mxu0 %v238
    %838 = vmatprep.subr.bf16.mxu0 0
    %839 = vmatpush1.bf16.msra.mxu0 %v239
    %840 = vmatprep.subr.bf16.mxu0 0
    %841 = vmatpush1.bf16.msra.mxu0 %v329
    %842 = vmatprep.subr.bf16.mxu0 0
    %843 = vmatpush1.bf16.msra.mxu0 0
    %844 = vmatprep.subr.bf16.mxu0 0
    %845 = vmatpush1.bf16.msra.mxu0 0
    %846 = vmatprep.subr.bf16.mxu0 0
    %847 = vmatpush1.bf16.msra.mxu0 0
    %848 = vmatprep.subr.bf16.mxu0 0
    %849 = vmatpush1.bf16.msra.mxu0 0
    %850 = vmatprep.subr.bf16.mxu0 0
    %851 = vmatpush1.bf16.msra.mxu0 0
    %852 = vmatprep.subr.bf16.mxu0 0
    %853 = vmatpush1.bf16.msra.mxu0 0
    %854 = vmatprep.subr.bf16.mxu0 0
    %855 = vmatpush1.bf16.msra.mxu0 0
    %856 = vmatprep.subr.bf16.mxu0 0
    %857 = vmatpush1.bf16.msra.mxu0 0
    %858 = vmatprep.subr.bf16.mxu0 0
    %859 = vmatpush1.bf16.msra.mxu0 0
    %860 = vmatprep.subr.bf16.mxu0 0
    %861 = vmatpush1.bf16.msra.mxu0 0
    %862 = vmatprep.subr.bf16.mxu0 0
    %863 = vmatpush1.bf16.msra.mxu0 0
    %864 = vmatprep.mubr.bf16.mxu0 0
    %865 = vmatmul.mubr.bf16.gmra.mrb[0].mxu0 %v755
    %v866 = vpop.f32.mrb[0].mxu0
    %v867 = vadd.f32 0.0, %v866
    %v868 = vpop.f32.mrb[0].mxu0
    %v869 = vpop.f32.mrb[0].mxu0
    %v870 = vadd.f32 0.0, %v869
    %v871 = vpop.f32.mrb[0].mxu0
    %872 = vmatprep.mubr.bf16.mxu0 0
    %873 = vmatmul.mubr.bf16.gmra.mrb[0].mxu0 %v758
    %v874 = vpop.f32.mrb[0].mxu0
    %v875 = vadd.f32 0.0, %v874
    %v876 = vpop.f32.mrb[0].mxu0
    %v877 = vpop.f32.mrb[0].mxu0
    %v878 = vadd.f32 0.0, %v877
    %v879 = vpop.f32.mrb[0].mxu0
    %880 = vmatprep.mubr.bf16.mxu0 0
    %881 = vmatmul.mubr.bf16.gmra.mrb[0].mxu0 %v761
    %v882 = vpop.f32.mrb[0].mxu0
    %v883 = vadd.f32 0.0, %v882
    %v884 = vpop.f32.mrb[0].mxu0
    %v885 = vpop.f32.mrb[0].mxu0
    %v886 = vadd.f32 0.0, %v885
    %v887 = vpop.f32.mrb[0].mxu0
    %888 = vmatprep.mubr.bf16.mxu0 0
    %889 = vmatmul.mubr.bf16.gmra.mrb[0].mxu0 %v764
    %v890 = vpop.f32.mrb[0].mxu0
    %v891 = vadd.f32 0.0, %v890
    %v892 = vpop.f32.mrb[0].mxu0
    %v893 = vpop.f32.mrb[0].mxu0
    %v894 = vadd.f32 0.0, %v893
    %v895 = vpop.f32.mrb[0].mxu0
    %896 = vmatprep.mubr.bf16.mxu0 0
    %897 = vmatmul.mubr.bf16.gmra.mrb[0].mxu0 %v767
    %v898 = vpop.f32.mrb[0].mxu0
    %v899 = vadd.f32 0.0, %v898
    %v900 = vpop.f32.mrb[0].mxu0
    %v901 = vpop.f32.mrb[0].mxu0
    %v902 = vadd.f32 0.0, %v901
    %v903 = vpop.f32.mrb[0].mxu0
    %904 = vmatprep.mubr.bf16.mxu0 0
    %905 = vmatmul.mubr.bf16.gmra.mrb[0].mxu0 %v770
    %v906 = vpop.f32.mrb[0].mxu0
    %v907 = vadd.f32 0.0, %v906
    %v908 = vpop.f32.mrb[0].mxu0
    %v909 = vpop.f32.mrb[0].mxu0
    %v910 = vadd.f32 0.0, %v909
    %v911 = vpop.f32.mrb[0].mxu0
    %912 = vmatprep.mubr.bf16.mxu0 0
    %913 = vmatmul.mubr.bf16.gmra.mrb[0].mxu0 %v773
    %v914 = vpop.f32.mrb[0].mxu0
    %v915 = vadd.f32 0.0, %v914
    %v916 = vpop.f32.mrb[0].mxu0
    %v917 = vpop.f32.mrb[0].mxu0
    %v918 = vadd.f32 0.0, %v917
    %v919 = vpop.f32.mrb[0].mxu0
    %920 = vmatprep.mubr.bf16.mxu0 0
    %921 = vmatmul.mubr.bf16.gmra.mrb[0].mxu0 %v776
    %v922 = vpop.f32.mrb[0].mxu0
    %v923 = vadd.f32 0.0, %v922
    %v924 = vpop.f32.mrb[0].mxu0
    %v925 = vpop.f32.mrb[0].mxu0
    %v926 = vadd.f32 0.0, %v925
    %v927 = vpop.f32.mrb[0].mxu0
    %928 = vmatprep.mubr.bf16.mxu0 0
    %929 = vmatmul.mubr.bf16.gmra.mrb[0].mxu0 %v779
    %v930 = vpop.f32.mrb[0].mxu0
    %v931 = vadd.f32 0.0, %v930
    %v932 = vpop.f32.mrb[0].mxu0
    %v933 = vpop.f32.mrb[0].mxu0
    %v934 = vadd.f32 0.0, %v933
    %v935 = vpop.f32.mrb[0].mxu0
    %936 = vmatprep.mubr.bf16.mxu0 0
    %937 = vmatmul.mubr.bf16.gmra.mrb[0].mxu0 %v782
    %v938 = vpop.f32.mrb[0].mxu0
    %v939 = vadd.f32 0.0, %v938
    %v940 = vpop.f32.mrb[0].mxu0
    %v941 = vpop.f32.mrb[0].mxu0
    %v942 = vadd.f32 0.0, %v941
    %v943 = vpop.f32.mrb[0].mxu0
    %944 = vmatprep.mubr.bf16.mxu0 0
    %945 = vmatmul.mubr.bf16.gmra.mrb[0].mxu0 %v785
    %v946 = vpop.f32.mrb[0].mxu0
    %v947 = vadd.f32 0.0, %v946
    %v948 = vpop.f32.mrb[0].mxu0
    %v949 = vpop.f32.mrb[0].mxu0
    %v950 = vadd.f32 0.0, %v949
    %v951 = vpop.f32.mrb[0].mxu0
    %952 = vmatprep.mubr.bf16.mxu0 0
    %953 = vmatmul.mubr.bf16.gmra.mrb[0].mxu0 %v788
    %v954 = vpop.f32.mrb[0].mxu0
    %v955 = vadd.f32 0.0, %v954
    %v956 = vpop.f32.mrb[0].mxu0
    %v957 = vpop.f32.mrb[0].mxu0
    %v958 = vadd.f32 0.0, %v957
    %v959 = vpop.f32.mrb[0].mxu0
    %960 = vmatprep.mubr.bf16.mxu0 0
    %961 = vmatmul.mubr.bf16.gmra.mrb[0].mxu0 %v791
    %v962 = vpop.f32.mrb[0].mxu0
    %v963 = vadd.f32 0.0, %v962
    %v964 = vpop.f32.mrb[0].mxu0
    %v965 = vpop.f32.mrb[0].mxu0
    %v966 = vadd.f32 0.0, %v965
    %v967 = vpop.f32.mrb[0].mxu0
    %968 = vmatprep.mubr.bf16.mxu0 0
    %969 = vmatmul.mubr.bf16.gmra.mrb[0].mxu0 %v794
    %v970 = vpop.f32.mrb[0].mxu0
    %v971 = vadd.f32 0.0, %v970
    %v972 = vpop.f32.mrb[0].mxu0
    %v973 = vpop.f32.mrb[0].mxu0
    %v974 = vadd.f32 0.0, %v973
    %v975 = vpop.f32.mrb[0].mxu0
    %976 = vmatprep.mubr.bf16.mxu0 0
    %977 = vmatmul.mubr.bf16.gmra.mrb[0].mxu0 %v797
    %v978 = vpop.f32.mrb[0].mxu0
    %v979 = vadd.f32 0.0, %v978
    %v980 = vpop.f32.mrb[0].mxu0
    %v981 = vpop.f32.mrb[0].mxu0
    %v982 = vadd.f32 0.0, %v981
    %v983 = vpop.f32.mrb[0].mxu0
    %984 = vmatprep.mubr.bf16.mxu0 0
    %985 = vmatmul.mubr.bf16.gmra.mrb[0].mxu0 %v800
    %v986 = vpop.f32.mrb[0].mxu0
    %v987 = vadd.f32 0.0, %v986
    %v988 = vpop.f32.mrb[0].mxu0
    %v989 = vpop.f32.mrb[0].mxu0
    %v990 = vadd.f32 0.0, %v989
    %v991 = vpop.f32.mrb[0].mxu0
    %992 = vmatprep.mubr.bf16.mxu0 0
    %993 = vmatmul.mubr.bf16.gmra.mrb[0].mxu0 %v803
    %v994 = vpop.f32.mrb[0].mxu0
    %v995 = vadd.f32 0.0, %v994
    %v996 = vpop.f32.mrb[0].mxu0
    %v997 = vpop.f32.mrb[0].mxu0
    %v998 = vadd.f32 0.0, %v997
    %v999 = vpop.f32.mrb[0].mxu0
    %1000 = vmatprep.mubr.bf16.mxu0 0
    %1001 = vmatmul.mubr.bf16.gmra.mrb[0].mxu0 %v806
    %v1002 = vpop.f32.mrb[0].mxu0
    %v1003 = vadd.f32 0.0, %v1002
    %v1004 = vpop.f32.mrb[0].mxu0
    %v1005 = vpop.f32.mrb[0].mxu0
    %v1006 = vadd.f32 0.0, %v1005
    %v1007 = vpop.f32.mrb[0].mxu0
    %1008 = vmatprep.mubr.bf16.mxu0 0
    %1009 = vmatmul.mubr.bf16.gmra.mrb[0].mxu0 %v809
    %v1010 = vpop.f32.mrb[0].mxu0
    %v1011 = vadd.f32 0.0, %v1010
    %v1012 = vpop.f32.mrb[0].mxu0
    %v1013 = vpop.f32.mrb[0].mxu0
    %v1014 = vadd.f32 0.0, %v1013
    %v1015 = vpop.f32.mrb[0].mxu0
    %1016 = vmatprep.mubr.bf16.mxu0 0
    %1017 = vmatmul.mubr.bf16.gmra.mrb[0].mxu0 %v812
    %v1018 = vpop.f32.mrb[0].mxu0
    %v1019 = vadd.f32 0.0, %v1018
    %v1020 = vpop.f32.mrb[0].mxu0
    %v1021 = vpop.f32.mrb[0].mxu0
    %v1022 = vadd.f32 0.0, %v1021
    %v1023 = vpop.f32.mrb[0].mxu0
    %1024 = vmatprep.mubr.bf16.mxu0 0
    %1025 = vmatmul.mubr.bf16.gmra.mrb[0].mxu0 %v815
    %v1026 = vpop.f32.mrb[0].mxu0
    %v1027 = vadd.f32 0.0, %v1026
    %v1028 = vpop.f32.mrb[0].mxu0
    %v1029 = vpop.f32.mrb[0].mxu0
    %v1030 = vadd.f32 0.0, %v1029
    %v1031 = vpop.f32.mrb[0].mxu0
    %1032 = vmatprep.mubr.bf16.mxu0 0
    %1033 = vmatmul.mubr.bf16.gmra.mrb[0].mxu0 %v818
    %v1034 = vpop.f32.mrb[0].mxu0
    %v1035 = vadd.f32 0.0, %v1034
    %v1036 = vpop.f32.mrb[0].mxu0
    %v1037 = vpop.f32.mrb[0].mxu0
    %v1038 = vadd.f32 0.0, %v1037
    %v1039 = vpop.f32.mrb[0].mxu0
    %1040 = vmatprep.mubr.bf16.mxu0 0
    %1041 = vmatmul.mubr.bf16.gmra.mrb[0].mxu0 %v821
    %v1042 = vpop.f32.mrb[0].mxu0
    %v1043 = vadd.f32 0.0, %v1042
    %v1044 = vpop.f32.mrb[0].mxu0
    %v1045 = vpop.f32.mrb[0].mxu0
    %v1046 = vadd.f32 0.0, %v1045
    %v1047 = vpop.f32.mrb[0].mxu0
    %1048 = vmatprep.mubr.bf16.mxu0 0
    %1049 = vmatmul.mubr.bf16.gmra.mrb[0].mxu0 %v824
    %v1050 = vpop.f32.mrb[0].mxu0
    %v1051 = vadd.f32 0.0, %v1050
    %v1052 = vpop.f32.mrb[0].mxu0
    %v1053 = vpop.f32.mrb[0].mxu0
    %v1054 = vadd.f32 0.0, %v1053
    %v1055 = vpop.f32.mrb[0].mxu0
    %1056 = vmatprep.mubr.bf16.mxu0 0
    %1057 = vmatmul.mubr.bf16.gmra.mrb[0].mxu0 %v827
    %v1058 = vpop.f32.mrb[0].mxu0
    %v1059 = vadd.f32 0.0, %v1058
    %v1060 = vpop.f32.mrb[0].mxu0
    %v1061 = vpop.f32.mrb[0].mxu0
    %v1062 = vadd.f32 0.0, %v1061
    %v1063 = vpop.f32.mrb[0].mxu0
    %1064 = vmatprep.mubr.bf16.mxu0 0
    %1065 = vmatmul.mubr.bf16.gmra.mrb[0].mxu0 %v830
    %v1066 = vpop.f32.mrb[0].mxu0
    %v1067 = vadd.f32 0.0, %v1066
    %v1068 = vpop.f32.mrb[0].mxu0
    %v1069 = vpop.f32.mrb[0].mxu0
    %v1070 = vadd.f32 0.0, %v1069
    %v1071 = vpop.f32.mrb[0].mxu0
    %1072 = vdwg.mxu0
    %v1073 = vmax.f32 %v366, %v867
    %v1074 = vmax.f32 %v369, %v870
    %v1075 = vmax.f32 %v374, %v875
    %v1076 = vmax.f32 %v377, %v878
    %v1077 = vmax.f32 %v382, %v883
    %v1078 = vmax.f32 %v385, %v886
    %v1079 = vmax.f32 %v390, %v891
    %v1080 = vmax.f32 %v393, %v894
    %v1081 = vmax.f32 %v398, %v899
    %v1082 = vmax.f32 %v401, %v902
    %v1083 = vmax.f32 %v406, %v907
    %v1084 = vmax.f32 %v409, %v910
    %v1085 = vmax.f32 %v414, %v915
    %v1086 = vmax.f32 %v417, %v918
    %v1087 = vmax.f32 %v422, %v923
    %v1088 = vmax.f32 %v425, %v926
    %v1089 = vmax.f32 %v430, %v931
    %v1090 = vmax.f32 %v433, %v934
    %v1091 = vmax.f32 %v438, %v939
    %v1092 = vmax.f32 %v441, %v942
    %v1093 = vmax.f32 %v446, %v947
    %v1094 = vmax.f32 %v449, %v950
    %v1095 = vmax.f32 %v454, %v955
    %v1096 = vmax.f32 %v457, %v958
    %v1097 = vmax.f32 %v462, %v963
    %v1098 = vmax.f32 %v465, %v966
    %v1099 = vmax.f32 %v470, %v971
    %v1100 = vmax.f32 %v473, %v974
    %v1101 = vmax.f32 %v478, %v979
    %v1102 = vmax.f32 %v481, %v982
    %v1103 = vmax.f32 %v486, %v987
    %v1104 = vmax.f32 %v489, %v990
    %v1105 = vmax.f32 %v494, %v995
    %v1106 = vmax.f32 %v497, %v998
    %v1107 = vmax.f32 %v502, %v1003
    %v1108 = vmax.f32 %v505, %v1006
    %v1109 = vmax.f32 %v510, %v1011
    %v1110 = vmax.f32 %v513, %v1014
    %v1111 = vmax.f32 %v518, %v1019
    %v1112 = vmax.f32 %v521, %v1022
    %v1113 = vmax.f32 %v526, %v1027
    %v1114 = vmax.f32 %v529, %v1030
    %v1115 = vmax.f32 %v534, %v1035
    %v1116 = vmax.f32 %v537, %v1038
    %v1117 = vmax.f32 %v542, %v1043
    %v1118 = vmax.f32 %v545, %v1046
    %v1119 = vmax.f32 %v550, %v1051
    %v1120 = vmax.f32 %v553, %v1054
    %v1121 = vmax.f32 %v558, %v1059
    %v1122 = vmax.f32 %v561, %v1062
    %v1123 = vmax.f32 %v566, %v1067
    %v1124 = vmax.f32 %v569, %v1070
    %v1125 = vld [vmem:[%s2] sm:$0xf]
    %v1126 = vld [vmem:[%s2 + $0x4] sm:$0xf]
    %v1127 = vld [vmem:[%s2 + $0x8] sm:$0xf]
    %v1128 = vld [vmem:[%s2 + $0xc] sm:$0xf]
    %v1129 = vld [vmem:[%s2 + $0x10] sm:$0xf]
    %v1130 = vld [vmem:[%s2 + $0x14] sm:$0xf]
    %v1131 = vld [vmem:[%s2 + $0x18] sm:$0xf]
    %v1132 = vld [vmem:[%s2 + $0x1c] sm:$0xf]
    %v1133 = vld [vmem:[%s2 + $0x20] sm:$0xf]
    %v1134 = vld [vmem:[%s2 + $0x24] sm:$0xf]
    %v1135 = vld [vmem:[%s2 + $0x28] sm:$0xf]
    %v1136 = vld [vmem:[%s2 + $0x2c] sm:$0xf]
    %v1137 = vld [vmem:[%s2 + $0x30] sm:$0xf]
    %v1138 = vld [vmem:[%s2 + $0x34] sm:$0xf]
    %v1139 = vld [vmem:[%s2 + $0x38] sm:$0xf]
    %v1140 = vld [vmem:[%s2 + $0x3c] sm:$0xf]
    %v1141 = vld [vmem:[%s2 + $0x40] sm:$0xf]
    %v1142 = vld [vmem:[%s2 + $0x44] sm:$0xf]
    %v1143 = vld [vmem:[%s2 + $0x48] sm:$0xf]
    %v1144 = vld [vmem:[%s2 + $0x4c] sm:$0xf]
    %v1145 = vld [vmem:[%s2 + $0x50] sm:$0xf]
    %v1146 = vld [vmem:[%s2 + $0x54] sm:$0xf]
    %v1147 = vld [vmem:[%s2 + $0x58] sm:$0xf]
    %v1148 = vld [vmem:[%s2 + $0x5c] sm:$0xf]
    %v1149 = vld [vmem:[%s2 + $0x60] sm:$0xf]
    %v1150 = vld [vmem:[%s2 + $0x64] sm:$0xf]
    %v1151 = vld [vmem:[%s2 + $0x68] sm:$0xf]
    %v1152 = vld [vmem:[%s2 + $0x6c] sm:$0xf]
    %v1153 = vld [vmem:[%s2 + $0x70] sm:$0xf]
    %v1154 = vld [vmem:[%s2 + $0x74] sm:$0xf]
    %v1155 = vld [vmem:[%s2 + $0x78] sm:$0xf]
    %v1156 = vld [vmem:[%s2 + $0x7c] sm:$0xf]
    %v1157 = vld [vmem:[%s2 + $0x80] sm:$0xf]
    %v1158 = vld [vmem:[%s2 + $0x84] sm:$0xf]
    %v1159 = vld [vmem:[%s2 + $0x88] sm:$0xf]
    %v1160 = vld [vmem:[%s2 + $0x8c] sm:$0xf]
    %v1161 = vld [vmem:[%s2 + $0x90] sm:$0xf]
    %v1162 = vld [vmem:[%s2 + $0x94] sm:$0xf]
    %v1163 = vld [vmem:[%s2 + $0x98] sm:$0xf]
    %v1164 = vld [vmem:[%s2 + $0x9c] sm:$0xf]
    %v1165 = vld [vmem:[%s2 + $0xa0] sm:$0xf]
    %v1166 = vld [vmem:[%s2 + $0xa4] sm:$0xf]
    %v1167 = vld [vmem:[%s2 + $0xa8] sm:$0xf]
    %v1168 = vld [vmem:[%s2 + $0xac] sm:$0xf]
    %v1169 = vld [vmem:[%s2 + $0xb0] sm:$0xf]
    %v1170 = vld [vmem:[%s2 + $0xb4] sm:$0xf]
    %v1171 = vld [vmem:[%s2 + $0xb8] sm:$0xf]
    %v1172 = vld [vmem:[%s2 + $0xbc] sm:$0xf]
    %v1173 = vld [vmem:[%s2 + $0xc0] sm:$0xf]
    %v1174 = vld [vmem:[%s2 + $0xc4] sm:$0xf]
    %v1175 = vld [vmem:[%s2 + $0xc8] sm:$0xf]
    %v1176 = vld [vmem:[%s2 + $0xcc] sm:$0xf]
    %v1229 = vunpack.c.l.b16 %v1125
    %v1230 = vunpack.c.l.b16 %v1126
    %v1231 = vunpack.c.l.b16 %v1127
    %v1232 = vunpack.c.l.b16 %v1128
    %v1233 = vunpack.c.l.b16 %v1129
    %v1234 = vunpack.c.l.b16 %v1130
    %v1235 = vunpack.c.l.b16 %v1131
    %v1236 = vunpack.c.l.b16 %v1132
    %v1237 = vunpack.c.l.b16 %v1133
    %v1238 = vunpack.c.l.b16 %v1134
    %v1239 = vunpack.c.l.b16 %v1135
    %v1240 = vunpack.c.l.b16 %v1136
    %v1241 = vunpack.c.l.b16 %v1137
    %v1242 = vunpack.c.l.b16 %v1138
    %v1243 = vunpack.c.l.b16 %v1139
    %v1244 = vunpack.c.l.b16 %v1140
    %v1245 = vunpack.c.l.b16 %v1141
    %v1246 = vunpack.c.l.b16 %v1142
    %v1247 = vunpack.c.l.b16 %v1143
    %v1248 = vunpack.c.l.b16 %v1144
    %v1249 = vunpack.c.l.b16 %v1145
    %v1250 = vunpack.c.l.b16 %v1146
    %v1251 = vunpack.c.l.b16 %v1147
    %v1252 = vunpack.c.l.b16 %v1148
    %v1253 = vunpack.c.l.b16 %v1149
    %v1254 = vunpack.c.l.b16 %v1150
    %v1255 = vunpack.c.l.b16 %v1151
    %v1256 = vunpack.c.l.b16 %v1152
    %v1257 = vunpack.c.l.b16 %v1153
    %v1258 = vunpack.c.l.b16 %v1154
    %v1259 = vunpack.c.l.b16 %v1155
    %v1260 = vunpack.c.l.b16 %v1156
    %v1261 = vunpack.c.l.b16 %v1157
    %v1262 = vunpack.c.l.b16 %v1158
    %v1263 = vunpack.c.l.b16 %v1159
    %v1264 = vunpack.c.l.b16 %v1160
    %v1265 = vunpack.c.l.b16 %v1161
    %v1266 = vunpack.c.l.b16 %v1162
    %v1267 = vunpack.c.l.b16 %v1163
    %v1268 = vunpack.c.l.b16 %v1164
    %v1269 = vunpack.c.l.b16 %v1165
    %v1270 = vunpack.c.l.b16 %v1166
    %v1271 = vunpack.c.l.b16 %v1167
    %v1272 = vunpack.c.l.b16 %v1168
    %v1273 = vunpack.c.l.b16 %v1169
    %v1274 = vunpack.c.l.b16 %v1170
    %v1275 = vunpack.c.l.b16 %v1171
    %v1276 = vunpack.c.l.b16 %v1172
    %v1277 = vunpack.c.l.b16 %v1173
    %v1278 = vunpack.c.l.b16 %v1174
    %v1279 = vunpack.c.l.b16 %v1175
    %v1280 = vunpack.c.l.b16 %v1176
    %v1281 = vpack.c.b16 %v1230, %v1229
    %v1282 = vpack.c.b16 %v1232, %v1231
    %v1283 = vpack.c.b16 %v1234, %v1233
    %v1284 = vpack.c.b16 %v1236, %v1235
    %v1285 = vpack.c.b16 %v1238, %v1237
    %v1286 = vpack.c.b16 %v1240, %v1239
    %v1287 = vpack.c.b16 %v1242, %v1241
    %v1288 = vpack.c.b16 %v1244, %v1243
    %v1289 = vpack.c.b16 %v1246, %v1245
    %v1290 = vpack.c.b16 %v1248, %v1247
    %v1291 = vpack.c.b16 %v1250, %v1249
    %v1292 = vpack.c.b16 %v1252, %v1251
    %v1293 = vpack.c.b16 %v1254, %v1253
    %v1294 = vpack.c.b16 %v1256, %v1255
    %v1295 = vpack.c.b16 %v1258, %v1257
    %v1296 = vpack.c.b16 %v1260, %v1259
    %v1297 = vpack.c.b16 %v1262, %v1261
    %v1298 = vpack.c.b16 %v1264, %v1263
    %v1299 = vpack.c.b16 %v1266, %v1265
    %v1300 = vpack.c.b16 %v1268, %v1267
    %v1301 = vpack.c.b16 %v1270, %v1269
    %v1302 = vpack.c.b16 %v1272, %v1271
    %v1303 = vpack.c.b16 %v1274, %v1273
    %v1304 = vpack.c.b16 %v1276, %v1275
    %v1305 = vpack.c.b16 %v1278, %v1277
    %v1306 = vpack.c.b16 %v1280, %v1279
    %v1308 = vsel %vm245, %v1281, 0
    %v1311 = vsel %vm245, %v1282, 0
    %v1314 = vsel %vm245, %v1283, 0
    %v1317 = vsel %vm245, %v1284, 0
    %v1320 = vsel %vm245, %v1285, 0
    %v1323 = vsel %vm245, %v1286, 0
    %v1326 = vsel %vm245, %v1287, 0
    %v1329 = vsel %vm245, %v1288, 0
    %v1332 = vsel %vm245, %v1289, 0
    %v1335 = vsel %vm245, %v1290, 0
    %v1338 = vsel %vm245, %v1291, 0
    %v1341 = vsel %vm245, %v1292, 0
    %v1344 = vsel %vm245, %v1293, 0
    %v1347 = vsel %vm245, %v1294, 0
    %v1350 = vsel %vm245, %v1295, 0
    %v1353 = vsel %vm245, %v1296, 0
    %v1356 = vsel %vm245, %v1297, 0
    %v1359 = vsel %vm245, %v1298, 0
    %v1362 = vsel %vm245, %v1299, 0
    %v1365 = vsel %vm245, %v1300, 0
    %v1368 = vsel %vm245, %v1301, 0
    %v1371 = vsel %vm245, %v1302, 0
    %v1374 = vsel %vm245, %v1303, 0
    %v1377 = vsel %vm245, %v1304, 0
    %v1380 = vsel %vm245, %v1305, 0
    %v1383 = vsel %vm245, %v1306, 0
    %1385 = vmatprep.subr.bf16.mxu0 0
    %1386 = vmatpush1.bf16.msra.mxu0 %v236
    %1387 = vmatprep.subr.bf16.mxu0 0
    %1388 = vmatpush1.bf16.msra.mxu0 %v237
    %1389 = vmatprep.subr.bf16.mxu0 0
    %1390 = vmatpush1.bf16.msra.mxu0 %v238
    %1391 = vmatprep.subr.bf16.mxu0 0
    %1392 = vmatpush1.bf16.msra.mxu0 %v239
    %1393 = vmatprep.subr.bf16.mxu0 0
    %1394 = vmatpush1.bf16.msra.mxu0 %v329
    %1395 = vmatprep.subr.bf16.mxu0 0
    %1396 = vmatpush1.bf16.msra.mxu0 0
    %1397 = vmatprep.subr.bf16.mxu0 0
    %1398 = vmatpush1.bf16.msra.mxu0 0
    %1399 = vmatprep.subr.bf16.mxu0 0
    %1400 = vmatpush1.bf16.msra.mxu0 0
    %1401 = vmatprep.subr.bf16.mxu0 0
    %1402 = vmatpush1.bf16.msra.mxu0 0
    %1403 = vmatprep.subr.bf16.mxu0 0
    %1404 = vmatpush1.bf16.msra.mxu0 0
    %1405 = vmatprep.subr.bf16.mxu0 0
    %1406 = vmatpush1.bf16.msra.mxu0 0
    %1407 = vmatprep.subr.bf16.mxu0 0
    %1408 = vmatpush1.bf16.msra.mxu0 0
    %1409 = vmatprep.subr.bf16.mxu0 0
    %1410 = vmatpush1.bf16.msra.mxu0 0
    %1411 = vmatprep.subr.bf16.mxu0 0
    %1412 = vmatpush1.bf16.msra.mxu0 0
    %1413 = vmatprep.subr.bf16.mxu0 0
    %1414 = vmatpush1.bf16.msra.mxu0 0
    %1415 = vmatprep.subr.bf16.mxu0 0
    %1416 = vmatpush1.bf16.msra.mxu0 0
    %1417 = vmatprep.mubr.bf16.mxu0 0
    %1418 = vmatmul.mubr.bf16.gmra.mrb[0].mxu0 %v1308
    %v1419 = vpop.f32.mrb[0].mxu0
    %v1420 = vadd.f32 0.0, %v1419
    %v1421 = vpop.f32.mrb[0].mxu0
    %v1422 = vpop.f32.mrb[0].mxu0
    %v1423 = vadd.f32 0.0, %v1422
    %v1424 = vpop.f32.mrb[0].mxu0
    %1425 = vmatprep.mubr.bf16.mxu0 0
    %1426 = vmatmul.mubr.bf16.gmra.mrb[0].mxu0 %v1311
    %v1427 = vpop.f32.mrb[0].mxu0
    %v1428 = vadd.f32 0.0, %v1427
    %v1429 = vpop.f32.mrb[0].mxu0
    %v1430 = vpop.f32.mrb[0].mxu0
    %v1431 = vadd.f32 0.0, %v1430
    %v1432 = vpop.f32.mrb[0].mxu0
    %1433 = vmatprep.mubr.bf16.mxu0 0
    %1434 = vmatmul.mubr.bf16.gmra.mrb[0].mxu0 %v1314
    %v1435 = vpop.f32.mrb[0].mxu0
    %v1436 = vadd.f32 0.0, %v1435
    %v1437 = vpop.f32.mrb[0].mxu0
    %v1438 = vpop.f32.mrb[0].mxu0
    %v1439 = vadd.f32 0.0, %v1438
    %v1440 = vpop.f32.mrb[0].mxu0
    %1441 = vmatprep.mubr.bf16.mxu0 0
    %1442 = vmatmul.mubr.bf16.gmra.mrb[0].mxu0 %v1317
    %v1443 = vpop.f32.mrb[0].mxu0
    %v1444 = vadd.f32 0.0, %v1443
    %v1445 = vpop.f32.mrb[0].mxu0
    %v1446 = vpop.f32.mrb[0].mxu0
    %v1447 = vadd.f32 0.0, %v1446
    %v1448 = vpop.f32.mrb[0].mxu0
    %1449 = vmatprep.mubr.bf16.mxu0 0
    %1450 = vmatmul.mubr.bf16.gmra.mrb[0].mxu0 %v1320
    %v1451 = vpop.f32.mrb[0].mxu0
    %v1452 = vadd.f32 0.0, %v1451
    %v1453 = vpop.f32.mrb[0].mxu0
    %v1454 = vpop.f32.mrb[0].mxu0
    %v1455 = vadd.f32 0.0, %v1454
    %v1456 = vpop.f32.mrb[0].mxu0
    %1457 = vmatprep.mubr.bf16.mxu0 0
    %1458 = vmatmul.mubr.bf16.gmra.mrb[0].mxu0 %v1323
    %v1459 = vpop.f32.mrb[0].mxu0
    %v1460 = vadd.f32 0.0, %v1459
    %v1461 = vpop.f32.mrb[0].mxu0
    %v1462 = vpop.f32.mrb[0].mxu0
    %v1463 = vadd.f32 0.0, %v1462
    %v1464 = vpop.f32.mrb[0].mxu0
    %1465 = vmatprep.mubr.bf16.mxu0 0
    %1466 = vmatmul.mubr.bf16.gmra.mrb[0].mxu0 %v1326
    %v1467 = vpop.f32.mrb[0].mxu0
    %v1468 = vadd.f32 0.0, %v1467
    %v1469 = vpop.f32.mrb[0].mxu0
    %v1470 = vpop.f32.mrb[0].mxu0
    %v1471 = vadd.f32 0.0, %v1470
    %v1472 = vpop.f32.mrb[0].mxu0
    %1473 = vmatprep.mubr.bf16.mxu0 0
    %1474 = vmatmul.mubr.bf16.gmra.mrb[0].mxu0 %v1329
    %v1475 = vpop.f32.mrb[0].mxu0
    %v1476 = vadd.f32 0.0, %v1475
    %v1477 = vpop.f32.mrb[0].mxu0
    %v1478 = vpop.f32.mrb[0].mxu0
    %v1479 = vadd.f32 0.0, %v1478
    %v1480 = vpop.f32.mrb[0].mxu0
    %1481 = vmatprep.mubr.bf16.mxu0 0
    %1482 = vmatmul.mubr.bf16.gmra.mrb[0].mxu0 %v1332
    %v1483 = vpop.f32.mrb[0].mxu0
    %v1484 = vadd.f32 0.0, %v1483
    %v1485 = vpop.f32.mrb[0].mxu0
    %v1486 = vpop.f32.mrb[0].mxu0
    %v1487 = vadd.f32 0.0, %v1486
    %v1488 = vpop.f32.mrb[0].mxu0
    %1489 = vmatprep.mubr.bf16.mxu0 0
    %1490 = vmatmul.mubr.bf16.gmra.mrb[0].mxu0 %v1335
    %v1491 = vpop.f32.mrb[0].mxu0
    %v1492 = vadd.f32 0.0, %v1491
    %v1493 = vpop.f32.mrb[0].mxu0
    %v1494 = vpop.f32.mrb[0].mxu0
    %v1495 = vadd.f32 0.0, %v1494
    %v1496 = vpop.f32.mrb[0].mxu0
    %1497 = vmatprep.mubr.bf16.mxu0 0
    %1498 = vmatmul.mubr.bf16.gmra.mrb[0].mxu0 %v1338
    %v1499 = vpop.f32.mrb[0].mxu0
    %v1500 = vadd.f32 0.0, %v1499
    %v1501 = vpop.f32.mrb[0].mxu0
    %v1502 = vpop.f32.mrb[0].mxu0
    %v1503 = vadd.f32 0.0, %v1502
    %v1504 = vpop.f32.mrb[0].mxu0
    %1505 = vmatprep.mubr.bf16.mxu0 0
    %1506 = vmatmul.mubr.bf16.gmra.mrb[0].mxu0 %v1341
    %v1507 = vpop.f32.mrb[0].mxu0
    %v1508 = vadd.f32 0.0, %v1507
    %v1509 = vpop.f32.mrb[0].mxu0
    %v1510 = vpop.f32.mrb[0].mxu0
    %v1511 = vadd.f32 0.0, %v1510
    %v1512 = vpop.f32.mrb[0].mxu0
    %1513 = vmatprep.mubr.bf16.mxu0 0
    %1514 = vmatmul.mubr.bf16.gmra.mrb[0].mxu0 %v1344
    %v1515 = vpop.f32.mrb[0].mxu0
    %v1516 = vadd.f32 0.0, %v1515
    %v1517 = vpop.f32.mrb[0].mxu0
    %v1518 = vpop.f32.mrb[0].mxu0
    %v1519 = vadd.f32 0.0, %v1518
    %v1520 = vpop.f32.mrb[0].mxu0
    %1521 = vmatprep.mubr.bf16.mxu0 0
    %1522 = vmatmul.mubr.bf16.gmra.mrb[0].mxu0 %v1347
    %v1523 = vpop.f32.mrb[0].mxu0
    %v1524 = vadd.f32 0.0, %v1523
    %v1525 = vpop.f32.mrb[0].mxu0
    %v1526 = vpop.f32.mrb[0].mxu0
    %v1527 = vadd.f32 0.0, %v1526
    %v1528 = vpop.f32.mrb[0].mxu0
    %1529 = vmatprep.mubr.bf16.mxu0 0
    %1530 = vmatmul.mubr.bf16.gmra.mrb[0].mxu0 %v1350
    %v1531 = vpop.f32.mrb[0].mxu0
    %v1532 = vadd.f32 0.0, %v1531
    %v1533 = vpop.f32.mrb[0].mxu0
    %v1534 = vpop.f32.mrb[0].mxu0
    %v1535 = vadd.f32 0.0, %v1534
    %v1536 = vpop.f32.mrb[0].mxu0
    %1537 = vmatprep.mubr.bf16.mxu0 0
    %1538 = vmatmul.mubr.bf16.gmra.mrb[0].mxu0 %v1353
    %v1539 = vpop.f32.mrb[0].mxu0
    %v1540 = vadd.f32 0.0, %v1539
    %v1541 = vpop.f32.mrb[0].mxu0
    %v1542 = vpop.f32.mrb[0].mxu0
    %v1543 = vadd.f32 0.0, %v1542
    %v1544 = vpop.f32.mrb[0].mxu0
    %1545 = vmatprep.mubr.bf16.mxu0 0
    %1546 = vmatmul.mubr.bf16.gmra.mrb[0].mxu0 %v1356
    %v1547 = vpop.f32.mrb[0].mxu0
    %v1548 = vadd.f32 0.0, %v1547
    %v1549 = vpop.f32.mrb[0].mxu0
    %v1550 = vpop.f32.mrb[0].mxu0
    %v1551 = vadd.f32 0.0, %v1550
    %v1552 = vpop.f32.mrb[0].mxu0
    %1553 = vmatprep.mubr.bf16.mxu0 0
    %1554 = vmatmul.mubr.bf16.gmra.mrb[0].mxu0 %v1359
    %v1555 = vpop.f32.mrb[0].mxu0
    %v1556 = vadd.f32 0.0, %v1555
    %v1557 = vpop.f32.mrb[0].mxu0
    %v1558 = vpop.f32.mrb[0].mxu0
    %v1559 = vadd.f32 0.0, %v1558
    %v1560 = vpop.f32.mrb[0].mxu0
    %1561 = vmatprep.mubr.bf16.mxu0 0
    %1562 = vmatmul.mubr.bf16.gmra.mrb[0].mxu0 %v1362
    %v1563 = vpop.f32.mrb[0].mxu0
    %v1564 = vadd.f32 0.0, %v1563
    %v1565 = vpop.f32.mrb[0].mxu0
    %v1566 = vpop.f32.mrb[0].mxu0
    %v1567 = vadd.f32 0.0, %v1566
    %v1568 = vpop.f32.mrb[0].mxu0
    %1569 = vmatprep.mubr.bf16.mxu0 0
    %1570 = vmatmul.mubr.bf16.gmra.mrb[0].mxu0 %v1365
    %v1571 = vpop.f32.mrb[0].mxu0
    %v1572 = vadd.f32 0.0, %v1571
    %v1573 = vpop.f32.mrb[0].mxu0
    %v1574 = vpop.f32.mrb[0].mxu0
    %v1575 = vadd.f32 0.0, %v1574
    %v1576 = vpop.f32.mrb[0].mxu0
    %1577 = vmatprep.mubr.bf16.mxu0 0
    %1578 = vmatmul.mubr.bf16.gmra.mrb[0].mxu0 %v1368
    %v1579 = vpop.f32.mrb[0].mxu0
    %v1580 = vadd.f32 0.0, %v1579
    %v1581 = vpop.f32.mrb[0].mxu0
    %v1582 = vpop.f32.mrb[0].mxu0
    %v1583 = vadd.f32 0.0, %v1582
    %v1584 = vpop.f32.mrb[0].mxu0
    %1585 = vmatprep.mubr.bf16.mxu0 0
    %1586 = vmatmul.mubr.bf16.gmra.mrb[0].mxu0 %v1371
    %v1587 = vpop.f32.mrb[0].mxu0
    %v1588 = vadd.f32 0.0, %v1587
    %v1589 = vpop.f32.mrb[0].mxu0
    %v1590 = vpop.f32.mrb[0].mxu0
    %v1591 = vadd.f32 0.0, %v1590
    %v1592 = vpop.f32.mrb[0].mxu0
    %1593 = vmatprep.mubr.bf16.mxu0 0
    %1594 = vmatmul.mubr.bf16.gmra.mrb[0].mxu0 %v1374
    %v1595 = vpop.f32.mrb[0].mxu0
    %v1596 = vadd.f32 0.0, %v1595
    %v1597 = vpop.f32.mrb[0].mxu0
    %v1598 = vpop.f32.mrb[0].mxu0
    %v1599 = vadd.f32 0.0, %v1598
    %v1600 = vpop.f32.mrb[0].mxu0
    %1601 = vmatprep.mubr.bf16.mxu0 0
    %1602 = vmatmul.mubr.bf16.gmra.mrb[0].mxu0 %v1377
    %v1603 = vpop.f32.mrb[0].mxu0
    %v1604 = vadd.f32 0.0, %v1603
    %v1605 = vpop.f32.mrb[0].mxu0
    %v1606 = vpop.f32.mrb[0].mxu0
    %v1607 = vadd.f32 0.0, %v1606
    %v1608 = vpop.f32.mrb[0].mxu0
    %1609 = vmatprep.mubr.bf16.mxu0 0
    %1610 = vmatmul.mubr.bf16.gmra.mrb[0].mxu0 %v1380
    %v1611 = vpop.f32.mrb[0].mxu0
    %v1612 = vadd.f32 0.0, %v1611
    %v1613 = vpop.f32.mrb[0].mxu0
    %v1614 = vpop.f32.mrb[0].mxu0
    %v1615 = vadd.f32 0.0, %v1614
    %v1616 = vpop.f32.mrb[0].mxu0
    %1617 = vmatprep.mubr.bf16.mxu0 0
    %1618 = vmatmul.mubr.bf16.gmra.mrb[0].mxu0 %v1383
    %v1619 = vpop.f32.mrb[0].mxu0
    %v1620 = vadd.f32 0.0, %v1619
    %v1621 = vpop.f32.mrb[0].mxu0
    %v1622 = vpop.f32.mrb[0].mxu0
    %v1623 = vadd.f32 0.0, %v1622
    %v1624 = vpop.f32.mrb[0].mxu0
    %1625 = vdwg.mxu0
    %v1626 = vmax.f32 %v1073, %v1420
    %v1627 = vmax.f32 %v1074, %v1423
    %v1628 = vmax.f32 %v1075, %v1428
    %v1629 = vmax.f32 %v1076, %v1431
    %v1630 = vmax.f32 %v1077, %v1436
    %v1631 = vmax.f32 %v1078, %v1439
    %v1632 = vmax.f32 %v1079, %v1444
    %v1633 = vmax.f32 %v1080, %v1447
    %v1634 = vmax.f32 %v1081, %v1452
    %v1635 = vmax.f32 %v1082, %v1455
    %v1636 = vmax.f32 %v1083, %v1460
    %v1637 = vmax.f32 %v1084, %v1463
    %v1638 = vmax.f32 %v1085, %v1468
    %v1639 = vmax.f32 %v1086, %v1471
    %v1640 = vmax.f32 %v1087, %v1476
    %v1641 = vmax.f32 %v1088, %v1479
    %v1642 = vmax.f32 %v1089, %v1484
    %v1643 = vmax.f32 %v1090, %v1487
    %v1644 = vmax.f32 %v1091, %v1492
    %v1645 = vmax.f32 %v1092, %v1495
    %v1646 = vmax.f32 %v1093, %v1500
    %v1647 = vmax.f32 %v1094, %v1503
    %v1648 = vmax.f32 %v1095, %v1508
    %v1649 = vmax.f32 %v1096, %v1511
    %v1650 = vmax.f32 %v1097, %v1516
    %v1651 = vmax.f32 %v1098, %v1519
    %v1652 = vmax.f32 %v1099, %v1524
    %v1653 = vmax.f32 %v1100, %v1527
    %v1654 = vmax.f32 %v1101, %v1532
    %v1655 = vmax.f32 %v1102, %v1535
    %v1656 = vmax.f32 %v1103, %v1540
    %v1657 = vmax.f32 %v1104, %v1543
    %v1658 = vmax.f32 %v1105, %v1548
    %v1659 = vmax.f32 %v1106, %v1551
    %v1660 = vmax.f32 %v1107, %v1556
    %v1661 = vmax.f32 %v1108, %v1559
    %v1662 = vmax.f32 %v1109, %v1564
    %v1663 = vmax.f32 %v1110, %v1567
    %v1664 = vmax.f32 %v1111, %v1572
    %v1665 = vmax.f32 %v1112, %v1575
    %v1666 = vmax.f32 %v1113, %v1580
    %v1667 = vmax.f32 %v1114, %v1583
    %v1668 = vmax.f32 %v1115, %v1588
    %v1669 = vmax.f32 %v1116, %v1591
    %v1670 = vmax.f32 %v1117, %v1596
    %v1671 = vmax.f32 %v1118, %v1599
    %v1672 = vmax.f32 %v1119, %v1604
    %v1673 = vmax.f32 %v1120, %v1607
    %v1674 = vmax.f32 %v1121, %v1612
    %v1675 = vmax.f32 %v1122, %v1615
    %v1676 = vmax.f32 %v1123, %v1620
    %v1677 = vmax.f32 %v1124, %v1623
    %v1678 = vld [vmem:[%s3] sm:$0xf]
    %v1679 = vld [vmem:[%s3 + $0x4] sm:$0xf]
    %v1680 = vld [vmem:[%s3 + $0x8] sm:$0xf]
    %v1681 = vld [vmem:[%s3 + $0xc] sm:$0xf]
    %v1682 = vld [vmem:[%s3 + $0x10] sm:$0xf]
    %v1683 = vld [vmem:[%s3 + $0x14] sm:$0xf]
    %v1684 = vld [vmem:[%s3 + $0x18] sm:$0xf]
    %v1685 = vld [vmem:[%s3 + $0x1c] sm:$0xf]
    %v1686 = vld [vmem:[%s3 + $0x20] sm:$0xf]
    %v1687 = vld [vmem:[%s3 + $0x24] sm:$0xf]
    %v1688 = vld [vmem:[%s3 + $0x28] sm:$0xf]
    %v1689 = vld [vmem:[%s3 + $0x2c] sm:$0xf]
    %v1690 = vld [vmem:[%s3 + $0x30] sm:$0xf]
    %v1691 = vld [vmem:[%s3 + $0x34] sm:$0xf]
    %v1692 = vld [vmem:[%s3 + $0x38] sm:$0xf]
    %v1693 = vld [vmem:[%s3 + $0x3c] sm:$0xf]
    %v1694 = vld [vmem:[%s3 + $0x40] sm:$0xf]
    %v1695 = vld [vmem:[%s3 + $0x44] sm:$0xf]
    %v1696 = vld [vmem:[%s3 + $0x48] sm:$0xf]
    %v1697 = vld [vmem:[%s3 + $0x4c] sm:$0xf]
    %v1698 = vld [vmem:[%s3 + $0x50] sm:$0xf]
    %v1699 = vld [vmem:[%s3 + $0x54] sm:$0xf]
    %v1700 = vld [vmem:[%s3 + $0x58] sm:$0xf]
    %v1701 = vld [vmem:[%s3 + $0x5c] sm:$0xf]
    %v1702 = vld [vmem:[%s3 + $0x60] sm:$0xf]
    %v1703 = vld [vmem:[%s3 + $0x64] sm:$0xf]
    %v1704 = vld [vmem:[%s3 + $0x68] sm:$0xf]
    %v1705 = vld [vmem:[%s3 + $0x6c] sm:$0xf]
    %v1706 = vld [vmem:[%s3 + $0x70] sm:$0xf]
    %v1707 = vld [vmem:[%s3 + $0x74] sm:$0xf]
    %v1708 = vld [vmem:[%s3 + $0x78] sm:$0xf]
    %v1709 = vld [vmem:[%s3 + $0x7c] sm:$0xf]
    %v1710 = vld [vmem:[%s3 + $0x80] sm:$0xf]
    %v1711 = vld [vmem:[%s3 + $0x84] sm:$0xf]
    %v1712 = vld [vmem:[%s3 + $0x88] sm:$0xf]
    %v1713 = vld [vmem:[%s3 + $0x8c] sm:$0xf]
    %v1714 = vld [vmem:[%s3 + $0x90] sm:$0xf]
    %v1715 = vld [vmem:[%s3 + $0x94] sm:$0xf]
    %v1716 = vld [vmem:[%s3 + $0x98] sm:$0xf]
    %v1717 = vld [vmem:[%s3 + $0x9c] sm:$0xf]
    %v1718 = vld [vmem:[%s3 + $0xa0] sm:$0xf]
    %v1719 = vld [vmem:[%s3 + $0xa4] sm:$0xf]
    %v1720 = vld [vmem:[%s3 + $0xa8] sm:$0xf]
    %v1721 = vld [vmem:[%s3 + $0xac] sm:$0xf]
    %v1722 = vld [vmem:[%s3 + $0xb0] sm:$0xf]
    %v1723 = vld [vmem:[%s3 + $0xb4] sm:$0xf]
    %v1724 = vld [vmem:[%s3 + $0xb8] sm:$0xf]
    %v1725 = vld [vmem:[%s3 + $0xbc] sm:$0xf]
    %v1726 = vld [vmem:[%s3 + $0xc0] sm:$0xf]
    %v1727 = vld [vmem:[%s3 + $0xc4] sm:$0xf]
    %v1728 = vld [vmem:[%s3 + $0xc8] sm:$0xf]
    %v1729 = vld [vmem:[%s3 + $0xcc] sm:$0xf]
    %v1782 = vunpack.c.l.b16 %v1678
    %v1783 = vunpack.c.l.b16 %v1679
    %v1784 = vunpack.c.l.b16 %v1680
    %v1785 = vunpack.c.l.b16 %v1681
    %v1786 = vunpack.c.l.b16 %v1682
    %v1787 = vunpack.c.l.b16 %v1683
    %v1788 = vunpack.c.l.b16 %v1684
    %v1789 = vunpack.c.l.b16 %v1685
    %v1790 = vunpack.c.l.b16 %v1686
    %v1791 = vunpack.c.l.b16 %v1687
    %v1792 = vunpack.c.l.b16 %v1688
    %v1793 = vunpack.c.l.b16 %v1689
    %v1794 = vunpack.c.l.b16 %v1690
    %v1795 = vunpack.c.l.b16 %v1691
    %v1796 = vunpack.c.l.b16 %v1692
    %v1797 = vunpack.c.l.b16 %v1693
    %v1798 = vunpack.c.l.b16 %v1694
    %v1799 = vunpack.c.l.b16 %v1695
    %v1800 = vunpack.c.l.b16 %v1696
    %v1801 = vunpack.c.l.b16 %v1697
    %v1802 = vunpack.c.l.b16 %v1698
    %v1803 = vunpack.c.l.b16 %v1699
    %v1804 = vunpack.c.l.b16 %v1700
    %v1805 = vunpack.c.l.b16 %v1701
    %v1806 = vunpack.c.l.b16 %v1702
    %v1807 = vunpack.c.l.b16 %v1703
    %v1808 = vunpack.c.l.b16 %v1704
    %v1809 = vunpack.c.l.b16 %v1705
    %v1810 = vunpack.c.l.b16 %v1706
    %v1811 = vunpack.c.l.b16 %v1707
    %v1812 = vunpack.c.l.b16 %v1708
    %v1813 = vunpack.c.l.b16 %v1709
    %v1814 = vunpack.c.l.b16 %v1710
    %v1815 = vunpack.c.l.b16 %v1711
    %v1816 = vunpack.c.l.b16 %v1712
    %v1817 = vunpack.c.l.b16 %v1713
    %v1818 = vunpack.c.l.b16 %v1714
    %v1819 = vunpack.c.l.b16 %v1715
    %v1820 = vunpack.c.l.b16 %v1716
    %v1821 = vunpack.c.l.b16 %v1717
    %v1822 = vunpack.c.l.b16 %v1718
    %v1823 = vunpack.c.l.b16 %v1719
    %v1824 = vunpack.c.l.b16 %v1720
    %v1825 = vunpack.c.l.b16 %v1721
    %v1826 = vunpack.c.l.b16 %v1722
    %v1827 = vunpack.c.l.b16 %v1723
    %v1828 = vunpack.c.l.b16 %v1724
    %v1829 = vunpack.c.l.b16 %v1725
    %v1830 = vunpack.c.l.b16 %v1726
    %v1831 = vunpack.c.l.b16 %v1727
    %v1832 = vunpack.c.l.b16 %v1728
    %v1833 = vunpack.c.l.b16 %v1729
    %v1834 = vpack.c.b16 %v1783, %v1782
    %v1835 = vpack.c.b16 %v1785, %v1784
    %v1836 = vpack.c.b16 %v1787, %v1786
    %v1837 = vpack.c.b16 %v1789, %v1788
    %v1838 = vpack.c.b16 %v1791, %v1790
    %v1839 = vpack.c.b16 %v1793, %v1792
    %v1840 = vpack.c.b16 %v1795, %v1794
    %v1841 = vpack.c.b16 %v1797, %v1796
    %v1842 = vpack.c.b16 %v1799, %v1798
    %v1843 = vpack.c.b16 %v1801, %v1800
    %v1844 = vpack.c.b16 %v1803, %v1802
    %v1845 = vpack.c.b16 %v1805, %v1804
    %v1846 = vpack.c.b16 %v1807, %v1806
    %v1847 = vpack.c.b16 %v1809, %v1808
    %v1848 = vpack.c.b16 %v1811, %v1810
    %v1849 = vpack.c.b16 %v1813, %v1812
    %v1850 = vpack.c.b16 %v1815, %v1814
    %v1851 = vpack.c.b16 %v1817, %v1816
    %v1852 = vpack.c.b16 %v1819, %v1818
    %v1853 = vpack.c.b16 %v1821, %v1820
    %v1854 = vpack.c.b16 %v1823, %v1822
    %v1855 = vpack.c.b16 %v1825, %v1824
    %v1856 = vpack.c.b16 %v1827, %v1826
    %v1857 = vpack.c.b16 %v1829, %v1828
    %v1858 = vpack.c.b16 %v1831, %v1830
    %v1859 = vpack.c.b16 %v1833, %v1832
    %v1861 = vsel %vm245, %v1834, 0
    %v1864 = vsel %vm245, %v1835, 0
    %v1867 = vsel %vm245, %v1836, 0
    %v1870 = vsel %vm245, %v1837, 0
    %v1873 = vsel %vm245, %v1838, 0
    %v1876 = vsel %vm245, %v1839, 0
    %v1879 = vsel %vm245, %v1840, 0
    %v1882 = vsel %vm245, %v1841, 0
    %v1885 = vsel %vm245, %v1842, 0
    %v1888 = vsel %vm245, %v1843, 0
    %v1891 = vsel %vm245, %v1844, 0
    %v1894 = vsel %vm245, %v1845, 0
    %v1897 = vsel %vm245, %v1846, 0
    %v1900 = vsel %vm245, %v1847, 0
    %v1903 = vsel %vm245, %v1848, 0
    %v1906 = vsel %vm245, %v1849, 0
    %v1909 = vsel %vm245, %v1850, 0
    %v1912 = vsel %vm245, %v1851, 0
    %v1915 = vsel %vm245, %v1852, 0
    %v1918 = vsel %vm245, %v1853, 0
    %v1921 = vsel %vm245, %v1854, 0
    %v1924 = vsel %vm245, %v1855, 0
    %v1927 = vsel %vm245, %v1856, 0
    %v1930 = vsel %vm245, %v1857, 0
    %v1933 = vsel %vm245, %v1858, 0
    %v1936 = vsel %vm245, %v1859, 0
    %1938 = vmatprep.subr.bf16.mxu0 0
    %1939 = vmatpush1.bf16.msra.mxu0 %v236
    %1940 = vmatprep.subr.bf16.mxu0 0
    %1941 = vmatpush1.bf16.msra.mxu0 %v237
    %1942 = vmatprep.subr.bf16.mxu0 0
    %1943 = vmatpush1.bf16.msra.mxu0 %v238
    %1944 = vmatprep.subr.bf16.mxu0 0
    %1945 = vmatpush1.bf16.msra.mxu0 %v239
    %1946 = vmatprep.subr.bf16.mxu0 0
    %1947 = vmatpush1.bf16.msra.mxu0 %v329
    %1948 = vmatprep.subr.bf16.mxu0 0
    %1949 = vmatpush1.bf16.msra.mxu0 0
    %1950 = vmatprep.subr.bf16.mxu0 0
    %1951 = vmatpush1.bf16.msra.mxu0 0
    %1952 = vmatprep.subr.bf16.mxu0 0
    %1953 = vmatpush1.bf16.msra.mxu0 0
    %1954 = vmatprep.subr.bf16.mxu0 0
    %1955 = vmatpush1.bf16.msra.mxu0 0
    %1956 = vmatprep.subr.bf16.mxu0 0
    %1957 = vmatpush1.bf16.msra.mxu0 0
    %1958 = vmatprep.subr.bf16.mxu0 0
    %1959 = vmatpush1.bf16.msra.mxu0 0
    %1960 = vmatprep.subr.bf16.mxu0 0
    %1961 = vmatpush1.bf16.msra.mxu0 0
    %1962 = vmatprep.subr.bf16.mxu0 0
    %1963 = vmatpush1.bf16.msra.mxu0 0
    %1964 = vmatprep.subr.bf16.mxu0 0
    %1965 = vmatpush1.bf16.msra.mxu0 0
    %1966 = vmatprep.subr.bf16.mxu0 0
    %1967 = vmatpush1.bf16.msra.mxu0 0
    %1968 = vmatprep.subr.bf16.mxu0 0
    %1969 = vmatpush1.bf16.msra.mxu0 0
    %1970 = vmatprep.mubr.bf16.mxu0 0
    %1971 = vmatmul.mubr.bf16.gmra.mrb[0].mxu0 %v1861
    %v1972 = vpop.f32.mrb[0].mxu0
    %v1973 = vadd.f32 0.0, %v1972
    %v1974 = vpop.f32.mrb[0].mxu0
    %v1975 = vpop.f32.mrb[0].mxu0
    %v1976 = vadd.f32 0.0, %v1975
    %v1977 = vpop.f32.mrb[0].mxu0
    %1978 = vmatprep.mubr.bf16.mxu0 0
    %1979 = vmatmul.mubr.bf16.gmra.mrb[0].mxu0 %v1864
    %v1980 = vpop.f32.mrb[0].mxu0
    %v1981 = vadd.f32 0.0, %v1980
    %v1982 = vpop.f32.mrb[0].mxu0
    %v1983 = vpop.f32.mrb[0].mxu0
    %v1984 = vadd.f32 0.0, %v1983
    %v1985 = vpop.f32.mrb[0].mxu0
    %1986 = vmatprep.mubr.bf16.mxu0 0
    %1987 = vmatmul.mubr.bf16.gmra.mrb[0].mxu0 %v1867
    %v1988 = vpop.f32.mrb[0].mxu0
    %v1989 = vadd.f32 0.0, %v1988
    %v1990 = vpop.f32.mrb[0].mxu0
    %v1991 = vpop.f32.mrb[0].mxu0
    %v1992 = vadd.f32 0.0, %v1991
    %v1993 = vpop.f32.mrb[0].mxu0
    %1994 = vmatprep.mubr.bf16.mxu0 0
    %1995 = vmatmul.mubr.bf16.gmra.mrb[0].mxu0 %v1870
    %v1996 = vpop.f32.mrb[0].mxu0
    %v1997 = vadd.f32 0.0, %v1996
    %v1998 = vpop.f32.mrb[0].mxu0
    %v1999 = vpop.f32.mrb[0].mxu0
    %v2000 = vadd.f32 0.0, %v1999
    %v2001 = vpop.f32.mrb[0].mxu0
    %2002 = vmatprep.mubr.bf16.mxu0 0
    %2003 = vmatmul.mubr.bf16.gmra.mrb[0].mxu0 %v1873
    %v2004 = vpop.f32.mrb[0].mxu0
    %v2005 = vadd.f32 0.0, %v2004
    %v2006 = vpop.f32.mrb[0].mxu0
    %v2007 = vpop.f32.mrb[0].mxu0
    %v2008 = vadd.f32 0.0, %v2007
    %v2009 = vpop.f32.mrb[0].mxu0
    %2010 = vmatprep.mubr.bf16.mxu0 0
    %2011 = vmatmul.mubr.bf16.gmra.mrb[0].mxu0 %v1876
    %v2012 = vpop.f32.mrb[0].mxu0
    %v2013 = vadd.f32 0.0, %v2012
    %v2014 = vpop.f32.mrb[0].mxu0
    %v2015 = vpop.f32.mrb[0].mxu0
    %v2016 = vadd.f32 0.0, %v2015
    %v2017 = vpop.f32.mrb[0].mxu0
    %2018 = vmatprep.mubr.bf16.mxu0 0
    %2019 = vmatmul.mubr.bf16.gmra.mrb[0].mxu0 %v1879
    %v2020 = vpop.f32.mrb[0].mxu0
    %v2021 = vadd.f32 0.0, %v2020
    %v2022 = vpop.f32.mrb[0].mxu0
    %v2023 = vpop.f32.mrb[0].mxu0
    %v2024 = vadd.f32 0.0, %v2023
    %v2025 = vpop.f32.mrb[0].mxu0
    %2026 = vmatprep.mubr.bf16.mxu0 0
    %2027 = vmatmul.mubr.bf16.gmra.mrb[0].mxu0 %v1882
    %v2028 = vpop.f32.mrb[0].mxu0
    %v2029 = vadd.f32 0.0, %v2028
    %v2030 = vpop.f32.mrb[0].mxu0
    %v2031 = vpop.f32.mrb[0].mxu0
    %v2032 = vadd.f32 0.0, %v2031
    %v2033 = vpop.f32.mrb[0].mxu0
    %2034 = vmatprep.mubr.bf16.mxu0 0
    %2035 = vmatmul.mubr.bf16.gmra.mrb[0].mxu0 %v1885
    %v2036 = vpop.f32.mrb[0].mxu0
    %v2037 = vadd.f32 0.0, %v2036
    %v2038 = vpop.f32.mrb[0].mxu0
    %v2039 = vpop.f32.mrb[0].mxu0
    %v2040 = vadd.f32 0.0, %v2039
    %v2041 = vpop.f32.mrb[0].mxu0
    %2042 = vmatprep.mubr.bf16.mxu0 0
    %2043 = vmatmul.mubr.bf16.gmra.mrb[0].mxu0 %v1888
    %v2044 = vpop.f32.mrb[0].mxu0
    %v2045 = vadd.f32 0.0, %v2044
    %v2046 = vpop.f32.mrb[0].mxu0
    %v2047 = vpop.f32.mrb[0].mxu0
    %v2048 = vadd.f32 0.0, %v2047
    %v2049 = vpop.f32.mrb[0].mxu0
    %2050 = vmatprep.mubr.bf16.mxu0 0
    %2051 = vmatmul.mubr.bf16.gmra.mrb[0].mxu0 %v1891
    %v2052 = vpop.f32.mrb[0].mxu0
    %v2053 = vadd.f32 0.0, %v2052
    %v2054 = vpop.f32.mrb[0].mxu0
    %v2055 = vpop.f32.mrb[0].mxu0
    %v2056 = vadd.f32 0.0, %v2055
    %v2057 = vpop.f32.mrb[0].mxu0
    %2058 = vmatprep.mubr.bf16.mxu0 0
    %2059 = vmatmul.mubr.bf16.gmra.mrb[0].mxu0 %v1894
    %v2060 = vpop.f32.mrb[0].mxu0
    %v2061 = vadd.f32 0.0, %v2060
    %v2062 = vpop.f32.mrb[0].mxu0
    %v2063 = vpop.f32.mrb[0].mxu0
    %v2064 = vadd.f32 0.0, %v2063
    %v2065 = vpop.f32.mrb[0].mxu0
    %2066 = vmatprep.mubr.bf16.mxu0 0
    %2067 = vmatmul.mubr.bf16.gmra.mrb[0].mxu0 %v1897
    %v2068 = vpop.f32.mrb[0].mxu0
    %v2069 = vadd.f32 0.0, %v2068
    %v2070 = vpop.f32.mrb[0].mxu0
    %v2071 = vpop.f32.mrb[0].mxu0
    %v2072 = vadd.f32 0.0, %v2071
    %v2073 = vpop.f32.mrb[0].mxu0
    %2074 = vmatprep.mubr.bf16.mxu0 0
    %2075 = vmatmul.mubr.bf16.gmra.mrb[0].mxu0 %v1900
    %v2076 = vpop.f32.mrb[0].mxu0
    %v2077 = vadd.f32 0.0, %v2076
    %v2078 = vpop.f32.mrb[0].mxu0
    %v2079 = vpop.f32.mrb[0].mxu0
    %v2080 = vadd.f32 0.0, %v2079
    %v2081 = vpop.f32.mrb[0].mxu0
    %2082 = vmatprep.mubr.bf16.mxu0 0
    %2083 = vmatmul.mubr.bf16.gmra.mrb[0].mxu0 %v1903
    %v2084 = vpop.f32.mrb[0].mxu0
    %v2085 = vadd.f32 0.0, %v2084
    %v2086 = vpop.f32.mrb[0].mxu0
    %v2087 = vpop.f32.mrb[0].mxu0
    %v2088 = vadd.f32 0.0, %v2087
    %v2089 = vpop.f32.mrb[0].mxu0
    %2090 = vmatprep.mubr.bf16.mxu0 0
    %2091 = vmatmul.mubr.bf16.gmra.mrb[0].mxu0 %v1906
    %v2092 = vpop.f32.mrb[0].mxu0
    %v2093 = vadd.f32 0.0, %v2092
    %v2094 = vpop.f32.mrb[0].mxu0
    %v2095 = vpop.f32.mrb[0].mxu0
    %v2096 = vadd.f32 0.0, %v2095
    %v2097 = vpop.f32.mrb[0].mxu0
    %2098 = vmatprep.mubr.bf16.mxu0 0
    %2099 = vmatmul.mubr.bf16.gmra.mrb[0].mxu0 %v1909
    %v2100 = vpop.f32.mrb[0].mxu0
    %v2101 = vadd.f32 0.0, %v2100
    %v2102 = vpop.f32.mrb[0].mxu0
    %v2103 = vpop.f32.mrb[0].mxu0
    %v2104 = vadd.f32 0.0, %v2103
    %v2105 = vpop.f32.mrb[0].mxu0
    %2106 = vmatprep.mubr.bf16.mxu0 0
    %2107 = vmatmul.mubr.bf16.gmra.mrb[0].mxu0 %v1912
    %v2108 = vpop.f32.mrb[0].mxu0
    %v2109 = vadd.f32 0.0, %v2108
    %v2110 = vpop.f32.mrb[0].mxu0
    %v2111 = vpop.f32.mrb[0].mxu0
    %v2112 = vadd.f32 0.0, %v2111
    %v2113 = vpop.f32.mrb[0].mxu0
    %2114 = vmatprep.mubr.bf16.mxu0 0
    %2115 = vmatmul.mubr.bf16.gmra.mrb[0].mxu0 %v1915
    %v2116 = vpop.f32.mrb[0].mxu0
    %v2117 = vadd.f32 0.0, %v2116
    %v2118 = vpop.f32.mrb[0].mxu0
    %v2119 = vpop.f32.mrb[0].mxu0
    %v2120 = vadd.f32 0.0, %v2119
    %v2121 = vpop.f32.mrb[0].mxu0
    %2122 = vmatprep.mubr.bf16.mxu0 0
    %2123 = vmatmul.mubr.bf16.gmra.mrb[0].mxu0 %v1918
    %v2124 = vpop.f32.mrb[0].mxu0
    %v2125 = vadd.f32 0.0, %v2124
    %v2126 = vpop.f32.mrb[0].mxu0
    %v2127 = vpop.f32.mrb[0].mxu0
    %v2128 = vadd.f32 0.0, %v2127
    %v2129 = vpop.f32.mrb[0].mxu0
    %2130 = vmatprep.mubr.bf16.mxu0 0
    %2131 = vmatmul.mubr.bf16.gmra.mrb[0].mxu0 %v1921
    %v2132 = vpop.f32.mrb[0].mxu0
    %v2133 = vadd.f32 0.0, %v2132
    %v2134 = vpop.f32.mrb[0].mxu0
    %v2135 = vpop.f32.mrb[0].mxu0
    %v2136 = vadd.f32 0.0, %v2135
    %v2137 = vpop.f32.mrb[0].mxu0
    %2138 = vmatprep.mubr.bf16.mxu0 0
    %2139 = vmatmul.mubr.bf16.gmra.mrb[0].mxu0 %v1924
    %v2140 = vpop.f32.mrb[0].mxu0
    %v2141 = vadd.f32 0.0, %v2140
    %v2142 = vpop.f32.mrb[0].mxu0
    %v2143 = vpop.f32.mrb[0].mxu0
    %v2144 = vadd.f32 0.0, %v2143
    %v2145 = vpop.f32.mrb[0].mxu0
    %2146 = vmatprep.mubr.bf16.mxu0 0
    %2147 = vmatmul.mubr.bf16.gmra.mrb[0].mxu0 %v1927
    %v2148 = vpop.f32.mrb[0].mxu0
    %v2149 = vadd.f32 0.0, %v2148
    %v2150 = vpop.f32.mrb[0].mxu0
    %v2151 = vpop.f32.mrb[0].mxu0
    %v2152 = vadd.f32 0.0, %v2151
    %v2153 = vpop.f32.mrb[0].mxu0
    %2154 = vmatprep.mubr.bf16.mxu0 0
    %2155 = vmatmul.mubr.bf16.gmra.mrb[0].mxu0 %v1930
    %v2156 = vpop.f32.mrb[0].mxu0
    %v2157 = vadd.f32 0.0, %v2156
    %v2158 = vpop.f32.mrb[0].mxu0
    %v2159 = vpop.f32.mrb[0].mxu0
    %v2160 = vadd.f32 0.0, %v2159
    %v2161 = vpop.f32.mrb[0].mxu0
    %2162 = vmatprep.mubr.bf16.mxu0 0
    %2163 = vmatmul.mubr.bf16.gmra.mrb[0].mxu0 %v1933
    %v2164 = vpop.f32.mrb[0].mxu0
    %v2165 = vadd.f32 0.0, %v2164
    %v2166 = vpop.f32.mrb[0].mxu0
    %v2167 = vpop.f32.mrb[0].mxu0
    %v2168 = vadd.f32 0.0, %v2167
    %v2169 = vpop.f32.mrb[0].mxu0
    %2170 = vmatprep.mubr.bf16.mxu0 0
    %2171 = vmatmul.mubr.bf16.gmra.mrb[0].mxu0 %v1936
    %v2172 = vpop.f32.mrb[0].mxu0
    %v2173 = vadd.f32 0.0, %v2172
    %v2174 = vpop.f32.mrb[0].mxu0
    %v2175 = vpop.f32.mrb[0].mxu0
    %v2176 = vadd.f32 0.0, %v2175
    %v2177 = vpop.f32.mrb[0].mxu0
    %2178 = vdwg.mxu0
    %v2179 = vmax.f32 %v1626, %v1973
    %v2180 = vmax.f32 %v1627, %v1976
    %v2181 = vmax.f32 %v1628, %v1981
    %v2182 = vmax.f32 %v1629, %v1984
    %v2183 = vmax.f32 %v1630, %v1989
    %v2184 = vmax.f32 %v1631, %v1992
    %v2185 = vmax.f32 %v1632, %v1997
    %v2186 = vmax.f32 %v1633, %v2000
    %v2187 = vmax.f32 %v1634, %v2005
    %v2188 = vmax.f32 %v1635, %v2008
    %v2189 = vmax.f32 %v1636, %v2013
    %v2190 = vmax.f32 %v1637, %v2016
    %v2191 = vmax.f32 %v1638, %v2021
    %v2192 = vmax.f32 %v1639, %v2024
    %v2193 = vmax.f32 %v1640, %v2029
    %v2194 = vmax.f32 %v1641, %v2032
    %v2195 = vmax.f32 %v1642, %v2037
    %v2196 = vmax.f32 %v1643, %v2040
    %v2197 = vmax.f32 %v1644, %v2045
    %v2198 = vmax.f32 %v1645, %v2048
    %v2199 = vmax.f32 %v1646, %v2053
    %v2200 = vmax.f32 %v1647, %v2056
    %v2201 = vmax.f32 %v1648, %v2061
    %v2202 = vmax.f32 %v1649, %v2064
    %v2203 = vmax.f32 %v1650, %v2069
    %v2204 = vmax.f32 %v1651, %v2072
    %v2205 = vmax.f32 %v1652, %v2077
    %v2206 = vmax.f32 %v1653, %v2080
    %v2207 = vmax.f32 %v1654, %v2085
    %v2208 = vmax.f32 %v1655, %v2088
    %v2209 = vmax.f32 %v1656, %v2093
    %v2210 = vmax.f32 %v1657, %v2096
    %v2211 = vmax.f32 %v1658, %v2101
    %v2212 = vmax.f32 %v1659, %v2104
    %v2213 = vmax.f32 %v1660, %v2109
    %v2214 = vmax.f32 %v1661, %v2112
    %v2215 = vmax.f32 %v1662, %v2117
    %v2216 = vmax.f32 %v1663, %v2120
    %v2217 = vmax.f32 %v1664, %v2125
    %v2218 = vmax.f32 %v1665, %v2128
    %v2219 = vmax.f32 %v1666, %v2133
    %v2220 = vmax.f32 %v1667, %v2136
    %v2221 = vmax.f32 %v1668, %v2141
    %v2222 = vmax.f32 %v1669, %v2144
    %v2223 = vmax.f32 %v1670, %v2149
    %v2224 = vmax.f32 %v1671, %v2152
    %v2225 = vmax.f32 %v1672, %v2157
    %v2226 = vmax.f32 %v1673, %v2160
    %v2227 = vmax.f32 %v1674, %v2165
    %v2228 = vmax.f32 %v1675, %v2168
    %v2229 = vmax.f32 %v1676, %v2173
    %v2230 = vmax.f32 %v1677, %v2176
    %v2231 = vld [vmem:[%s5] sm:$0x1]
    %v2233 = vlaneseq
    %v2234 = vshrl.u32 %v2233, 7
    %v2235 = vsub.s32 0, %v2234
    %v2236 = vrot.slane %v2231, %v2235
    %v2238 = vadd.f32 %v2179, %v2236
    %v2239 = vadd.f32 %v2180, %v2236
    %v2240 = vadd.f32 %v2181, %v2236
    %v2241 = vadd.f32 %v2182, %v2236
    %v2242 = vadd.f32 %v2183, %v2236
    %v2243 = vadd.f32 %v2184, %v2236
    %v2244 = vadd.f32 %v2185, %v2236
    %v2245 = vadd.f32 %v2186, %v2236
    %v2246 = vadd.f32 %v2187, %v2236
    %v2247 = vadd.f32 %v2188, %v2236
    %v2248 = vadd.f32 %v2189, %v2236
    %v2249 = vadd.f32 %v2190, %v2236
    %v2250 = vadd.f32 %v2191, %v2236
    %v2251 = vadd.f32 %v2192, %v2236
    %v2252 = vadd.f32 %v2193, %v2236
    %v2253 = vadd.f32 %v2194, %v2236
    %v2254 = vadd.f32 %v2195, %v2236
    %v2255 = vadd.f32 %v2196, %v2236
    %v2256 = vadd.f32 %v2197, %v2236
    %v2257 = vadd.f32 %v2198, %v2236
    %v2258 = vadd.f32 %v2199, %v2236
    %v2259 = vadd.f32 %v2200, %v2236
    %v2260 = vadd.f32 %v2201, %v2236
    %v2261 = vadd.f32 %v2202, %v2236
    %v2262 = vadd.f32 %v2203, %v2236
    %v2263 = vadd.f32 %v2204, %v2236
    %v2264 = vadd.f32 %v2205, %v2236
    %v2265 = vadd.f32 %v2206, %v2236
    %v2266 = vadd.f32 %v2207, %v2236
    %v2267 = vadd.f32 %v2208, %v2236
    %v2268 = vadd.f32 %v2209, %v2236
    %v2269 = vadd.f32 %v2210, %v2236
    %v2270 = vadd.f32 %v2211, %v2236
    %v2271 = vadd.f32 %v2212, %v2236
    %v2272 = vadd.f32 %v2213, %v2236
    %v2273 = vadd.f32 %v2214, %v2236
    %v2274 = vadd.f32 %v2215, %v2236
    %v2275 = vadd.f32 %v2216, %v2236
    %v2276 = vadd.f32 %v2217, %v2236
    %v2277 = vadd.f32 %v2218, %v2236
    %v2278 = vadd.f32 %v2219, %v2236
    %v2279 = vadd.f32 %v2220, %v2236
    %v2280 = vadd.f32 %v2221, %v2236
    %v2281 = vadd.f32 %v2222, %v2236
    %v2282 = vadd.f32 %v2223, %v2236
    %v2283 = vadd.f32 %v2224, %v2236
    %v2284 = vadd.f32 %v2225, %v2236
    %v2285 = vadd.f32 %v2226, %v2236
    %v2286 = vadd.f32 %v2227, %v2236
    %v2287 = vadd.f32 %v2228, %v2236
    %v2288 = vadd.f32 %v2229, %v2236
    %v2289 = vadd.f32 %v2230, %v2236
    %v2290 = vmax.f32 %v2238, 0.0
    %v2291 = vmax.f32 %v2239, 0.0
    %v2292 = vmax.f32 %v2240, 0.0
    %v2293 = vmax.f32 %v2241, 0.0
    %v2294 = vmax.f32 %v2242, 0.0
    %v2295 = vmax.f32 %v2243, 0.0
    %v2296 = vmax.f32 %v2244, 0.0
    %v2297 = vmax.f32 %v2245, 0.0
    %v2298 = vmax.f32 %v2246, 0.0
    %v2299 = vmax.f32 %v2247, 0.0
    %v2300 = vmax.f32 %v2248, 0.0
    %v2301 = vmax.f32 %v2249, 0.0
    %v2302 = vmax.f32 %v2250, 0.0
    %v2303 = vmax.f32 %v2251, 0.0
    %v2304 = vmax.f32 %v2252, 0.0
    %v2305 = vmax.f32 %v2253, 0.0
    %v2306 = vmax.f32 %v2254, 0.0
    %v2307 = vmax.f32 %v2255, 0.0
    %v2308 = vmax.f32 %v2256, 0.0
    %v2309 = vmax.f32 %v2257, 0.0
    %v2310 = vmax.f32 %v2258, 0.0
    %v2311 = vmax.f32 %v2259, 0.0
    %v2312 = vmax.f32 %v2260, 0.0
    %v2313 = vmax.f32 %v2261, 0.0
    %v2314 = vmax.f32 %v2262, 0.0
    %v2315 = vmax.f32 %v2263, 0.0
    %v2316 = vmax.f32 %v2264, 0.0
    %v2317 = vmax.f32 %v2265, 0.0
    %v2318 = vmax.f32 %v2266, 0.0
    %v2319 = vmax.f32 %v2267, 0.0
    %v2320 = vmax.f32 %v2268, 0.0
    %v2321 = vmax.f32 %v2269, 0.0
    %v2322 = vmax.f32 %v2270, 0.0
    %v2323 = vmax.f32 %v2271, 0.0
    %v2324 = vmax.f32 %v2272, 0.0
    %v2325 = vmax.f32 %v2273, 0.0
    %v2326 = vmax.f32 %v2274, 0.0
    %v2327 = vmax.f32 %v2275, 0.0
    %v2328 = vmax.f32 %v2276, 0.0
    %v2329 = vmax.f32 %v2277, 0.0
    %v2330 = vmax.f32 %v2278, 0.0
    %v2331 = vmax.f32 %v2279, 0.0
    %v2332 = vmax.f32 %v2280, 0.0
    %v2333 = vmax.f32 %v2281, 0.0
    %v2334 = vmax.f32 %v2282, 0.0
    %v2335 = vmax.f32 %v2283, 0.0
    %v2336 = vmax.f32 %v2284, 0.0
    %v2337 = vmax.f32 %v2285, 0.0
    %v2338 = vmax.f32 %v2286, 0.0
    %v2339 = vmax.f32 %v2287, 0.0
    %v2340 = vmax.f32 %v2288, 0.0
    %v2341 = vmax.f32 %v2289, 0.0
    %v2342 = vpack.c.bf16 %v2291, %v2290
    %v2343 = vpack.c.bf16 %v2293, %v2292
    %v2344 = vpack.c.bf16 %v2295, %v2294
    %v2345 = vpack.c.bf16 %v2297, %v2296
    %v2346 = vpack.c.bf16 %v2299, %v2298
    %v2347 = vpack.c.bf16 %v2301, %v2300
    %v2348 = vpack.c.bf16 %v2303, %v2302
    %v2349 = vpack.c.bf16 %v2305, %v2304
    %v2350 = vpack.c.bf16 %v2307, %v2306
    %v2351 = vpack.c.bf16 %v2309, %v2308
    %v2352 = vpack.c.bf16 %v2311, %v2310
    %v2353 = vpack.c.bf16 %v2313, %v2312
    %v2354 = vpack.c.bf16 %v2315, %v2314
    %v2355 = vpack.c.bf16 %v2317, %v2316
    %v2356 = vpack.c.bf16 %v2319, %v2318
    %v2357 = vpack.c.bf16 %v2321, %v2320
    %v2358 = vpack.c.bf16 %v2323, %v2322
    %v2359 = vpack.c.bf16 %v2325, %v2324
    %v2360 = vpack.c.bf16 %v2327, %v2326
    %v2361 = vpack.c.bf16 %v2329, %v2328
    %v2362 = vpack.c.bf16 %v2331, %v2330
    %v2363 = vpack.c.bf16 %v2333, %v2332
    %v2364 = vpack.c.bf16 %v2335, %v2334
    %v2365 = vpack.c.bf16 %v2337, %v2336
    %v2366 = vpack.c.bf16 %v2339, %v2338
    %v2367 = vpack.c.bf16 %v2341, %v2340
    %v2394 = vunpack.c.l.b16 %v2342
    %v2395 = vunpack.c.h.b16 %v2342
    %v2396 = vunpack.c.l.b16 %v2343
    %v2397 = vunpack.c.h.b16 %v2343
    %v2398 = vunpack.c.l.b16 %v2344
    %v2399 = vunpack.c.h.b16 %v2344
    %v2400 = vunpack.c.l.b16 %v2345
    %v2401 = vunpack.c.h.b16 %v2345
    %v2402 = vunpack.c.l.b16 %v2346
    %v2403 = vunpack.c.h.b16 %v2346
    %v2404 = vunpack.c.l.b16 %v2347
    %v2405 = vunpack.c.h.b16 %v2347
    %v2406 = vunpack.c.l.b16 %v2348
    %v2407 = vunpack.c.h.b16 %v2348
    %v2408 = vunpack.c.l.b16 %v2349
    %v2409 = vunpack.c.h.b16 %v2349
    %v2410 = vunpack.c.l.b16 %v2350
    %v2411 = vunpack.c.h.b16 %v2350
    %v2412 = vunpack.c.l.b16 %v2351
    %v2413 = vunpack.c.h.b16 %v2351
    %v2414 = vunpack.c.l.b16 %v2352
    %v2415 = vunpack.c.h.b16 %v2352
    %v2416 = vunpack.c.l.b16 %v2353
    %v2417 = vunpack.c.h.b16 %v2353
    %v2418 = vunpack.c.l.b16 %v2354
    %v2419 = vunpack.c.h.b16 %v2354
    %v2420 = vunpack.c.l.b16 %v2355
    %v2421 = vunpack.c.h.b16 %v2355
    %v2422 = vunpack.c.l.b16 %v2356
    %v2423 = vunpack.c.h.b16 %v2356
    %v2424 = vunpack.c.l.b16 %v2357
    %v2425 = vunpack.c.h.b16 %v2357
    %v2426 = vunpack.c.l.b16 %v2358
    %v2427 = vunpack.c.h.b16 %v2358
    %v2428 = vunpack.c.l.b16 %v2359
    %v2429 = vunpack.c.h.b16 %v2359
    %v2430 = vunpack.c.l.b16 %v2360
    %v2431 = vunpack.c.h.b16 %v2360
    %v2432 = vunpack.c.l.b16 %v2361
    %v2433 = vunpack.c.h.b16 %v2361
    %v2434 = vunpack.c.l.b16 %v2362
    %v2435 = vunpack.c.h.b16 %v2362
    %v2436 = vunpack.c.l.b16 %v2363
    %v2437 = vunpack.c.h.b16 %v2363
    %v2438 = vunpack.c.l.b16 %v2364
    %v2439 = vunpack.c.h.b16 %v2364
    %v2440 = vunpack.c.l.b16 %v2365
    %v2441 = vunpack.c.h.b16 %v2365
    %v2442 = vunpack.c.l.b16 %v2366
    %v2443 = vunpack.c.h.b16 %v2366
    %v2444 = vunpack.c.l.b16 %v2367
    %v2445 = vunpack.c.h.b16 %v2367
    %v2446 = vpack.c.b16 %v2394, %v2394
    %v2447 = vpack.c.b16 %v2395, %v2395
    %v2448 = vpack.c.b16 %v2396, %v2396
    %v2449 = vpack.c.b16 %v2397, %v2397
    %v2450 = vpack.c.b16 %v2398, %v2398
    %v2451 = vpack.c.b16 %v2399, %v2399
    %v2452 = vpack.c.b16 %v2400, %v2400
    %v2453 = vpack.c.b16 %v2401, %v2401
    %v2454 = vpack.c.b16 %v2402, %v2402
    %v2455 = vpack.c.b16 %v2403, %v2403
    %v2456 = vpack.c.b16 %v2404, %v2404
    %v2457 = vpack.c.b16 %v2405, %v2405
    %v2458 = vpack.c.b16 %v2406, %v2406
    %v2459 = vpack.c.b16 %v2407, %v2407
    %v2460 = vpack.c.b16 %v2408, %v2408
    %v2461 = vpack.c.b16 %v2409, %v2409
    %v2462 = vpack.c.b16 %v2410, %v2410
    %v2463 = vpack.c.b16 %v2411, %v2411
    %v2464 = vpack.c.b16 %v2412, %v2412
    %v2465 = vpack.c.b16 %v2413, %v2413
    %v2466 = vpack.c.b16 %v2414, %v2414
    %v2467 = vpack.c.b16 %v2415, %v2415
    %v2468 = vpack.c.b16 %v2416, %v2416
    %v2469 = vpack.c.b16 %v2417, %v2417
    %v2470 = vpack.c.b16 %v2418, %v2418
    %v2471 = vpack.c.b16 %v2419, %v2419
    %v2472 = vpack.c.b16 %v2420, %v2420
    %v2473 = vpack.c.b16 %v2421, %v2421
    %v2474 = vpack.c.b16 %v2422, %v2422
    %v2475 = vpack.c.b16 %v2423, %v2423
    %v2476 = vpack.c.b16 %v2424, %v2424
    %v2477 = vpack.c.b16 %v2425, %v2425
    %v2478 = vpack.c.b16 %v2426, %v2426
    %v2479 = vpack.c.b16 %v2427, %v2427
    %v2480 = vpack.c.b16 %v2428, %v2428
    %v2481 = vpack.c.b16 %v2429, %v2429
    %v2482 = vpack.c.b16 %v2430, %v2430
    %v2483 = vpack.c.b16 %v2431, %v2431
    %v2484 = vpack.c.b16 %v2432, %v2432
    %v2485 = vpack.c.b16 %v2433, %v2433
    %v2486 = vpack.c.b16 %v2434, %v2434
    %v2487 = vpack.c.b16 %v2435, %v2435
    %v2488 = vpack.c.b16 %v2436, %v2436
    %v2489 = vpack.c.b16 %v2437, %v2437
    %v2490 = vpack.c.b16 %v2438, %v2438
    %v2491 = vpack.c.b16 %v2439, %v2439
    %v2492 = vpack.c.b16 %v2440, %v2440
    %v2493 = vpack.c.b16 %v2441, %v2441
    %v2494 = vpack.c.b16 %v2442, %v2442
    %v2495 = vpack.c.b16 %v2443, %v2443
    %v2496 = vpack.c.b16 %v2444, %v2444
    %v2497 = vpack.c.b16 %v2445, %v2445
    %vm2550 = vcmask 44032
    %2551 = vst.msk [vmem:[#allocation2] sm:$0xf] %vm2550, %v2446
    %2552 = vst.msk [vmem:[#allocation2 + $0x4] sm:$0xf] %vm2550, %v2447
    %2553 = vst.msk [vmem:[#allocation2 + $0x8] sm:$0xf] %vm2550, %v2448
    %2554 = vst.msk [vmem:[#allocation2 + $0xc] sm:$0xf] %vm2550, %v2449
    %2555 = vst.msk [vmem:[#allocation2 + $0x10] sm:$0xf] %vm2550, %v2450
    %2556 = vst.msk [vmem:[#allocation2 + $0x14] sm:$0xf] %vm2550, %v2451
    %2557 = vst.msk [vmem:[#allocation2 + $0x18] sm:$0xf] %vm2550, %v2452
    %2558 = vst.msk [vmem:[#allocation2 + $0x1c] sm:$0xf] %vm2550, %v2453
    %2559 = vst.msk [vmem:[#allocation2 + $0x20] sm:$0xf] %vm2550, %v2454
    %2560 = vst.msk [vmem:[#allocation2 + $0x24] sm:$0xf] %vm2550, %v2455
    %2561 = vst.msk [vmem:[#allocation2 + $0x28] sm:$0xf] %vm2550, %v2456
    %2562 = vst.msk [vmem:[#allocation2 + $0x2c] sm:$0xf] %vm2550, %v2457
    %2563 = vst.msk [vmem:[#allocation2 + $0x30] sm:$0xf] %vm2550, %v2458
    %2564 = vst.msk [vmem:[#allocation2 + $0x34] sm:$0xf] %vm2550, %v2459
    %2565 = vst.msk [vmem:[#allocation2 + $0x38] sm:$0xf] %vm2550, %v2460
    %2566 = vst.msk [vmem:[#allocation2 + $0x3c] sm:$0xf] %vm2550, %v2461
    %2567 = vst.msk [vmem:[#allocation2 + $0x40] sm:$0xf] %vm2550, %v2462
    %2568 = vst.msk [vmem:[#allocation2 + $0x44] sm:$0xf] %vm2550, %v2463
    %2569 = vst.msk [vmem:[#allocation2 + $0x48] sm:$0xf] %vm2550, %v2464
    %2570 = vst.msk [vmem:[#allocation2 + $0x4c] sm:$0xf] %vm2550, %v2465
    %2571 = vst.msk [vmem:[#allocation2 + $0x50] sm:$0xf] %vm2550, %v2466
    %2572 = vst.msk [vmem:[#allocation2 + $0x54] sm:$0xf] %vm2550, %v2467
    %2573 = vst.msk [vmem:[#allocation2 + $0x58] sm:$0xf] %vm2550, %v2468
    %2574 = vst.msk [vmem:[#allocation2 + $0x5c] sm:$0xf] %vm2550, %v2469
    %2575 = vst.msk [vmem:[#allocation2 + $0x60] sm:$0xf] %vm2550, %v2470
    %2576 = vst.msk [vmem:[#allocation2 + $0x64] sm:$0xf] %vm2550, %v2471
    %2577 = vst.msk [vmem:[#allocation2 + $0x68] sm:$0xf] %vm2550, %v2472
    %2578 = vst.msk [vmem:[#allocation2 + $0x6c] sm:$0xf] %vm2550, %v2473
    %2579 = vst.msk [vmem:[#allocation2 + $0x70] sm:$0xf] %vm2550, %v2474
    %2580 = vst.msk [vmem:[#allocation2 + $0x74] sm:$0xf] %vm2550, %v2475
    %2581 = vst.msk [vmem:[#allocation2 + $0x78] sm:$0xf] %vm2550, %v2476
    %2582 = vst.msk [vmem:[#allocation2 + $0x7c] sm:$0xf] %vm2550, %v2477
    %2583 = vst.msk [vmem:[#allocation2 + $0x80] sm:$0xf] %vm2550, %v2478
    %2584 = vst.msk [vmem:[#allocation2 + $0x84] sm:$0xf] %vm2550, %v2479
    %2585 = vst.msk [vmem:[#allocation2 + $0x88] sm:$0xf] %vm2550, %v2480
    %2586 = vst.msk [vmem:[#allocation2 + $0x8c] sm:$0xf] %vm2550, %v2481
    %2587 = vst.msk [vmem:[#allocation2 + $0x90] sm:$0xf] %vm2550, %v2482
    %2588 = vst.msk [vmem:[#allocation2 + $0x94] sm:$0xf] %vm2550, %v2483
    %2589 = vst.msk [vmem:[#allocation2 + $0x98] sm:$0xf] %vm2550, %v2484
    %2590 = vst.msk [vmem:[#allocation2 + $0x9c] sm:$0xf] %vm2550, %v2485
    %2591 = vst.msk [vmem:[#allocation2 + $0xa0] sm:$0xf] %vm2550, %v2486
    %2592 = vst.msk [vmem:[#allocation2 + $0xa4] sm:$0xf] %vm2550, %v2487
    %2593 = vst.msk [vmem:[#allocation2 + $0xa8] sm:$0xf] %vm2550, %v2488
    %2594 = vst.msk [vmem:[#allocation2 + $0xac] sm:$0xf] %vm2550, %v2489
    %2595 = vst.msk [vmem:[#allocation2 + $0xb0] sm:$0xf] %vm2550, %v2490
    %2596 = vst.msk [vmem:[#allocation2 + $0xb4] sm:$0xf] %vm2550, %v2491
    %2597 = vst.msk [vmem:[#allocation2 + $0xb8] sm:$0xf] %vm2550, %v2492
    %2598 = vst.msk [vmem:[#allocation2 + $0xbc] sm:$0xf] %vm2550, %v2493
    %2599 = vst.msk [vmem:[#allocation2 + $0xc0] sm:$0xf] %vm2550, %v2494
    %2600 = vst.msk [vmem:[#allocation2 + $0xc4] sm:$0xf] %vm2550, %v2495
    %2601 = vst.msk [vmem:[#allocation2 + $0xc8] sm:$0xf] %vm2550, %v2496
    %2602 = vst.msk [vmem:[#allocation2 + $0xcc] sm:$0xf] %vm2550, %v2497
    // Predicated region
    $region26: #{cnn_cifar_forward.3} parent=1 // pred_check
      _
    $region27: #{cnn_cifar_forward.3} parent=1 // pred_check_branch
      %2604 = sbr.rel (0) target = $region29
    $region28: #{cnn_cifar_forward.3} parent=1 // pred_region
      // Predicated region
      $region30: #{cnn_cifar_forward.3} parent=28 // pred_check
        _
      $region31: #{cnn_cifar_forward.3} parent=28 // pred_check_branch
        %2606 = sbr.rel (0) target = $region33
      $region32: #{cnn_cifar_forward.3} parent=28 // pred_region
        // Predicated region
        $region34: #{cnn_cifar_forward.3} parent=32 // pred_check
          _
        $region35: #{cnn_cifar_forward.3} parent=32 // pred_check_branch
          %2608 = sbr.rel target = $region37
        $region36: #{cnn_cifar_forward.3} parent=32 // pred_region
          // Predicated region
          $region49: #{cnn_cifar_forward.3} parent=36 // pred_check
            _
          $region50: #{cnn_cifar_forward.3} parent=36 // pred_check_branch
            %2719 = sbr.rel (0) target = $region52
          $region51: #{cnn_cifar_forward.3} parent=36 // pred_region
            loop: start=0, step=1, limit=1
            $region53: #{cnn_cifar_forward.3} parent=51 // loop_pre_header
              _
            $region54: #{cnn_cifar_forward.3} parent=51 // loop_header
              %s2721 = sphi 0, %s2725
              %p2722 = scmp.ge.s32.totalorder %s2721, 1
              %s2726 = sphi [#allocation2], [#allocation2]
              %s2727 = sphi %s6, %s6
            $region55: #{cnn_cifar_forward.3} parent=51 // loop_header_branch
              %2724 = sbr.rel (%p2722) target = $region59
            $region56: #{cnn_cifar_forward.3} parent=51 // loop_body
              _
            $region57: #{cnn_cifar_forward.3} parent=51 // loop_footer
              %s2725 = sadd.s32 1, %s2721
            $region58: #{cnn_cifar_forward.3} parent=51 // loop_footer_branch
              %2720 = sbr.rel target = $region54
            $region59: #{cnn_cifar_forward.3} parent=51 // loop_exit
              _
            loop: start=0, step=1, limit=1
            $region60: #{cnn_cifar_forward.3} parent=51 // loop_pre_header
              _
            $region61: #{cnn_cifar_forward.3} parent=51 // loop_header
              %s2730 = sphi 0, %s2734
              %p2731 = scmp.ge.s32.totalorder %s2730, 1
              %s2735 = sphi [#allocation2], [#allocation2]
              %s2736 = sphi %s6, %s6
            $region62: #{cnn_cifar_forward.3} parent=51 // loop_header_branch
              %2733 = sbr.rel (%p2731) target = $region66
            $region63: #{cnn_cifar_forward.3} parent=51 // loop_body
              %v2737 = vld [vmem:[%s2735] sm:$0xf]
              %2738 = vst [vmem:[%s2736] sm:$0xf] %v2737
              %v2739 = vld [vmem:[%s2735 + $0x4] sm:$0xf]
              %2740 = vst [vmem:[%s2736 + $0x4] sm:$0xf] %v2739
              %v2741 = vld [vmem:[%s2735 + $0x8] sm:$0xf]
              %2742 = vst [vmem:[%s2736 + $0x8] sm:$0xf] %v2741
              %v2743 = vld [vmem:[%s2735 + $0xc] sm:$0xf]
              %2744 = vst [vmem:[%s2736 + $0xc] sm:$0xf] %v2743
              %v2745 = vld [vmem:[%s2735 + $0x10] sm:$0xf]
              %2746 = vst [vmem:[%s2736 + $0x10] sm:$0xf] %v2745
              %v2747 = vld [vmem:[%s2735 + $0x14] sm:$0xf]
              %2748 = vst [vmem:[%s2736 + $0x14] sm:$0xf] %v2747
              %v2749 = vld [vmem:[%s2735 + $0x18] sm:$0xf]
              %2750 = vst [vmem:[%s2736 + $0x18] sm:$0xf] %v2749
              %v2751 = vld [vmem:[%s2735 + $0x1c] sm:$0xf]
              %2752 = vst [vmem:[%s2736 + $0x1c] sm:$0xf] %v2751
              %v2753 = vld [vmem:[%s2735 + $0x20] sm:$0xf]
              %2754 = vst [vmem:[%s2736 + $0x20] sm:$0xf] %v2753
              %v2755 = vld [vmem:[%s2735 + $0x24] sm:$0xf]
              %2756 = vst [vmem:[%s2736 + $0x24] sm:$0xf] %v2755
              %v2757 = vld [vmem:[%s2735 + $0x28] sm:$0xf]
              %2758 = vst [vmem:[%s2736 + $0x28] sm:$0xf] %v2757
              %v2759 = vld [vmem:[%s2735 + $0x2c] sm:$0xf]
              %2760 = vst [vmem:[%s2736 + $0x2c] sm:$0xf] %v2759
              %v2761 = vld [vmem:[%s2735 + $0x30] sm:$0xf]
              %2762 = vst [vmem:[%s2736 + $0x30] sm:$0xf] %v2761
              %v2763 = vld [vmem:[%s2735 + $0x34] sm:$0xf]
              %2764 = vst [vmem:[%s2736 + $0x34] sm:$0xf] %v2763
              %v2765 = vld [vmem:[%s2735 + $0x38] sm:$0xf]
              %2766 = vst [vmem:[%s2736 + $0x38] sm:$0xf] %v2765
              %v2767 = vld [vmem:[%s2735 + $0x3c] sm:$0xf]
              %2768 = vst [vmem:[%s2736 + $0x3c] sm:$0xf] %v2767
              %v2769 = vld [vmem:[%s2735 + $0x40] sm:$0xf]
              %2770 = vst [vmem:[%s2736 + $0x40] sm:$0xf] %v2769
              %v2771 = vld [vmem:[%s2735 + $0x44] sm:$0xf]
              %2772 = vst [vmem:[%s2736 + $0x44] sm:$0xf] %v2771
              %v2773 = vld [vmem:[%s2735 + $0x48] sm:$0xf]
              %2774 = vst [vmem:[%s2736 + $0x48] sm:$0xf] %v2773
              %v2775 = vld [vmem:[%s2735 + $0x4c] sm:$0xf]
              %2776 = vst [vmem:[%s2736 + $0x4c] sm:$0xf] %v2775
              %v2777 = vld [vmem:[%s2735 + $0x50] sm:$0xf]
              %2778 = vst [vmem:[%s2736 + $0x50] sm:$0xf] %v2777
              %v2779 = vld [vmem:[%s2735 + $0x54] sm:$0xf]
              %2780 = vst [vmem:[%s2736 + $0x54] sm:$0xf] %v2779
              %v2781 = vld [vmem:[%s2735 + $0x58] sm:$0xf]
              %2782 = vst [vmem:[%s2736 + $0x58] sm:$0xf] %v2781
              %v2783 = vld [vmem:[%s2735 + $0x5c] sm:$0xf]
              %2784 = vst [vmem:[%s2736 + $0x5c] sm:$0xf] %v2783
              %v2785 = vld [vmem:[%s2735 + $0x60] sm:$0xf]
              %2786 = vst [vmem:[%s2736 + $0x60] sm:$0xf] %v2785
              %v2787 = vld [vmem:[%s2735 + $0x64] sm:$0xf]
              %2788 = vst [vmem:[%s2736 + $0x64] sm:$0xf] %v2787
              %v2789 = vld [vmem:[%s2735 + $0x68] sm:$0xf]
              %2790 = vst [vmem:[%s2736 + $0x68] sm:$0xf] %v2789
              %v2791 = vld [vmem:[%s2735 + $0x6c] sm:$0xf]
              %2792 = vst [vmem:[%s2736 + $0x6c] sm:$0xf] %v2791
              %v2793 = vld [vmem:[%s2735 + $0x70] sm:$0xf]
              %2794 = vst [vmem:[%s2736 + $0x70] sm:$0xf] %v2793
              %v2795 = vld [vmem:[%s2735 + $0x74] sm:$0xf]
              %2796 = vst [vmem:[%s2736 + $0x74] sm:$0xf] %v2795
              %v2797 = vld [vmem:[%s2735 + $0x78] sm:$0xf]
              %2798 = vst [vmem:[%s2736 + $0x78] sm:$0xf] %v2797
              %v2799 = vld [vmem:[%s2735 + $0x7c] sm:$0xf]
              %2800 = vst [vmem:[%s2736 + $0x7c] sm:$0xf] %v2799
              %v2801 = vld [vmem:[%s2735 + $0x80] sm:$0xf]
              %2802 = vst [vmem:[%s2736 + $0x80] sm:$0xf] %v2801
              %v2803 = vld [vmem:[%s2735 + $0x84] sm:$0xf]
              %2804 = vst [vmem:[%s2736 + $0x84] sm:$0xf] %v2803
              %v2805 = vld [vmem:[%s2735 + $0x88] sm:$0xf]
              %2806 = vst [vmem:[%s2736 + $0x88] sm:$0xf] %v2805
              %v2807 = vld [vmem:[%s2735 + $0x8c] sm:$0xf]
              %2808 = vst [vmem:[%s2736 + $0x8c] sm:$0xf] %v2807
              %v2809 = vld [vmem:[%s2735 + $0x90] sm:$0xf]
              %2810 = vst [vmem:[%s2736 + $0x90] sm:$0xf] %v2809
              %v2811 = vld [vmem:[%s2735 + $0x94] sm:$0xf]
              %2812 = vst [vmem:[%s2736 + $0x94] sm:$0xf] %v2811
              %v2813 = vld [vmem:[%s2735 + $0x98] sm:$0xf]
              %2814 = vst [vmem:[%s2736 + $0x98] sm:$0xf] %v2813
              %v2815 = vld [vmem:[%s2735 + $0x9c] sm:$0xf]
              %2816 = vst [vmem:[%s2736 + $0x9c] sm:$0xf] %v2815
              %v2817 = vld [vmem:[%s2735 + $0xa0] sm:$0xf]
              %2818 = vst [vmem:[%s2736 + $0xa0] sm:$0xf] %v2817
              %v2819 = vld [vmem:[%s2735 + $0xa4] sm:$0xf]
              %2820 = vst [vmem:[%s2736 + $0xa4] sm:$0xf] %v2819
              %v2821 = vld [vmem:[%s2735 + $0xa8] sm:$0xf]
              %2822 = vst [vmem:[%s2736 + $0xa8] sm:$0xf] %v2821
              %v2823 = vld [vmem:[%s2735 + $0xac] sm:$0xf]
              %2824 = vst [vmem:[%s2736 + $0xac] sm:$0xf] %v2823
              %v2825 = vld [vmem:[%s2735 + $0xb0] sm:$0xf]
              %2826 = vst [vmem:[%s2736 + $0xb0] sm:$0xf] %v2825
              %v2827 = vld [vmem:[%s2735 + $0xb4] sm:$0xf]
              %2828 = vst [vmem:[%s2736 + $0xb4] sm:$0xf] %v2827
              %v2829 = vld [vmem:[%s2735 + $0xb8] sm:$0xf]
              %2830 = vst [vmem:[%s2736 + $0xb8] sm:$0xf] %v2829
              %v2831 = vld [vmem:[%s2735 + $0xbc] sm:$0xf]
              %2832 = vst [vmem:[%s2736 + $0xbc] sm:$0xf] %v2831
              %v2833 = vld [vmem:[%s2735 + $0xc0] sm:$0xf]
              %2834 = vst [vmem:[%s2736 + $0xc0] sm:$0xf] %v2833
            $region64: #{cnn_cifar_forward.3} parent=51 // loop_footer
              %s2734 = sadd.s32 1, %s2730
            $region65: #{cnn_cifar_forward.3} parent=51 // loop_footer_branch
              %2729 = sbr.rel target = $region61
            $region66: #{cnn_cifar_forward.3} parent=51 // loop_exit
              _
          $region52: #{cnn_cifar_forward.3} parent=36 // pred_fallthru
            _
        $region37: #{cnn_cifar_forward.3} parent=32 // pred_fallthru
          _
        // Predicated region
        $region38: #{cnn_cifar_forward.3} parent=32 // pred_check
          _
        $region39: #{cnn_cifar_forward.3} parent=32 // pred_check_branch
          %2610 = sbr.rel (0) target = $region41
        $region40: #{cnn_cifar_forward.3} parent=32 // pred_region
          loop: start=0, step=1, limit=1
          $region42: #{cnn_cifar_forward.3} parent=40 // loop_pre_header
            _
          $region43: #{cnn_cifar_forward.3} parent=40 // loop_header
            %s2613 = sphi 0, %s2617
            %p2614 = scmp.ge.s32.totalorder %s2613, 1
            %s2618 = sphi [#allocation2], [#allocation2]
            %s2619 = sphi %s6, %s6
          $region44: #{cnn_cifar_forward.3} parent=40 // loop_header_branch
            %2616 = sbr.rel (%p2614) target = $region48
          $region45: #{cnn_cifar_forward.3} parent=40 // loop_body
            %v2620 = vld [vmem:[%s2618] sm:$0xf]
            %2621 = vst [vmem:[%s2619] sm:$0xf] %v2620
            %v2622 = vld [vmem:[%s2618 + $0x4] sm:$0xf]
            %2623 = vst [vmem:[%s2619 + $0x4] sm:$0xf] %v2622
            %v2624 = vld [vmem:[%s2618 + $0x8] sm:$0xf]
            %2625 = vst [vmem:[%s2619 + $0x8] sm:$0xf] %v2624
            %v2626 = vld [vmem:[%s2618 + $0xc] sm:$0xf]
            %2627 = vst [vmem:[%s2619 + $0xc] sm:$0xf] %v2626
            %v2628 = vld [vmem:[%s2618 + $0x10] sm:$0xf]
            %2629 = vst [vmem:[%s2619 + $0x10] sm:$0xf] %v2628
            %v2630 = vld [vmem:[%s2618 + $0x14] sm:$0xf]
            %2631 = vst [vmem:[%s2619 + $0x14] sm:$0xf] %v2630
            %v2632 = vld [vmem:[%s2618 + $0x18] sm:$0xf]
            %2633 = vst [vmem:[%s2619 + $0x18] sm:$0xf] %v2632
            %v2634 = vld [vmem:[%s2618 + $0x1c] sm:$0xf]
            %2635 = vst [vmem:[%s2619 + $0x1c] sm:$0xf] %v2634
            %v2636 = vld [vmem:[%s2618 + $0x20] sm:$0xf]
            %2637 = vst [vmem:[%s2619 + $0x20] sm:$0xf] %v2636
            %v2638 = vld [vmem:[%s2618 + $0x24] sm:$0xf]
            %2639 = vst [vmem:[%s2619 + $0x24] sm:$0xf] %v2638
            %v2640 = vld [vmem:[%s2618 + $0x28] sm:$0xf]
            %2641 = vst [vmem:[%s2619 + $0x28] sm:$0xf] %v2640
            %v2642 = vld [vmem:[%s2618 + $0x2c] sm:$0xf]
            %2643 = vst [vmem:[%s2619 + $0x2c] sm:$0xf] %v2642
            %v2644 = vld [vmem:[%s2618 + $0x30] sm:$0xf]
            %2645 = vst [vmem:[%s2619 + $0x30] sm:$0xf] %v2644
            %v2646 = vld [vmem:[%s2618 + $0x34] sm:$0xf]
            %2647 = vst [vmem:[%s2619 + $0x34] sm:$0xf] %v2646
            %v2648 = vld [vmem:[%s2618 + $0x38] sm:$0xf]
            %2649 = vst [vmem:[%s2619 + $0x38] sm:$0xf] %v2648
            %v2650 = vld [vmem:[%s2618 + $0x3c] sm:$0xf]
            %2651 = vst [vmem:[%s2619 + $0x3c] sm:$0xf] %v2650
            %v2652 = vld [vmem:[%s2618 + $0x40] sm:$0xf]
            %2653 = vst [vmem:[%s2619 + $0x40] sm:$0xf] %v2652
            %v2654 = vld [vmem:[%s2618 + $0x44] sm:$0xf]
            %2655 = vst [vmem:[%s2619 + $0x44] sm:$0xf] %v2654
            %v2656 = vld [vmem:[%s2618 + $0x48] sm:$0xf]
            %2657 = vst [vmem:[%s2619 + $0x48] sm:$0xf] %v2656
            %v2658 = vld [vmem:[%s2618 + $0x4c] sm:$0xf]
            %2659 = vst [vmem:[%s2619 + $0x4c] sm:$0xf] %v2658
            %v2660 = vld [vmem:[%s2618 + $0x50] sm:$0xf]
            %2661 = vst [vmem:[%s2619 + $0x50] sm:$0xf] %v2660
            %v2662 = vld [vmem:[%s2618 + $0x54] sm:$0xf]
            %2663 = vst [vmem:[%s2619 + $0x54] sm:$0xf] %v2662
            %v2664 = vld [vmem:[%s2618 + $0x58] sm:$0xf]
            %2665 = vst [vmem:[%s2619 + $0x58] sm:$0xf] %v2664
            %v2666 = vld [vmem:[%s2618 + $0x5c] sm:$0xf]
            %2667 = vst [vmem:[%s2619 + $0x5c] sm:$0xf] %v2666
            %v2668 = vld [vmem:[%s2618 + $0x60] sm:$0xf]
            %2669 = vst [vmem:[%s2619 + $0x60] sm:$0xf] %v2668
            %v2670 = vld [vmem:[%s2618 + $0x64] sm:$0xf]
            %2671 = vst [vmem:[%s2619 + $0x64] sm:$0xf] %v2670
            %v2672 = vld [vmem:[%s2618 + $0x68] sm:$0xf]
            %2673 = vst [vmem:[%s2619 + $0x68] sm:$0xf] %v2672
            %v2674 = vld [vmem:[%s2618 + $0x6c] sm:$0xf]
            %2675 = vst [vmem:[%s2619 + $0x6c] sm:$0xf] %v2674
            %v2676 = vld [vmem:[%s2618 + $0x70] sm:$0xf]
            %2677 = vst [vmem:[%s2619 + $0x70] sm:$0xf] %v2676
            %v2678 = vld [vmem:[%s2618 + $0x74] sm:$0xf]
            %2679 = vst [vmem:[%s2619 + $0x74] sm:$0xf] %v2678
            %v2680 = vld [vmem:[%s2618 + $0x78] sm:$0xf]
            %2681 = vst [vmem:[%s2619 + $0x78] sm:$0xf] %v2680
            %v2682 = vld [vmem:[%s2618 + $0x7c] sm:$0xf]
            %2683 = vst [vmem:[%s2619 + $0x7c] sm:$0xf] %v2682
            %v2684 = vld [vmem:[%s2618 + $0x80] sm:$0xf]
            %2685 = vst [vmem:[%s2619 + $0x80] sm:$0xf] %v2684
            %v2686 = vld [vmem:[%s2618 + $0x84] sm:$0xf]
            %2687 = vst [vmem:[%s2619 + $0x84] sm:$0xf] %v2686
            %v2688 = vld [vmem:[%s2618 + $0x88] sm:$0xf]
            %2689 = vst [vmem:[%s2619 + $0x88] sm:$0xf] %v2688
            %v2690 = vld [vmem:[%s2618 + $0x8c] sm:$0xf]
            %2691 = vst [vmem:[%s2619 + $0x8c] sm:$0xf] %v2690
            %v2692 = vld [vmem:[%s2618 + $0x90] sm:$0xf]
            %2693 = vst [vmem:[%s2619 + $0x90] sm:$0xf] %v2692
            %v2694 = vld [vmem:[%s2618 + $0x94] sm:$0xf]
            %2695 = vst [vmem:[%s2619 + $0x94] sm:$0xf] %v2694
            %v2696 = vld [vmem:[%s2618 + $0x98] sm:$0xf]
            %2697 = vst [vmem:[%s2619 + $0x98] sm:$0xf] %v2696
            %v2698 = vld [vmem:[%s2618 + $0x9c] sm:$0xf]
            %2699 = vst [vmem:[%s2619 + $0x9c] sm:$0xf] %v2698
            %v2700 = vld [vmem:[%s2618 + $0xa0] sm:$0xf]
            %2701 = vst [vmem:[%s2619 + $0xa0] sm:$0xf] %v2700
            %v2702 = vld [vmem:[%s2618 + $0xa4] sm:$0xf]
            %2703 = vst [vmem:[%s2619 + $0xa4] sm:$0xf] %v2702
            %v2704 = vld [vmem:[%s2618 + $0xa8] sm:$0xf]
            %2705 = vst [vmem:[%s2619 + $0xa8] sm:$0xf] %v2704
            %v2706 = vld [vmem:[%s2618 + $0xac] sm:$0xf]
            %2707 = vst [vmem:[%s2619 + $0xac] sm:$0xf] %v2706
            %v2708 = vld [vmem:[%s2618 + $0xb0] sm:$0xf]
            %2709 = vst [vmem:[%s2619 + $0xb0] sm:$0xf] %v2708
            %v2710 = vld [vmem:[%s2618 + $0xb4] sm:$0xf]
            %2711 = vst [vmem:[%s2619 + $0xb4] sm:$0xf] %v2710
            %v2712 = vld [vmem:[%s2618 + $0xb8] sm:$0xf]
            %2713 = vst [vmem:[%s2619 + $0xb8] sm:$0xf] %v2712
            %v2714 = vld [vmem:[%s2618 + $0xbc] sm:$0xf]
            %2715 = vst [vmem:[%s2619 + $0xbc] sm:$0xf] %v2714
            %v2716 = vld [vmem:[%s2618 + $0xc0] sm:$0xf]
            %2717 = vst [vmem:[%s2619 + $0xc0] sm:$0xf] %v2716
          $region46: #{cnn_cifar_forward.3} parent=40 // loop_footer
            %s2617 = sadd.s32 1, %s2613
          $region47: #{cnn_cifar_forward.3} parent=40 // loop_footer_branch
            %2612 = sbr.rel target = $region43
          $region48: #{cnn_cifar_forward.3} parent=40 // loop_exit
            _
        $region41: #{cnn_cifar_forward.3} parent=32 // pred_fallthru
          _
      $region33: #{cnn_cifar_forward.3} parent=28 // pred_fallthru
        _
      %2835 = vnop
    $region29: #{cnn_cifar_forward.3} parent=1 // pred_fallthru
      _
    // Predicated region
    $region67: #{cnn_cifar_forward.3} parent=1 // pred_check
      _
    $region68: #{cnn_cifar_forward.3} parent=1 // pred_check_branch
      %2837 = sbr.rel (0) target = $region70
    $region69: #{cnn_cifar_forward.3} parent=1 // pred_region
      _
    $region70: #{cnn_cifar_forward.3} parent=1 // pred_fallthru
      _

// kernel: cnn_cifar_forward.4
$region0: #{cnn_cifar_forward.4}
  #allocation0 [shape = 'u32[]', space=smem, size = 0x4, offset = 0x4, fixed_abs, tag = 'smem constant byte address 0x4 - core index']
  #allocation1 [shape = 'u32[144,128]{1,0:T(1,128)}', space=vmem, size = 0x12000, scoped, tag = 'internal scratch']
  %s0 = inlined_call_operand.vmem [shape: bf16[50,150], index: 0, kind: input, shape index: {}]
  %s1 = inlined_call_operand.vmem [shape: bf16[50,150], index: 1, kind: input, shape index: {}]
  %s2 = inlined_call_operand.vmem [shape: bf16[50,150], index: 2, kind: input, shape index: {}]
  %s3 = inlined_call_operand.vmem [shape: bf16[50,150], index: 3, kind: input, shape index: {}]
  %s4 = inlined_call_operand.vmem [shape: bf16[150,16], index: 4, kind: input, shape index: {}]
  %s5 = inlined_call_operand.vmem [shape: f32[1,16], index: 5, kind: input, shape index: {}]
  %s6 = inlined_call_operand.vmem [shape: bf16[50,16], index: 6, kind: output, shape index: {}]
  %s7 = sld [smem:[#allocation0]]
  $region71: #{cnn_cifar_forward.4} parent=0
    _
  %s9 = ssub.s32 1, %s7
  %s10 = scalar_select 0, %s9, %s7
  $region1: #{cnn_cifar_forward.4} parent=0
    #allocation2 [shape = 'u8[16384]{0}', space=vmem, size = 0x4000, scoped, tag = 'output window, operand 0, single buffered']
    // Predicated region
    $region2: #{cnn_cifar_forward.4} parent=1 // pred_check
      _
    $region3: #{cnn_cifar_forward.4} parent=1 // pred_check_branch
      %12 = sbr.rel (0) target = $region5
    $region4: #{cnn_cifar_forward.4} parent=1 // pred_region
      _
    $region5: #{cnn_cifar_forward.4} parent=1 // pred_fallthru
      _
    // Predicated region
    $region6: #{cnn_cifar_forward.4} parent=1 // pred_check
      _
    $region7: #{cnn_cifar_forward.4} parent=1 // pred_check_branch
      %14 = sbr.rel (0) target = $region9
    $region8: #{cnn_cifar_forward.4} parent=1 // pred_region
      _
    $region9: #{cnn_cifar_forward.4} parent=1 // pred_fallthru
      _
    // Predicated region
    $region10: #{cnn_cifar_forward.4} parent=1 // pred_check
      _
    $region11: #{cnn_cifar_forward.4} parent=1 // pred_check_branch
      %16 = sbr.rel (0) target = $region13
    $region12: #{cnn_cifar_forward.4} parent=1 // pred_region
      _
    $region13: #{cnn_cifar_forward.4} parent=1 // pred_fallthru
      _
    // Predicated region
    $region14: #{cnn_cifar_forward.4} parent=1 // pred_check
      _
    $region15: #{cnn_cifar_forward.4} parent=1 // pred_check_branch
      %18 = sbr.rel (0) target = $region17
    $region16: #{cnn_cifar_forward.4} parent=1 // pred_region
      _
    $region17: #{cnn_cifar_forward.4} parent=1 // pred_fallthru
      _
    // Predicated region
    $region18: #{cnn_cifar_forward.4} parent=1 // pred_check
      _
    $region19: #{cnn_cifar_forward.4} parent=1 // pred_check_branch
      %20 = sbr.rel (0) target = $region21
    $region20: #{cnn_cifar_forward.4} parent=1 // pred_region
      _
    $region21: #{cnn_cifar_forward.4} parent=1 // pred_fallthru
      _
    // Predicated region
    $region22: #{cnn_cifar_forward.4} parent=1 // pred_check
      _
    $region23: #{cnn_cifar_forward.4} parent=1 // pred_check_branch
      %22 = sbr.rel (0) target = $region25
    $region24: #{cnn_cifar_forward.4} parent=1 // pred_region
      _
    $region25: #{cnn_cifar_forward.4} parent=1 // pred_fallthru
      _
    %v24 = vld [vmem:[%s4] sm:$0xf]
    %v25 = vld [vmem:[%s4 + $0x4] sm:$0xf]
    %v26 = vld [vmem:[%s4 + $0x8] sm:$0xf]
    %v27 = vld [vmem:[%s4 + $0xc] sm:$0xf]
    %v28 = vld [vmem:[%s4 + $0x10] sm:$0xf]
    %v29 = vld [vmem:[%s4 + $0x14] sm:$0xf]
    %v30 = vld [vmem:[%s4 + $0x18] sm:$0xf]
    %v31 = vld [vmem:[%s4 + $0x1c] sm:$0xf]
    %v32 = vld [vmem:[%s4 + $0x20] sm:$0xf]
    %v33 = vld [vmem:[%s4 + $0x24] sm:$0xf]
    %v34 = vld [vmem:[%s4 + $0x28] sm:$0xf]
    %v35 = vld [vmem:[%s4 + $0x2c] sm:$0xf]
    %v36 = vld [vmem:[%s4 + $0x30] sm:$0xf]
    %v37 = vld [vmem:[%s4 + $0x34] sm:$0xf]
    %v38 = vld [vmem:[%s4 + $0x38] sm:$0xf]
    %v39 = vld [vmem:[%s4 + $0x3c] sm:$0xf]
    %v40 = vld [vmem:[%s4 + $0x40] sm:$0xf]
    %v41 = vld [vmem:[%s4 + $0x44] sm:$0xf]
    %v42 = vld [vmem:[%s4 + $0x48] sm:$0x7]
    %v43 = vld [vmem:[%s0] sm:$0xff]
    %v44 = vld [vmem:[%s0 + $0x8] sm:$0xff]
    %v45 = vld [vmem:[%s0 + $0x10] sm:$0xff]
    %v46 = vld [vmem:[%s0 + $0x18] sm:$0xff]
    %v47 = vld [vmem:[%s0 + $0x20] sm:$0xff]
    %v48 = vld [vmem:[%s0 + $0x28] sm:$0xff]
    %v49 = vld [vmem:[%s0 + $0x30] sm:$0xff]
    %v50 = vld [vmem:[%s0 + $0x38] sm:$0xff]
    %v59 = vunpack.c.l.b16 %v43
    %v60 = vunpack.c.h.b16 %v43
    %v61 = vunpack.c.l.b16 %v44
    %v62 = vunpack.c.h.b16 %v44
    %v63 = vunpack.c.l.b16 %v45
    %v64 = vunpack.c.h.b16 %v45
    %v65 = vunpack.c.l.b16 %v46
    %v66 = vunpack.c.h.b16 %v46
    %v67 = vunpack.c.l.b16 %v47
    %v68 = vunpack.c.h.b16 %v47
    %v69 = vunpack.c.l.b16 %v48
    %v70 = vunpack.c.h.b16 %v48
    %v71 = vunpack.c.l.b16 %v49
    %v72 = vunpack.c.h.b16 %v49
    %v73 = vunpack.c.l.b16 %v50
    %v74 = vunpack.c.h.b16 %v50
    %v75 = vpack.c.b16 %v61, %v59
    %v76 = vpack.c.b16 %v62, %v60
    %v77 = vpack.c.b16 %v65, %v63
    %v78 = vpack.c.b16 %v66, %v64
    %v79 = vpack.c.b16 %v69, %v67
    %v80 = vpack.c.b16 %v70, %v68
    %v81 = vpack.c.b16 %v73, %v71
    %v82 = vpack.c.b16 %v74, %v72
    %v106 = vunpack.c.l.b16 %v24
    %v107 = vunpack.c.l.b16 %v25
    %v108 = vunpack.c.l.b16 %v26
    %v109 = vunpack.c.l.b16 %v27
    %v110 = vunpack.c.l.b16 %v28
    %v111 = vunpack.c.l.b16 %v29
    %v112 = vunpack.c.l.b16 %v30
    %v113 = vunpack.c.l.b16 %v31
    %v114 = vunpack.c.l.b16 %v32
    %v115 = vunpack.c.l.b16 %v33
    %v116 = vunpack.c.l.b16 %v34
    %v117 = vunpack.c.l.b16 %v35
    %v118 = vunpack.c.l.b16 %v36
    %v119 = vunpack.c.l.b16 %v37
    %v120 = vunpack.c.l.b16 %v38
    %v121 = vunpack.c.l.b16 %v39
    %v122 = vunpack.c.l.b16 %v40
    %v123 = vunpack.c.l.b16 %v41
    %v124 = vunpack.c.l.b16 %v42
    %v125 = vpack.c.b16 %v107, %v106
    %v126 = vpack.c.b16 %v109, %v108
    %v127 = vpack.c.b16 %v111, %v110
    %v128 = vpack.c.b16 %v113, %v112
    %v129 = vpack.c.b16 %v115, %v114
    %v130 = vpack.c.b16 %v117, %v116
    %v131 = vpack.c.b16 %v119, %v118
    %v132 = vpack.c.b16 %v121, %v120
    %v133 = vpack.c.b16 %v123, %v122
    %v134 = vpack.c.b16 %v124, %v124
    %vm144 = vcmask 179200
    %v146 = vsel %vm144, %v76, 0
    %v149 = vsel %vm144, %v78, 0
    %v152 = vsel %vm144, %v80, 0
    %v155 = vsel %vm144, %v82, 0
    %vm157 = vcmask 1042432
    %v159 = vsel %vm157, %v134, 0
    %161 = vmatprep.subr.bf16.mxu0 0
    %162 = vmatpush1.bf16.msra.mxu0 %v125
    %163 = vmatprep.subr.bf16.mxu0 0
    %164 = vmatpush1.bf16.msra.mxu0 %v126
    %165 = vmatprep.subr.bf16.mxu0 0
    %166 = vmatpush1.bf16.msra.mxu0 %v127
    %167 = vmatprep.subr.bf16.mxu0 0
    %168 = vmatpush1.bf16.msra.mxu0 %v128
    %169 = vmatprep.subr.bf16.mxu0 0
    %170 = vmatpush1.bf16.msra.mxu0 %v129
    %171 = vmatprep.subr.bf16.mxu0 0
    %172 = vmatpush1.bf16.msra.mxu0 %v130
    %173 = vmatprep.subr.bf16.mxu0 0
    %174 = vmatpush1.bf16.msra.mxu0 %v131
    %175 = vmatprep.subr.bf16.mxu0 0
    %176 = vmatpush1.bf16.msra.mxu0 %v132
    %177 = vmatprep.subr.bf16.mxu0 0
    %178 = vmatpush1.bf16.msra.mxu0 %v133
    %179 = vmatprep.subr.bf16.mxu0 0
    %180 = vmatpush1.bf16.msra.mxu0 %v159
    %181 = vmatprep.subr.bf16.mxu0 0
    %182 = vmatpush1.bf16.msra.mxu0 0
    %183 = vmatprep.subr.bf16.mxu0 0
    %184 = vmatpush1.bf16.msra.mxu0 0
    %185 = vmatprep.subr.bf16.mxu0 0
    %186 = vmatpush1.bf16.msra.mxu0 0
    %187 = vmatprep.subr.bf16.mxu0 0
    %188 = vmatpush1.bf16.msra.mxu0 0
    %189 = vmatprep.subr.bf16.mxu0 0
    %190 = vmatpush1.bf16.msra.mxu0 0
    %191 = vmatprep.subr.bf16.mxu0 0
    %192 = vmatpush1.bf16.msra.mxu0 0
    %193 = vmatprep.mubr.bf16.mxu0 %v146
    %194 = vmatmul.mubr.bf16.gmra.mrb[0].mxu0 %v75
    %v195 = vpop.f32.mrb[0].mxu0
    %v196 = vadd.f32 0.0, %v195
    %v197 = vpop.f32.mrb[0].mxu0
    %v198 = vpop.f32.mrb[0].mxu0
    %v199 = vadd.f32 0.0, %v198
    %v200 = vpop.f32.mrb[0].mxu0
    %201 = vmatprep.mubr.bf16.mxu0 %v149
    %202 = vmatmul.mubr.bf16.gmra.mrb[0].mxu0 %v77
    %v203 = vpop.f32.mrb[0].mxu0
    %v204 = vadd.f32 0.0, %v203
    %v205 = vpop.f32.mrb[0].mxu0
    %v206 = vpop.f32.mrb[0].mxu0
    %v207 = vadd.f32 0.0, %v206
    %v208 = vpop.f32.mrb[0].mxu0
    %209 = vmatprep.mubr.bf16.mxu0 %v152
    %210 = vmatmul.mubr.bf16.gmra.mrb[0].mxu0 %v79
    %v211 = vpop.f32.mrb[0].mxu0
    %v212 = vadd.f32 0.0, %v211
    %v213 = vpop.f32.mrb[0].mxu0
    %v214 = vpop.f32.mrb[0].mxu0
    %v215 = vadd.f32 0.0, %v214
    %v216 = vpop.f32.mrb[0].mxu0
    %217 = vmatprep.mubr.bf16.mxu0 %v155
    %218 = vmatmul.mubr.bf16.gmra.mrb[0].mxu0 %v81
    %v219 = vpop.f32.mrb[0].mxu0
    %v220 = vadd.f32 0.0, %v219
    %v221 = vpop.f32.mrb[0].mxu0
    %v222 = vpop.f32.mrb[0].mxu0
    %v223 = vadd.f32 0.0, %v222
    %v224 = vpop.f32.mrb[0].mxu0
    %225 = vdwg.mxu0
    %v226 = vld [vmem:[%s1] sm:$0xff]
    %v227 = vld [vmem:[%s1 + $0x8] sm:$0xff]
    %v228 = vld [vmem:[%s1 + $0x10] sm:$0xff]
    %v229 = vld [vmem:[%s1 + $0x18] sm:$0xff]
    %v230 = vld [vmem:[%s1 + $0x20] sm:$0xff]
    %v231 = vld [vmem:[%s1 + $0x28] sm:$0xff]
    %v232 = vld [vmem:[%s1 + $0x30] sm:$0xff]
    %v233 = vld [vmem:[%s1 + $0x38] sm:$0xff]
    %v242 = vunpack.c.l.b16 %v226
    %v243 = vunpack.c.h.b16 %v226
    %v244 = vunpack.c.l.b16 %v227
    %v245 = vunpack.c.h.b16 %v227
    %v246 = vunpack.c.l.b16 %v228
    %v247 = vunpack.c.h.b16 %v228
    %v248 = vunpack.c.l.b16 %v229
    %v249 = vunpack.c.h.b16 %v229
    %v250 = vunpack.c.l.b16 %v230
    %v251 = vunpack.c.h.b16 %v230
    %v252 = vunpack.c.l.b16 %v231
    %v253 = vunpack.c.h.b16 %v231
    %v254 = vunpack.c.l.b16 %v232
    %v255 = vunpack.c.h.b16 %v232
    %v256 = vunpack.c.l.b16 %v233
    %v257 = vunpack.c.h.b16 %v233
    %v258 = vpack.c.b16 %v244, %v242
    %v259 = vpack.c.b16 %v245, %v243
    %v260 = vpack.c.b16 %v248, %v246
    %v261 = vpack.c.b16 %v249, %v247
    %v262 = vpack.c.b16 %v252, %v250
    %v263 = vpack.c.b16 %v253, %v251
    %v264 = vpack.c.b16 %v256, %v254
    %v265 = vpack.c.b16 %v257, %v255
    %v271 = vsel %vm144, %v259, 0
    %v274 = vsel %vm144, %v261, 0
    %v277 = vsel %vm144, %v263, 0
    %v280 = vsel %vm144, %v265, 0
    %282 = vmatprep.subr.bf16.mxu0 0
    %283 = vmatpush1.bf16.msra.mxu0 %v125
    %284 = vmatprep.subr.bf16.mxu0 0
    %285 = vmatpush1.bf16.msra.mxu0 %v126
    %286 = vmatprep.subr.bf16.mxu0 0
    %287 = vmatpush1.bf16.msra.mxu0 %v127
    %288 = vmatprep.subr.bf16.mxu0 0
    %289 = vmatpush1.bf16.msra.mxu0 %v128
    %290 = vmatprep.subr.bf16.mxu0 0
    %291 = vmatpush1.bf16.msra.mxu0 %v129
    %292 = vmatprep.subr.bf16.mxu0 0
    %293 = vmatpush1.bf16.msra.mxu0 %v130
    %294 = vmatprep.subr.bf16.mxu0 0
    %295 = vmatpush1.bf16.msra.mxu0 %v131
    %296 = vmatprep.subr.bf16.mxu0 0
    %297 = vmatpush1.bf16.msra.mxu0 %v132
    %298 = vmatprep.subr.bf16.mxu0 0
    %299 = vmatpush1.bf16.msra.mxu0 %v133
    %300 = vmatprep.subr.bf16.mxu0 0
    %301 = vmatpush1.bf16.msra.mxu0 %v159
    %302 = vmatprep.subr.bf16.mxu0 0
    %303 = vmatpush1.bf16.msra.mxu0 0
    %304 = vmatprep.subr.bf16.mxu0 0
    %305 = vmatpush1.bf16.msra.mxu0 0
    %306 = vmatprep.subr.bf16.mxu0 0
    %307 = vmatpush1.bf16.msra.mxu0 0
    %308 = vmatprep.subr.bf16.mxu0 0
    %309 = vmatpush1.bf16.msra.mxu0 0
    %310 = vmatprep.subr.bf16.mxu0 0
    %311 = vmatpush1.bf16.msra.mxu0 0
    %312 = vmatprep.subr.bf16.mxu0 0
    %313 = vmatpush1.bf16.msra.mxu0 0
    %314 = vmatprep.mubr.bf16.mxu0 %v271
    %315 = vmatmul.mubr.bf16.gmra.mrb[0].mxu0 %v258
    %v316 = vpop.f32.mrb[0].mxu0
    %v317 = vadd.f32 0.0, %v316
    %v318 = vpop.f32.mrb[0].mxu0
    %v319 = vpop.f32.mrb[0].mxu0
    %v320 = vadd.f32 0.0, %v319
    %v321 = vpop.f32.mrb[0].mxu0
    %322 = vmatprep.mubr.bf16.mxu0 %v274
    %323 = vmatmul.mubr.bf16.gmra.mrb[0].mxu0 %v260
    %v324 = vpop.f32.mrb[0].mxu0
    %v325 = vadd.f32 0.0, %v324
    %v326 = vpop.f32.mrb[0].mxu0
    %v327 = vpop.f32.mrb[0].mxu0
    %v328 = vadd.f32 0.0, %v327
    %v329 = vpop.f32.mrb[0].mxu0
    %330 = vmatprep.mubr.bf16.mxu0 %v277
    %331 = vmatmul.mubr.bf16.gmra.mrb[0].mxu0 %v262
    %v332 = vpop.f32.mrb[0].mxu0
    %v333 = vadd.f32 0.0, %v332
    %v334 = vpop.f32.mrb[0].mxu0
    %v335 = vpop.f32.mrb[0].mxu0
    %v336 = vadd.f32 0.0, %v335
    %v337 = vpop.f32.mrb[0].mxu0
    %338 = vmatprep.mubr.bf16.mxu0 %v280
    %339 = vmatmul.mubr.bf16.gmra.mrb[0].mxu0 %v264
    %v340 = vpop.f32.mrb[0].mxu0
    %v341 = vadd.f32 0.0, %v340
    %v342 = vpop.f32.mrb[0].mxu0
    %v343 = vpop.f32.mrb[0].mxu0
    %v344 = vadd.f32 0.0, %v343
    %v345 = vpop.f32.mrb[0].mxu0
    %346 = vdwg.mxu0
    %v347 = vmax.f32 %v196, %v317
    %v348 = vmax.f32 %v199, %v320
    %v349 = vmax.f32 %v204, %v325
    %v350 = vmax.f32 %v207, %v328
    %v351 = vmax.f32 %v212, %v333
    %v352 = vmax.f32 %v215, %v336
    %v353 = vmax.f32 %v220, %v341
    %v354 = vmax.f32 %v223, %v344
    %v355 = vld [vmem:[%s2] sm:$0xff]
    %v356 = vld [vmem:[%s2 + $0x8] sm:$0xff]
    %v357 = vld [vmem:[%s2 + $0x10] sm:$0xff]
    %v358 = vld [vmem:[%s2 + $0x18] sm:$0xff]
    %v359 = vld [vmem:[%s2 + $0x20] sm:$0xff]
    %v360 = vld [vmem:[%s2 + $0x28] sm:$0xff]
    %v361 = vld [vmem:[%s2 + $0x30] sm:$0xff]
    %v362 = vld [vmem:[%s2 + $0x38] sm:$0xff]
    %v371 = vunpack.c.l.b16 %v355
    %v372 = vunpack.c.h.b16 %v355
    %v373 = vunpack.c.l.b16 %v356
    %v374 = vunpack.c.h.b16 %v356
    %v375 = vunpack.c.l.b16 %v357
    %v376 = vunpack.c.h.b16 %v357
    %v377 = vunpack.c.l.b16 %v358
    %v378 = vunpack.c.h.b16 %v358
    %v379 = vunpack.c.l.b16 %v359
    %v380 = vunpack.c.h.b16 %v359
    %v381 = vunpack.c.l.b16 %v360
    %v382 = vunpack.c.h.b16 %v360
    %v383 = vunpack.c.l.b16 %v361
    %v384 = vunpack.c.h.b16 %v361
    %v385 = vunpack.c.l.b16 %v362
    %v386 = vunpack.c.h.b16 %v362
    %v387 = vpack.c.b16 %v373, %v371
    %v388 = vpack.c.b16 %v374, %v372
    %v389 = vpack.c.b16 %v377, %v375
    %v390 = vpack.c.b16 %v378, %v376
    %v391 = vpack.c.b16 %v381, %v379
    %v392 = vpack.c.b16 %v382, %v380
    %v393 = vpack.c.b16 %v385, %v383
    %v394 = vpack.c.b16 %v386, %v384
    %v400 = vsel %vm144, %v388, 0
    %v403 = vsel %vm144, %v390, 0
    %v406 = vsel %vm144, %v392, 0
    %v409 = vsel %vm144, %v394, 0
    %411 = vmatprep.subr.bf16.mxu0 0
    %412 = vmatpush1.bf16.msra.mxu0 %v125
    %413 = vmatprep.subr.bf16.mxu0 0
    %414 = vmatpush1.bf16.msra.mxu0 %v126
    %415 = vmatprep.subr.bf16.mxu0 0
    %416 = vmatpush1.bf16.msra.mxu0 %v127
    %417 = vmatprep.subr.bf16.mxu0 0
    %418 = vmatpush1.bf16.msra.mxu0 %v128
    %419 = vmatprep.subr.bf16.mxu0 0
    %420 = vmatpush1.bf16.msra.mxu0 %v129
    %421 = vmatprep.subr.bf16.mxu0 0
    %422 = vmatpush1.bf16.msra.mxu0 %v130
    %423 = vmatprep.subr.bf16.mxu0 0
    %424 = vmatpush1.bf16.msra.mxu0 %v131
    %425 = vmatprep.subr.bf16.mxu0 0
    %426 = vmatpush1.bf16.msra.mxu0 %v132
    %427 = vmatprep.subr.bf16.mxu0 0
    %428 = vmatpush1.bf16.msra.mxu0 %v133
    %429 = vmatprep.subr.bf16.mxu0 0
    %430 = vmatpush1.bf16.msra.mxu0 %v159
    %431 = vmatprep.subr.bf16.mxu0 0
    %432 = vmatpush1.bf16.msra.mxu0 0
    %433 = vmatprep.subr.bf16.mxu0 0
    %434 = vmatpush1.bf16.msra.mxu0 0
    %435 = vmatprep.subr.bf16.mxu0 0
    %436 = vmatpush1.bf16.msra.mxu0 0
    %437 = vmatprep.subr.bf16.mxu0 0
    %438 = vmatpush1.bf16.msra.mxu0 0
    %439 = vmatprep.subr.bf16.mxu0 0
    %440 = vmatpush1.bf16.msra.mxu0 0
    %441 = vmatprep.subr.bf16.mxu0 0
    %442 = vmatpush1.bf16.msra.mxu0 0
    %443 = vmatprep.mubr.bf16.mxu0 %v400
    %444 = vmatmul.mubr.bf16.gmra.mrb[0].mxu0 %v387
    %v445 = vpop.f32.mrb[0].mxu0
    %v446 = vadd.f32 0.0, %v445
    %v447 = vpop.f32.mrb[0].mxu0
    %v448 = vpop.f32.mrb[0].mxu0
    %v449 = vadd.f32 0.0, %v448
    %v450 = vpop.f32.mrb[0].mxu0
    %451 = vmatprep.mubr.bf16.mxu0 %v403
    %452 = vmatmul.mubr.bf16.gmra.mrb[0].mxu0 %v389
    %v453 = vpop.f32.mrb[0].mxu0
    %v454 = vadd.f32 0.0, %v453
    %v455 = vpop.f32.mrb[0].mxu0
    %v456 = vpop.f32.mrb[0].mxu0
    %v457 = vadd.f32 0.0, %v456
    %v458 = vpop.f32.mrb[0].mxu0
    %459 = vmatprep.mubr.bf16.mxu0 %v406
    %460 = vmatmul.mubr.bf16.gmra.mrb[0].mxu0 %v391
    %v461 = vpop.f32.mrb[0].mxu0
    %v462 = vadd.f32 0.0, %v461
    %v463 = vpop.f32.mrb[0].mxu0
    %v464 = vpop.f32.mrb[0].mxu0
    %v465 = vadd.f32 0.0, %v464
    %v466 = vpop.f32.mrb[0].mxu0
    %467 = vmatprep.mubr.bf16.mxu0 %v409
    %468 = vmatmul.mubr.bf16.gmra.mrb[0].mxu0 %v393
    %v469 = vpop.f32.mrb[0].mxu0
    %v470 = vadd.f32 0.0, %v469
    %v471 = vpop.f32.mrb[0].mxu0
    %v472 = vpop.f32.mrb[0].mxu0
    %v473 = vadd.f32 0.0, %v472
    %v474 = vpop.f32.mrb[0].mxu0
    %475 = vdwg.mxu0
    %v476 = vmax.f32 %v347, %v446
    %v477 = vmax.f32 %v348, %v449
    %v478 = vmax.f32 %v349, %v454
    %v479 = vmax.f32 %v350, %v457
    %v480 = vmax.f32 %v351, %v462
    %v481 = vmax.f32 %v352, %v465
    %v482 = vmax.f32 %v353, %v470
    %v483 = vmax.f32 %v354, %v473
    %v484 = vld [vmem:[%s3] sm:$0xff]
    %v485 = vld [vmem:[%s3 + $0x8] sm:$0xff]
    %v486 = vld [vmem:[%s3 + $0x10] sm:$0xff]
    %v487 = vld [vmem:[%s3 + $0x18] sm:$0xff]
    %v488 = vld [vmem:[%s3 + $0x20] sm:$0xff]
    %v489 = vld [vmem:[%s3 + $0x28] sm:$0xff]
    %v490 = vld [vmem:[%s3 + $0x30] sm:$0xff]
    %v491 = vld [vmem:[%s3 + $0x38] sm:$0xff]
    %v500 = vunpack.c.l.b16 %v484
    %v501 = vunpack.c.h.b16 %v484
    %v502 = vunpack.c.l.b16 %v485
    %v503 = vunpack.c.h.b16 %v485
    %v504 = vunpack.c.l.b16 %v486
    %v505 = vunpack.c.h.b16 %v486
    %v506 = vunpack.c.l.b16 %v487
    %v507 = vunpack.c.h.b16 %v487
    %v508 = vunpack.c.l.b16 %v488
    %v509 = vunpack.c.h.b16 %v488
    %v510 = vunpack.c.l.b16 %v489
    %v511 = vunpack.c.h.b16 %v489
    %v512 = vunpack.c.l.b16 %v490
    %v513 = vunpack.c.h.b16 %v490
    %v514 = vunpack.c.l.b16 %v491
    %v515 = vunpack.c.h.b16 %v491
    %v516 = vpack.c.b16 %v502, %v500
    %v517 = vpack.c.b16 %v503, %v501
    %v518 = vpack.c.b16 %v506, %v504
    %v519 = vpack.c.b16 %v507, %v505
    %v520 = vpack.c.b16 %v510, %v508
    %v521 = vpack.c.b16 %v511, %v509
    %v522 = vpack.c.b16 %v514, %v512
    %v523 = vpack.c.b16 %v515, %v513
    %v529 = vsel %vm144, %v517, 0
    %v532 = vsel %vm144, %v519, 0
    %v535 = vsel %vm144, %v521, 0
    %v538 = vsel %vm144, %v523, 0
    %540 = vmatprep.subr.bf16.mxu0 0
    %541 = vmatpush1.bf16.msra.mxu0 %v125
    %542 = vmatprep.subr.bf16.mxu0 0
    %543 = vmatpush1.bf16.msra.mxu0 %v126
    %544 = vmatprep.subr.bf16.mxu0 0
    %545 = vmatpush1.bf16.msra.mxu0 %v127
    %546 = vmatprep.subr.bf16.mxu0 0
    %547 = vmatpush1.bf16.msra.mxu0 %v128
    %548 = vmatprep.subr.bf16.mxu0 0
    %549 = vmatpush1.bf16.msra.mxu0 %v129
    %550 = vmatprep.subr.bf16.mxu0 0
    %551 = vmatpush1.bf16.msra.mxu0 %v130
    %552 = vmatprep.subr.bf16.mxu0 0
    %553 = vmatpush1.bf16.msra.mxu0 %v131
    %554 = vmatprep.subr.bf16.mxu0 0
    %555 = vmatpush1.bf16.msra.mxu0 %v132
    %556 = vmatprep.subr.bf16.mxu0 0
    %557 = vmatpush1.bf16.msra.mxu0 %v133
    %558 = vmatprep.subr.bf16.mxu0 0
    %559 = vmatpush1.bf16.msra.mxu0 %v159
    %560 = vmatprep.subr.bf16.mxu0 0
    %561 = vmatpush1.bf16.msra.mxu0 0
    %562 = vmatprep.subr.bf16.mxu0 0
    %563 = vmatpush1.bf16.msra.mxu0 0
    %564 = vmatprep.subr.bf16.mxu0 0
    %565 = vmatpush1.bf16.msra.mxu0 0
    %566 = vmatprep.subr.bf16.mxu0 0
    %567 = vmatpush1.bf16.msra.mxu0 0
    %568 = vmatprep.subr.bf16.mxu0 0
    %569 = vmatpush1.bf16.msra.mxu0 0
    %570 = vmatprep.subr.bf16.mxu0 0
    %571 = vmatpush1.bf16.msra.mxu0 0
    %572 = vmatprep.mubr.bf16.mxu0 %v529
    %573 = vmatmul.mubr.bf16.gmra.mrb[0].mxu0 %v516
    %v574 = vpop.f32.mrb[0].mxu0
    %v575 = vadd.f32 0.0, %v574
    %v576 = vpop.f32.mrb[0].mxu0
    %v577 = vpop.f32.mrb[0].mxu0
    %v578 = vadd.f32 0.0, %v577
    %v579 = vpop.f32.mrb[0].mxu0
    %580 = vmatprep.mubr.bf16.mxu0 %v532
    %581 = vmatmul.mubr.bf16.gmra.mrb[0].mxu0 %v518
    %v582 = vpop.f32.mrb[0].mxu0
    %v583 = vadd.f32 0.0, %v582
    %v584 = vpop.f32.mrb[0].mxu0
    %v585 = vpop.f32.mrb[0].mxu0
    %v586 = vadd.f32 0.0, %v585
    %v587 = vpop.f32.mrb[0].mxu0
    %588 = vmatprep.mubr.bf16.mxu0 %v535
    %589 = vmatmul.mubr.bf16.gmra.mrb[0].mxu0 %v520
    %v590 = vpop.f32.mrb[0].mxu0
    %v591 = vadd.f32 0.0, %v590
    %v592 = vpop.f32.mrb[0].mxu0
    %v593 = vpop.f32.mrb[0].mxu0
    %v594 = vadd.f32 0.0, %v593
    %v595 = vpop.f32.mrb[0].mxu0
    %596 = vmatprep.mubr.bf16.mxu0 %v538
    %597 = vmatmul.mubr.bf16.gmra.mrb[0].mxu0 %v522
    %v598 = vpop.f32.mrb[0].mxu0
    %v599 = vadd.f32 0.0, %v598
    %v600 = vpop.f32.mrb[0].mxu0
    %v601 = vpop.f32.mrb[0].mxu0
    %v602 = vadd.f32 0.0, %v601
    %v603 = vpop.f32.mrb[0].mxu0
    %604 = vdwg.mxu0
    %v605 = vmax.f32 %v476, %v575
    %v606 = vmax.f32 %v477, %v578
    %v607 = vmax.f32 %v478, %v583
    %v608 = vmax.f32 %v479, %v586
    %v609 = vmax.f32 %v480, %v591
    %v610 = vmax.f32 %v481, %v594
    %v611 = vmax.f32 %v482, %v599
    %v612 = vmax.f32 %v483, %v602
    %v613 = vld [vmem:[%s5] sm:$0x1]
    %v615 = vlaneseq
    %v616 = vshrl.u32 %v615, 7
    %v617 = vsub.s32 0, %v616
    %v618 = vrot.slane %v613, %v617
    %v620 = vadd.f32 %v605, %v618
    %v621 = vadd.f32 %v606, %v618
    %v622 = vadd.f32 %v607, %v618
    %v623 = vadd.f32 %v608, %v618
    %v624 = vadd.f32 %v609, %v618
    %v625 = vadd.f32 %v610, %v618
    %v626 = vadd.f32 %v611, %v618
    %v627 = vadd.f32 %v612, %v618
    %v628 = vmax.f32 %v620, 0.0
    %v629 = vmax.f32 %v621, 0.0
    %v630 = vmax.f32 %v622, 0.0
    %v631 = vmax.f32 %v623, 0.0
    %v632 = vmax.f32 %v624, 0.0
    %v633 = vmax.f32 %v625, 0.0
    %v634 = vmax.f32 %v626, 0.0
    %v635 = vmax.f32 %v627, 0.0
    %v636 = vpack.c.bf16 %v629, %v628
    %v637 = vpack.c.bf16 %v631, %v630
    %v638 = vpack.c.bf16 %v633, %v632
    %v639 = vpack.c.bf16 %v635, %v634
    %v644 = vunpack.c.l.b16 %v636
    %v645 = vunpack.c.h.b16 %v636
    %v646 = vunpack.c.l.b16 %v637
    %v647 = vunpack.c.h.b16 %v637
    %v648 = vunpack.c.l.b16 %v638
    %v649 = vunpack.c.h.b16 %v638
    %v650 = vunpack.c.l.b16 %v639
    %v651 = vunpack.c.h.b16 %v639
    %v652 = vpack.c.b16 %v644, %v644
    %v653 = vpack.c.b16 %v645, %v645
    %v654 = vpack.c.b16 %v646, %v646
    %v655 = vpack.c.b16 %v647, %v647
    %v656 = vpack.c.b16 %v648, %v648
    %v657 = vpack.c.b16 %v649, %v649
    %v658 = vpack.c.b16 %v650, %v650
    %v659 = vpack.c.b16 %v651, %v651
    %vm668 = vcmask 125952
    %669 = vst.msk [vmem:[#allocation2] sm:$0xf] %vm668, %v652
    %670 = vst.msk [vmem:[#allocation2 + $0x4] sm:$0xf] %vm668, %v653
    %671 = vst.msk [vmem:[#allocation2 + $0x8] sm:$0xf] %vm668, %v654
    %672 = vst.msk [vmem:[#allocation2 + $0xc] sm:$0xf] %vm668, %v655
    %673 = vst.msk [vmem:[#allocation2 + $0x10] sm:$0xf] %vm668, %v656
    %674 = vst.msk [vmem:[#allocation2 + $0x14] sm:$0xf] %vm668, %v657
    %675 = vst.msk [vmem:[#allocation2 + $0x18] sm:$0xf] %vm668, %v658
    %676 = vst.msk [vmem:[#allocation2 + $0x1c] sm:$0xf] %vm668, %v659
    // Predicated region
    $region26: #{cnn_cifar_forward.4} parent=1 // pred_check
      _
    $region27: #{cnn_cifar_forward.4} parent=1 // pred_check_branch
      %678 = sbr.rel (0) target = $region29
    $region28: #{cnn_cifar_forward.4} parent=1 // pred_region
      // Predicated region
      $region30: #{cnn_cifar_forward.4} parent=28 // pred_check
        _
      $region31: #{cnn_cifar_forward.4} parent=28 // pred_check_branch
        %680 = sbr.rel (0) target = $region33
      $region32: #{cnn_cifar_forward.4} parent=28 // pred_region
        // Predicated region
        $region34: #{cnn_cifar_forward.4} parent=32 // pred_check
          _
        $region35: #{cnn_cifar_forward.4} parent=32 // pred_check_branch
          %682 = sbr.rel target = $region37
        $region36: #{cnn_cifar_forward.4} parent=32 // pred_region
          // Predicated region
          $region49: #{cnn_cifar_forward.4} parent=36 // pred_check
            _
          $region50: #{cnn_cifar_forward.4} parent=36 // pred_check_branch
            %709 = sbr.rel (0) target = $region52
          $region51: #{cnn_cifar_forward.4} parent=36 // pred_region
            loop: start=0, step=1, limit=1
            $region53: #{cnn_cifar_forward.4} parent=51 // loop_pre_header
              _
            $region54: #{cnn_cifar_forward.4} parent=51 // loop_header
              %s711 = sphi 0, %s715
              %p712 = scmp.ge.s32.totalorder %s711, 1
              %s716 = sphi [#allocation2], [#allocation2]
              %s717 = sphi %s6, %s6
            $region55: #{cnn_cifar_forward.4} parent=51 // loop_header_branch
              %714 = sbr.rel (%p712) target = $region59
            $region56: #{cnn_cifar_forward.4} parent=51 // loop_body
              _
            $region57: #{cnn_cifar_forward.4} parent=51 // loop_footer
              %s715 = sadd.s32 1, %s711
            $region58: #{cnn_cifar_forward.4} parent=51 // loop_footer_branch
              %710 = sbr.rel target = $region54
            $region59: #{cnn_cifar_forward.4} parent=51 // loop_exit
              _
            loop: start=0, step=1, limit=1
            $region60: #{cnn_cifar_forward.4} parent=51 // loop_pre_header
              _
            $region61: #{cnn_cifar_forward.4} parent=51 // loop_header
              %s720 = sphi 0, %s724
              %p721 = scmp.ge.s32.totalorder %s720, 1
              %s725 = sphi [#allocation2], [#allocation2]
              %s726 = sphi %s6, %s6
            $region62: #{cnn_cifar_forward.4} parent=51 // loop_header_branch
              %723 = sbr.rel (%p721) target = $region66
            $region63: #{cnn_cifar_forward.4} parent=51 // loop_body
              %v727 = vld [vmem:[%s725] sm:$0xf]
              %728 = vst [vmem:[%s726] sm:$0xf] %v727
              %v729 = vld [vmem:[%s725 + $0x4] sm:$0xf]
              %730 = vst [vmem:[%s726 + $0x4] sm:$0xf] %v729
              %v731 = vld [vmem:[%s725 + $0x8] sm:$0xf]
              %732 = vst [vmem:[%s726 + $0x8] sm:$0xf] %v731
              %v733 = vld [vmem:[%s725 + $0xc] sm:$0xf]
              %734 = vst [vmem:[%s726 + $0xc] sm:$0xf] %v733
              %v735 = vld [vmem:[%s725 + $0x10] sm:$0xf]
              %736 = vst [vmem:[%s726 + $0x10] sm:$0xf] %v735
              %v737 = vld [vmem:[%s725 + $0x14] sm:$0xf]
              %738 = vst [vmem:[%s726 + $0x14] sm:$0xf] %v737
              %v739 = vld [vmem:[%s725 + $0x18] sm:$0xf]
              %740 = vst [vmem:[%s726 + $0x18] sm:$0xf] %v739
            $region64: #{cnn_cifar_forward.4} parent=51 // loop_footer
              %s724 = sadd.s32 1, %s720
            $region65: #{cnn_cifar_forward.4} parent=51 // loop_footer_branch
              %719 = sbr.rel target = $region61
            $region66: #{cnn_cifar_forward.4} parent=51 // loop_exit
              _
          $region52: #{cnn_cifar_forward.4} parent=36 // pred_fallthru
            _
        $region37: #{cnn_cifar_forward.4} parent=32 // pred_fallthru
          _
        // Predicated region
        $region38: #{cnn_cifar_forward.4} parent=32 // pred_check
          _
        $region39: #{cnn_cifar_forward.4} parent=32 // pred_check_branch
          %684 = sbr.rel (0) target = $region41
        $region40: #{cnn_cifar_forward.4} parent=32 // pred_region
          loop: start=0, step=1, limit=1
          $region42: #{cnn_cifar_forward.4} parent=40 // loop_pre_header
            _
          $region43: #{cnn_cifar_forward.4} parent=40 // loop_header
            %s687 = sphi 0, %s691
            %p688 = scmp.ge.s32.totalorder %s687, 1
            %s692 = sphi [#allocation2], [#allocation2]
            %s693 = sphi %s6, %s6
          $region44: #{cnn_cifar_forward.4} parent=40 // loop_header_branch
            %690 = sbr.rel (%p688) target = $region48
          $region45: #{cnn_cifar_forward.4} parent=40 // loop_body
            %v694 = vld [vmem:[%s692] sm:$0xf]
            %695 = vst [vmem:[%s693] sm:$0xf] %v694
            %v696 = vld [vmem:[%s692 + $0x4] sm:$0xf]
            %697 = vst [vmem:[%s693 + $0x4] sm:$0xf] %v696
            %v698 = vld [vmem:[%s692 + $0x8] sm:$0xf]
            %699 = vst [vmem:[%s693 + $0x8] sm:$0xf] %v698
            %v700 = vld [vmem:[%s692 + $0xc] sm:$0xf]
            %701 = vst [vmem:[%s693 + $0xc] sm:$0xf] %v700
            %v702 = vld [vmem:[%s692 + $0x10] sm:$0xf]
            %703 = vst [vmem:[%s693 + $0x10] sm:$0xf] %v702
            %v704 = vld [vmem:[%s692 + $0x14] sm:$0xf]
            %705 = vst [vmem:[%s693 + $0x14] sm:$0xf] %v704
            %v706 = vld [vmem:[%s692 + $0x18] sm:$0xf]
            %707 = vst [vmem:[%s693 + $0x18] sm:$0xf] %v706
          $region46: #{cnn_cifar_forward.4} parent=40 // loop_footer
            %s691 = sadd.s32 1, %s687
          $region47: #{cnn_cifar_forward.4} parent=40 // loop_footer_branch
            %686 = sbr.rel target = $region43
          $region48: #{cnn_cifar_forward.4} parent=40 // loop_exit
            _
        $region41: #{cnn_cifar_forward.4} parent=32 // pred_fallthru
          _
      $region33: #{cnn_cifar_forward.4} parent=28 // pred_fallthru
        _
      %741 = vnop
    $region29: #{cnn_cifar_forward.4} parent=1 // pred_fallthru
      _
    // Predicated region
    $region67: #{cnn_cifar_forward.4} parent=1 // pred_check
      _
    $region68: #{cnn_cifar_forward.4} parent=1 // pred_check_branch
      %743 = sbr.rel (0) target = $region70
    $region69: #{cnn_cifar_forward.4} parent=1 // pred_region
      _
    $region70: #{cnn_cifar_forward.4} parent=1 // pred_fallthru
      _

// kernel: cnn_cifar_forward.5
$region0: #{cnn_cifar_forward.5}
  #allocation0 [shape = 'u32[]', space=smem, size = 0x4, offset = 0x4, fixed_abs, tag = 'smem constant byte address 0x4 - core index']
  #allocation1 [shape = 'u32[144,128]{1,0:T(1,128)}', space=vmem, size = 0x12000, scoped, tag = 'internal scratch']
  %s0 = inlined_call_operand.vmem [shape: bf16[2,400], index: 0, kind: input, shape index: {}]
  %s1 = inlined_call_operand.vmem [shape: bf16[400,120], index: 1, kind: input, shape index: {}]
  %s2 = inlined_call_operand.vmem [shape: f32[1,120], index: 2, kind: input, shape index: {}]
  %s3 = inlined_call_operand.vmem [shape: bf16[120,84], index: 3, kind: input, shape index: {}]
  %s4 = inlined_call_operand.vmem [shape: f32[1,84], index: 4, kind: input, shape index: {}]
  %s5 = inlined_call_operand.vmem [shape: bf16[84,10], index: 5, kind: input, shape index: {}]
  %s6 = inlined_call_operand.vmem [shape: f32[1,10], index: 6, kind: input, shape index: {}]
  %s7 = inlined_call_operand.hbm [shape: f32[2,10], index: 7, kind: output, shape index: {}]
  %s8 = sld [smem:[#allocation0]]
  $region38: #{cnn_cifar_forward.5} parent=0
    _
  %s10 = ssub.s32 1, %s8
  %s11 = scalar_select 0, %s10, %s8
  $region1: #{cnn_cifar_forward.5} parent=0
    #allocation2 [shape = 'u8[16384]{0}', space=vmem, size = 0x4000, scoped, tag = 'output window, operand 0, single buffered']
    #allocation3 [shape = 's32[1]{0}', space=sflag, size = 0x4, scoped, tag = 'scoped memory for cnn_cifar_forward.5']
    %12 = vsyncpa [#allocation3], 0
    // Predicated region
    $region2: #{cnn_cifar_forward.5} parent=1 // pred_check
      _
    $region3: #{cnn_cifar_forward.5} parent=1 // pred_check_branch
      %14 = sbr.rel (0) target = $region5
    $region4: #{cnn_cifar_forward.5} parent=1 // pred_region
      _
    $region5: #{cnn_cifar_forward.5} parent=1 // pred_fallthru
      _
    // Predicated region
    $region6: #{cnn_cifar_forward.5} parent=1 // pred_check
      _
    $region7: #{cnn_cifar_forward.5} parent=1 // pred_check_branch
      %16 = sbr.rel (0) target = $region9
    $region8: #{cnn_cifar_forward.5} parent=1 // pred_region
      _
    $region9: #{cnn_cifar_forward.5} parent=1 // pred_fallthru
      _
    // Predicated region
    $region10: #{cnn_cifar_forward.5} parent=1 // pred_check
      _
    $region11: #{cnn_cifar_forward.5} parent=1 // pred_check_branch
      %18 = sbr.rel (0) target = $region13
    $region12: #{cnn_cifar_forward.5} parent=1 // pred_region
      _
    $region13: #{cnn_cifar_forward.5} parent=1 // pred_fallthru
      _
    // Predicated region
    $region14: #{cnn_cifar_forward.5} parent=1 // pred_check
      _
    $region15: #{cnn_cifar_forward.5} parent=1 // pred_check_branch
      %20 = sbr.rel (0) target = $region17
    $region16: #{cnn_cifar_forward.5} parent=1 // pred_region
      _
    $region17: #{cnn_cifar_forward.5} parent=1 // pred_fallthru
      _
    // Predicated region
    $region18: #{cnn_cifar_forward.5} parent=1 // pred_check
      _
    $region19: #{cnn_cifar_forward.5} parent=1 // pred_check_branch
      %22 = sbr.rel (0) target = $region21
    $region20: #{cnn_cifar_forward.5} parent=1 // pred_region
      _
    $region21: #{cnn_cifar_forward.5} parent=1 // pred_fallthru
      _
    // Predicated region
    $region22: #{cnn_cifar_forward.5} parent=1 // pred_check
      _
    $region23: #{cnn_cifar_forward.5} parent=1 // pred_check_branch
      %24 = sbr.rel (0) target = $region25
    $region24: #{cnn_cifar_forward.5} parent=1 // pred_region
      _
    $region25: #{cnn_cifar_forward.5} parent=1 // pred_fallthru
      _
    // Predicated region
    $region26: #{cnn_cifar_forward.5} parent=1 // pred_check
      _
    $region27: #{cnn_cifar_forward.5} parent=1 // pred_check_branch
      %26 = sbr.rel (0) target = $region29
    $region28: #{cnn_cifar_forward.5} parent=1 // pred_region
      _
    $region29: #{cnn_cifar_forward.5} parent=1 // pred_fallthru
      _
    %v28 = vld [vmem:[%s0] sm:$0xf]
    %v29 = vld [vmem:[%s0 + $0x4] sm:$0xf]
    %v30 = vld [vmem:[%s0 + $0x8] sm:$0xf]
    %v31 = vld [vmem:[%s0 + $0xc] sm:$0xf]
    %v32 = vld [vmem:[%s0 + $0x10] sm:$0xf]
    %v33 = vld [vmem:[%s0 + $0x14] sm:$0xf]
    %v34 = vld [vmem:[%s0 + $0x18] sm:$0xf]
    %v35 = vld [vmem:[%s0 + $0x1c] sm:$0xf]
    %v36 = vld [vmem:[%s0 + $0x20] sm:$0xf]
    %v37 = vld [vmem:[%s0 + $0x24] sm:$0xf]
    %v38 = vld [vmem:[%s0 + $0x28] sm:$0xf]
    %v39 = vld [vmem:[%s0 + $0x2c] sm:$0xf]
    %v40 = vld [vmem:[%s0 + $0x30] sm:$0xf]
    %v41 = vld [vmem:[%s0 + $0x34] sm:$0xf]
    %v42 = vld [vmem:[%s0 + $0x38] sm:$0xf]
    %v43 = vld [vmem:[%s0 + $0x3c] sm:$0xf]
    %v44 = vld [vmem:[%s1] sm:$0xf]
    %v45 = vld [vmem:[%s1 + $0x4] sm:$0xf]
    %v46 = vld [vmem:[%s1 + $0x8] sm:$0xf]
    %v47 = vld [vmem:[%s1 + $0xc] sm:$0xf]
    %v48 = vld [vmem:[%s1 + $0x10] sm:$0xf]
    %v49 = vld [vmem:[%s1 + $0x14] sm:$0xf]
    %v50 = vld [vmem:[%s1 + $0x18] sm:$0xf]
    %v51 = vld [vmem:[%s1 + $0x1c] sm:$0xf]
    %v52 = vld [vmem:[%s1 + $0x20] sm:$0xf]
    %v53 = vld [vmem:[%s1 + $0x24] sm:$0xf]
    %v54 = vld [vmem:[%s1 + $0x28] sm:$0xf]
    %v55 = vld [vmem:[%s1 + $0x2c] sm:$0xf]
    %v56 = vld [vmem:[%s1 + $0x30] sm:$0xf]
    %v57 = vld [vmem:[%s1 + $0x34] sm:$0xf]
    %v58 = vld [vmem:[%s1 + $0x38] sm:$0xf]
    %v59 = vld [vmem:[%s1 + $0x3c] sm:$0xf]
    %v60 = vld [vmem:[%s1 + $0x40] sm:$0xf]
    %v61 = vld [vmem:[%s1 + $0x44] sm:$0xf]
    %v62 = vld [vmem:[%s1 + $0x48] sm:$0xf]
    %v63 = vld [vmem:[%s1 + $0x4c] sm:$0xf]
    %v64 = vld [vmem:[%s1 + $0x50] sm:$0xf]
    %v65 = vld [vmem:[%s1 + $0x54] sm:$0xf]
    %v66 = vld [vmem:[%s1 + $0x58] sm:$0xf]
    %v67 = vld [vmem:[%s1 + $0x5c] sm:$0xf]
    %v68 = vld [vmem:[%s1 + $0x60] sm:$0xf]
    %v69 = vld [vmem:[%s1 + $0x64] sm:$0xf]
    %v70 = vld [vmem:[%s1 + $0x68] sm:$0xf]
    %v71 = vld [vmem:[%s1 + $0x6c] sm:$0xf]
    %v72 = vld [vmem:[%s1 + $0x70] sm:$0xf]
    %v73 = vld [vmem:[%s1 + $0x74] sm:$0xf]
    %v74 = vld [vmem:[%s1 + $0x78] sm:$0xf]
    %v75 = vld [vmem:[%s1 + $0x7c] sm:$0xf]
    %v76 = vld [vmem:[%s1 + $0x80] sm:$0xf]
    %v77 = vld [vmem:[%s1 + $0x84] sm:$0xf]
    %v78 = vld [vmem:[%s1 + $0x88] sm:$0xf]
    %v79 = vld [vmem:[%s1 + $0x8c] sm:$0xf]
    %v80 = vld [vmem:[%s1 + $0x90] sm:$0xf]
    %v81 = vld [vmem:[%s1 + $0x94] sm:$0xf]
    %v82 = vld [vmem:[%s1 + $0x98] sm:$0xf]
    %v83 = vld [vmem:[%s1 + $0x9c] sm:$0xf]
    %v84 = vld [vmem:[%s1 + $0xa0] sm:$0xf]
    %v85 = vld [vmem:[%s1 + $0xa4] sm:$0xf]
    %v86 = vld [vmem:[%s1 + $0xa8] sm:$0xf]
    %v87 = vld [vmem:[%s1 + $0xac] sm:$0xf]
    %v88 = vld [vmem:[%s1 + $0xb0] sm:$0xf]
    %v89 = vld [vmem:[%s1 + $0xb4] sm:$0xf]
    %v90 = vld [vmem:[%s1 + $0xb8] sm:$0xf]
    %v91 = vld [vmem:[%s1 + $0xbc] sm:$0xf]
    %v92 = vld [vmem:[%s1 + $0xc0] sm:$0xf]
    %v93 = vld [vmem:[%s1 + $0xc4] sm:$0xf]
    %v94 = vld [vmem:[%s2] sm:$0x1]
    %v96 = vlaneseq
    %v97 = vshrl.u32 %v96, 7
    %v98 = vsub.s32 0, %v97
    %v99 = vrot.slane %v94, %v98
    %v117 = vcombine.low %v28, %v29
    %v118 = vcombine.low %v30, %v31
    %v119 = vcombine.low %v32, %v33
    %v120 = vcombine.low %v34, %v35
    %v122 = vunpack.c.l.s4 1966171168
    %v123 = vunpack.c.0.s8 %v122
    %v124 = vlaneseq
    %v125 = vshrl.u32 %v124, 7
    %v126 = vsub.s32 %v123, %v125
    %v127 = vrot.slane %v117, %v126
    %v129 = vunpack.c.l.s4 1966171168
    %v130 = vunpack.c.0.s8 %v129
    %v131 = vlaneseq
    %v132 = vshrl.u32 %v131, 7
    %v133 = vsub.s32 %v130, %v132
    %v134 = vrot.slane %v118, %v133
    %v136 = vunpack.c.l.s4 1966171168
    %v137 = vunpack.c.0.s8 %v136
    %v138 = vlaneseq
    %v139 = vshrl.u32 %v138, 7
    %v140 = vsub.s32 %v137, %v139
    %v141 = vrot.slane %v119, %v140
    %v143 = vunpack.c.l.s4 1966171168
    %v144 = vunpack.c.0.s8 %v143
    %v145 = vlaneseq
    %v146 = vshrl.u32 %v145, 7
    %v147 = vsub.s32 %v144, %v146
    %v148 = vrot.slane %v120, %v147
    %v149 = vcombine.low %v127, %v134
    %v150 = vcombine.high %v127, %v134
    %v151 = vcombine.low %v141, %v148
    %v152 = vcombine.high %v141, %v148
    %v154 = vunpack.c.l.s4 1966171168
    %v155 = vunpack.c.0.s8 %v154
    %v156 = vlaneseq
    %v157 = vshrl.u32 %v156, 7
    %v158 = vsub.s32 %v155, %v157
    %v159 = vrot.slane %v149, %v158
    %v161 = vunpack.c.l.s4 1966171168
    %v162 = vunpack.c.0.s8 %v161
    %v163 = vlaneseq
    %v164 = vshrl.u32 %v163, 7
    %v165 = vsub.s32 %v162, %v164
    %v166 = vrot.slane %v150, %v165
    %v168 = vunpack.c.l.s4 1966171168
    %v169 = vunpack.c.0.s8 %v168
    %v170 = vlaneseq
    %v171 = vshrl.u32 %v170, 7
    %v172 = vsub.s32 %v169, %v171
    %v173 = vrot.slane %v151, %v172
    %v175 = vunpack.c.l.s4 1966171168
    %v176 = vunpack.c.0.s8 %v175
    %v177 = vlaneseq
    %v178 = vshrl.u32 %v177, 7
    %v179 = vsub.s32 %v176, %v178
    %v180 = vrot.slane %v152, %v179
    %v181 = vcombine.low %v159, %v173
    %v182 = vcombine.high %v159, %v173
    %v183 = vcombine.low %v166, %v180
    %v184 = vcombine.high %v166, %v180
    %v185 = vcombine.low %v36, %v37
    %v186 = vcombine.low %v38, %v39
    %v187 = vcombine.low %v40, %v41
    %v188 = vcombine.low %v42, %v43
    %v190 = vunpack.c.l.s4 1966171168
    %v191 = vunpack.c.0.s8 %v190
    %v192 = vlaneseq
    %v193 = vshrl.u32 %v192, 7
    %v194 = vsub.s32 %v191, %v193
    %v195 = vrot.slane %v185, %v194
    %v197 = vunpack.c.l.s4 1966171168
    %v198 = vunpack.c.0.s8 %v197
    %v199 = vlaneseq
    %v200 = vshrl.u32 %v199, 7
    %v201 = vsub.s32 %v198, %v200
    %v202 = vrot.slane %v186, %v201
    %v204 = vunpack.c.l.s4 1966171168
    %v205 = vunpack.c.0.s8 %v204
    %v206 = vlaneseq
    %v207 = vshrl.u32 %v206, 7
    %v208 = vsub.s32 %v205, %v207
    %v209 = vrot.slane %v187, %v208
    %v211 = vunpack.c.l.s4 1966171168
    %v212 = vunpack.c.0.s8 %v211
    %v213 = vlaneseq
    %v214 = vshrl.u32 %v213, 7
    %v215 = vsub.s32 %v212, %v214
    %v216 = vrot.slane %v188, %v215
    %v217 = vcombine.low %v195, %v202
    %v218 = vcombine.high %v195, %v202
    %v219 = vcombine.low %v209, %v216
    %v220 = vcombine.high %v209, %v216
    %v222 = vunpack.c.l.s4 1966171168
    %v223 = vunpack.c.0.s8 %v222
    %v224 = vlaneseq
    %v225 = vshrl.u32 %v224, 7
    %v226 = vsub.s32 %v223, %v225
    %v227 = vrot.slane %v217, %v226
    %v229 = vunpack.c.l.s4 1966171168
    %v230 = vunpack.c.0.s8 %v229
    %v231 = vlaneseq
    %v232 = vshrl.u32 %v231, 7
    %v233 = vsub.s32 %v230, %v232
    %v234 = vrot.slane %v218, %v233
    %v236 = vunpack.c.l.s4 1966171168
    %v237 = vunpack.c.0.s8 %v236
    %v238 = vlaneseq
    %v239 = vshrl.u32 %v238, 7
    %v240 = vsub.s32 %v237, %v239
    %v241 = vrot.slane %v219, %v240
    %v243 = vunpack.c.l.s4 1966171168
    %v244 = vunpack.c.0.s8 %v243
    %v245 = vlaneseq
    %v246 = vshrl.u32 %v245, 7
    %v247 = vsub.s32 %v244, %v246
    %v248 = vrot.slane %v220, %v247
    %v249 = vcombine.low %v227, %v241
    %v250 = vcombine.high %v227, %v241
    %v251 = vcombine.low %v234, %v248
    %v252 = vcombine.high %v234, %v248
    %v309 = vunpack.c.l.b16 %v44
    %v310 = vunpack.c.l.b16 %v45
    %v311 = vunpack.c.l.b16 %v46
    %v312 = vunpack.c.l.b16 %v47
    %v313 = vunpack.c.l.b16 %v48
    %v314 = vunpack.c.l.b16 %v49
    %v315 = vunpack.c.l.b16 %v50
    %v316 = vunpack.c.l.b16 %v51
    %v317 = vunpack.c.l.b16 %v52
    %v318 = vunpack.c.l.b16 %v53
    %v319 = vunpack.c.l.b16 %v54
    %v320 = vunpack.c.l.b16 %v55
    %v321 = vunpack.c.l.b16 %v56
    %v322 = vunpack.c.l.b16 %v57
    %v323 = vunpack.c.l.b16 %v58
    %v324 = vunpack.c.l.b16 %v59
    %v325 = vunpack.c.l.b16 %v60
    %v326 = vunpack.c.l.b16 %v61
    %v327 = vunpack.c.l.b16 %v62
    %v328 = vunpack.c.l.b16 %v63
    %v329 = vunpack.c.l.b16 %v64
    %v330 = vunpack.c.l.b16 %v65
    %v331 = vunpack.c.l.b16 %v66
    %v332 = vunpack.c.l.b16 %v67
    %v333 = vunpack.c.l.b16 %v68
    %v334 = vunpack.c.l.b16 %v69
    %v335 = vunpack.c.l.b16 %v70
    %v336 = vunpack.c.l.b16 %v71
    %v337 = vunpack.c.l.b16 %v72
    %v338 = vunpack.c.l.b16 %v73
    %v339 = vunpack.c.l.b16 %v74
    %v340 = vunpack.c.l.b16 %v75
    %v341 = vunpack.c.l.b16 %v76
    %v342 = vunpack.c.l.b16 %v77
    %v343 = vunpack.c.l.b16 %v78
    %v344 = vunpack.c.l.b16 %v79
    %v345 = vunpack.c.l.b16 %v80
    %v346 = vunpack.c.l.b16 %v81
    %v347 = vunpack.c.l.b16 %v82
    %v348 = vunpack.c.l.b16 %v83
    %v349 = vunpack.c.l.b16 %v84
    %v350 = vunpack.c.l.b16 %v85
    %v351 = vunpack.c.l.b16 %v86
    %v352 = vunpack.c.l.b16 %v87
    %v353 = vunpack.c.l.b16 %v88
    %v354 = vunpack.c.l.b16 %v89
    %v355 = vunpack.c.l.b16 %v90
    %v356 = vunpack.c.l.b16 %v91
    %v357 = vunpack.c.l.b16 %v92
    %v358 = vunpack.c.l.b16 %v93
    %v359 = vpack.c.b16 %v310, %v309
    %v360 = vpack.c.b16 %v312, %v311
    %v361 = vpack.c.b16 %v314, %v313
    %v362 = vpack.c.b16 %v316, %v315
    %v363 = vpack.c.b16 %v318, %v317
    %v364 = vpack.c.b16 %v320, %v319
    %v365 = vpack.c.b16 %v322, %v321
    %v366 = vpack.c.b16 %v324, %v323
    %v367 = vpack.c.b16 %v326, %v325
    %v368 = vpack.c.b16 %v328, %v327
    %v369 = vpack.c.b16 %v330, %v329
    %v370 = vpack.c.b16 %v332, %v331
    %v371 = vpack.c.b16 %v334, %v333
    %v372 = vpack.c.b16 %v336, %v335
    %v373 = vpack.c.b16 %v338, %v337
    %v374 = vpack.c.b16 %v340, %v339
    %v375 = vpack.c.b16 %v342, %v341
    %v376 = vpack.c.b16 %v344, %v343
    %v377 = vpack.c.b16 %v346, %v345
    %v378 = vpack.c.b16 %v348, %v347
    %v379 = vpack.c.b16 %v350, %v349
    %v380 = vpack.c.b16 %v352, %v351
    %v381 = vpack.c.b16 %v354, %v353
    %v382 = vpack.c.b16 %v356, %v355
    %v383 = vpack.c.b16 %v358, %v357
    %vm409 = vcmask 130048
    %v411 = vsel %vm409, %v184, 0
    %v414 = vsel %vm409, %v252, 0
    %416 = vmatprep.subr.bf16.mxu0 0
    %417 = vmatpush1.bf16.msra.mxu0 %v359
    %418 = vmatprep.subr.bf16.mxu0 0
    %419 = vmatpush1.bf16.msra.mxu0 %v360
    %420 = vmatprep.subr.bf16.mxu0 0
    %421 = vmatpush1.bf16.msra.mxu0 %v361
    %422 = vmatprep.subr.bf16.mxu0 0
    %423 = vmatpush1.bf16.msra.mxu0 %v362
    %424 = vmatprep.subr.bf16.mxu0 0
    %425 = vmatpush1.bf16.msra.mxu0 %v363
    %426 = vmatprep.subr.bf16.mxu0 0
    %427 = vmatpush1.bf16.msra.mxu0 %v364
    %428 = vmatprep.subr.bf16.mxu0 0
    %429 = vmatpush1.bf16.msra.mxu0 %v365
    %430 = vmatprep.subr.bf16.mxu0 0
    %431 = vmatpush1.bf16.msra.mxu0 %v366
    %432 = vmatprep.subr.bf16.mxu0 0
    %433 = vmatpush1.bf16.msra.mxu0 %v367
    %434 = vmatprep.subr.bf16.mxu0 0
    %435 = vmatpush1.bf16.msra.mxu0 %v368
    %436 = vmatprep.subr.bf16.mxu0 0
    %437 = vmatpush1.bf16.msra.mxu0 %v369
    %438 = vmatprep.subr.bf16.mxu0 0
    %439 = vmatpush1.bf16.msra.mxu0 %v370
    %440 = vmatprep.subr.bf16.mxu0 0
    %441 = vmatpush1.bf16.msra.mxu0 %v371
    %442 = vmatprep.subr.bf16.mxu0 0
    %443 = vmatpush1.bf16.msra.mxu0 %v372
    %444 = vmatprep.subr.bf16.mxu0 0
    %445 = vmatpush1.bf16.msra.mxu0 %v373
    %446 = vmatprep.subr.bf16.mxu0 0
    %447 = vmatpush1.bf16.msra.mxu0 %v374
    %448 = vmatprep.mubr.bf16.mxu0 %v183
    %449 = vmatmul.mubr.bf16.gmra.mrb[0].mxu0 %v181
    %v450 = vpop.f32.mrb[0].mxu0
    %v451 = vadd.f32 %v99, %v450
    %v452 = vpop.f32.mrb[0].mxu0
    %v453 = vpop.f32.mrb[0].mxu0
    %v454 = vadd.f32 %v99, %v453
    %v455 = vpop.f32.mrb[0].mxu0
    %456 = vmatprep.mubr.bf16.mxu0 %v251
    %457 = vmatmul.mubr.bf16.gmra.mrb[0].mxu0 %v249
    %v458 = vpop.f32.mrb[0].mxu0
    %v459 = vadd.f32 %v99, %v458
    %v460 = vpop.f32.mrb[0].mxu0
    %v461 = vpop.f32.mrb[0].mxu0
    %v462 = vadd.f32 %v99, %v461
    %v463 = vpop.f32.mrb[0].mxu0
    %464 = vdwg.mxu0
    %465 = vmatprep.subr.bf16.mxu0 0
    %466 = vmatpush1.bf16.msra.mxu0 %v375
    %467 = vmatprep.subr.bf16.mxu0 0
    %468 = vmatpush1.bf16.msra.mxu0 %v376
    %469 = vmatprep.subr.bf16.mxu0 0
    %470 = vmatpush1.bf16.msra.mxu0 %v377
    %471 = vmatprep.subr.bf16.mxu0 0
    %472 = vmatpush1.bf16.msra.mxu0 %v378
    %473 = vmatprep.subr.bf16.mxu0 0
    %474 = vmatpush1.bf16.msra.mxu0 %v379
    %475 = vmatprep.subr.bf16.mxu0 0
    %476 = vmatpush1.bf16.msra.mxu0 %v380
    %477 = vmatprep.subr.bf16.mxu0 0
    %478 = vmatpush1.bf16.msra.mxu0 %v381
    %479 = vmatprep.subr.bf16.mxu0 0
    %480 = vmatpush1.bf16.msra.mxu0 %v382
    %481 = vmatprep.subr.bf16.mxu0 0
    %482 = vmatpush1.bf16.msra.mxu0 %v383
    %483 = vmatprep.subr.bf16.mxu0 0
    %484 = vmatpush1.bf16.msra.mxu0 0
    %485 = vmatprep.subr.bf16.mxu0 0
    %486 = vmatpush1.bf16.msra.mxu0 0
    %487 = vmatprep.subr.bf16.mxu0 0
    %488 = vmatpush1.bf16.msra.mxu0 0
    %489 = vmatprep.subr.bf16.mxu0 0
    %490 = vmatpush1.bf16.msra.mxu0 0
    %491 = vmatprep.subr.bf16.mxu0 0
    %492 = vmatpush1.bf16.msra.mxu0 0
    %493 = vmatprep.subr.bf16.mxu0 0
    %494 = vmatpush1.bf16.msra.mxu0 0
    %495 = vmatprep.subr.bf16.mxu0 0
    %496 = vmatpush1.bf16.msra.mxu0 0
    %497 = vmatprep.mubr.bf16.mxu0 %v411
    %498 = vmatmul.mubr.bf16.gmra.mrb[0].mxu0 %v182
    %v499 = vpop.f32.mrb[0].mxu0
    %v500 = vadd.f32 %v451, %v499
    %v501 = vpop.f32.mrb[0].mxu0
    %v502 = vpop.f32.mrb[0].mxu0
    %v503 = vadd.f32 %v454, %v502
    %v504 = vpop.f32.mrb[0].mxu0
    %505 = vmatprep.mubr.bf16.mxu0 %v414
    %506 = vmatmul.mubr.bf16.gmra.mrb[0].mxu0 %v250
    %v507 = vpop.f32.mrb[0].mxu0
    %v508 = vadd.f32 %v459, %v507
    %v509 = vpop.f32.mrb[0].mxu0
    %v510 = vpop.f32.mrb[0].mxu0
    %v511 = vadd.f32 %v462, %v510
    %v512 = vpop.f32.mrb[0].mxu0
    %513 = vdwg.mxu0
    %v514 = vmax.f32 %v500, 0.0
    %v515 = vmax.f32 %v503, 0.0
    %v516 = vmax.f32 %v508, 0.0
    %v517 = vmax.f32 %v511, 0.0
    %v518 = vpack.c.bf16 %v515, %v514
    %v519 = vpack.c.bf16 %v517, %v516
    %v520 = vld [vmem:[%s3] sm:$0xf]
    %v521 = vld [vmem:[%s3 + $0x4] sm:$0xf]
    %v522 = vld [vmem:[%s3 + $0x8] sm:$0xf]
    %v523 = vld [vmem:[%s3 + $0xc] sm:$0xf]
    %v524 = vld [vmem:[%s3 + $0x10] sm:$0xf]
    %v525 = vld [vmem:[%s3 + $0x14] sm:$0xf]
    %v526 = vld [vmem:[%s3 + $0x18] sm:$0xf]
    %v527 = vld [vmem:[%s3 + $0x1c] sm:$0xf]
    %v528 = vld [vmem:[%s3 + $0x20] sm:$0xf]
    %v529 = vld [vmem:[%s3 + $0x24] sm:$0xf]
    %v530 = vld [vmem:[%s3 + $0x28] sm:$0xf]
    %v531 = vld [vmem:[%s3 + $0x2c] sm:$0xf]
    %v532 = vld [vmem:[%s3 + $0x30] sm:$0xf]
    %v533 = vld [vmem:[%s3 + $0x34] sm:$0xf]
    %v534 = vld [vmem:[%s3 + $0x38] sm:$0xf]
    %v535 = vld [vmem:[%s4] sm:$0x1]
    %v537 = vlaneseq
    %v538 = vshrl.u32 %v537, 7
    %v539 = vsub.s32 0, %v538
    %v540 = vrot.slane %v535, %v539
    %v557 = vunpack.c.l.b16 %v520
    %v558 = vunpack.c.l.b16 %v521
    %v559 = vunpack.c.l.b16 %v522
    %v560 = vunpack.c.l.b16 %v523
    %v561 = vunpack.c.l.b16 %v524
    %v562 = vunpack.c.l.b16 %v525
    %v563 = vunpack.c.l.b16 %v526
    %v564 = vunpack.c.l.b16 %v527
    %v565 = vunpack.c.l.b16 %v528
    %v566 = vunpack.c.l.b16 %v529
    %v567 = vunpack.c.l.b16 %v530
    %v568 = vunpack.c.l.b16 %v531
    %v569 = vunpack.c.l.b16 %v532
    %v570 = vunpack.c.l.b16 %v533
    %v571 = vunpack.c.l.b16 %v534
    %v572 = vpack.c.b16 %v558, %v557
    %v573 = vpack.c.b16 %v560, %v559
    %v574 = vpack.c.b16 %v562, %v561
    %v575 = vpack.c.b16 %v564, %v563
    %v576 = vpack.c.b16 %v566, %v565
    %v577 = vpack.c.b16 %v568, %v567
    %v578 = vpack.c.b16 %v570, %v569
    %v579 = vpack.c.b16 %v571, %v571
    %vm587 = vcmask 982016
    %v589 = vsel %vm587, %v518, 0
    %v592 = vsel %vm587, %v519, 0
    %vm594 = vcmask 1043456
    %v596 = vsel %vm594, %v579, 0
    %598 = vmatprep.subr.bf16.mxu0 0
    %599 = vmatpush1.bf16.msra.mxu0 %v572
    %600 = vmatprep.subr.bf16.mxu0 0
    %601 = vmatpush1.bf16.msra.mxu0 %v573
    %602 = vmatprep.subr.bf16.mxu0 0
    %603 = vmatpush1.bf16.msra.mxu0 %v574
    %604 = vmatprep.subr.bf16.mxu0 0
    %605 = vmatpush1.bf16.msra.mxu0 %v575
    %606 = vmatprep.subr.bf16.mxu0 0
    %607 = vmatpush1.bf16.msra.mxu0 %v576
    %608 = vmatprep.subr.bf16.mxu0 0
    %609 = vmatpush1.bf16.msra.mxu0 %v577
    %610 = vmatprep.subr.bf16.mxu0 0
    %611 = vmatpush1.bf16.msra.mxu0 %v578
    %612 = vmatprep.subr.bf16.mxu0 0
    %613 = vmatpush1.bf16.msra.mxu0 %v596
    %614 = vmatprep.subr.bf16.mxu0 0
    %615 = vmatpush1.bf16.msra.mxu0 0
    %616 = vmatprep.subr.bf16.mxu0 0
    %617 = vmatpush1.bf16.msra.mxu0 0
    %618 = vmatprep.subr.bf16.mxu0 0
    %619 = vmatpush1.bf16.msra.mxu0 0
    %620 = vmatprep.subr.bf16.mxu0 0
    %621 = vmatpush1.bf16.msra.mxu0 0
    %622 = vmatprep.subr.bf16.mxu0 0
    %623 = vmatpush1.bf16.msra.mxu0 0
    %624 = vmatprep.subr.bf16.mxu0 0
    %625 = vmatpush1.bf16.msra.mxu0 0
    %626 = vmatprep.subr.bf16.mxu0 0
    %627 = vmatpush1.bf16.msra.mxu0 0
    %628 = vmatprep.subr.bf16.mxu0 0
    %629 = vmatpush1.bf16.msra.mxu0 0
    %630 = vmatprep.mubr.bf16.mxu0 0
    %631 = vmatmul.mubr.bf16.gmra.mrb[0].mxu0 %v589
    %v632 = vpop.f32.mrb[0].mxu0
    %v633 = vadd.f32 %v540, %v632
    %v634 = vpop.f32.mrb[0].mxu0
    %v635 = vpop.f32.mrb[0].mxu0
    %v636 = vadd.f32 %v540, %v635
    %v637 = vpop.f32.mrb[0].mxu0
    %638 = vmatprep.mubr.bf16.mxu0 0
    %639 = vmatmul.mubr.bf16.gmra.mrb[0].mxu0 %v592
    %v640 = vpop.f32.mrb[0].mxu0
    %v641 = vadd.f32 %v540, %v640
    %v642 = vpop.f32.mrb[0].mxu0
    %v643 = vpop.f32.mrb[0].mxu0
    %v644 = vadd.f32 %v540, %v643
    %v645 = vpop.f32.mrb[0].mxu0
    %646 = vdwg.mxu0
    %v647 = vmax.f32 %v633, 0.0
    %v648 = vmax.f32 %v636, 0.0
    %v649 = vmax.f32 %v641, 0.0
    %v650 = vmax.f32 %v644, 0.0
    %v651 = vpack.c.bf16 %v648, %v647
    %v652 = vpack.c.bf16 %v650, %v649
    %v653 = vld [vmem:[%s5] sm:$0xf]
    %v654 = vld [vmem:[%s5 + $0x4] sm:$0xf]
    %v655 = vld [vmem:[%s5 + $0x8] sm:$0xf]
    %v656 = vld [vmem:[%s5 + $0xc] sm:$0xf]
    %v657 = vld [vmem:[%s5 + $0x10] sm:$0xf]
    %v658 = vld [vmem:[%s5 + $0x14] sm:$0xf]
    %v659 = vld [vmem:[%s5 + $0x18] sm:$0xf]
    %v660 = vld [vmem:[%s5 + $0x1c] sm:$0xf]
    %v661 = vld [vmem:[%s5 + $0x20] sm:$0xf]
    %v662 = vld [vmem:[%s5 + $0x24] sm:$0xf]
    %v663 = vld [vmem:[%s5 + $0x28] sm:$0x3]
    %v664 = vld [vmem:[%s6] sm:$0x1]
    %v666 = vlaneseq
    %v667 = vshrl.u32 %v666, 7
    %v668 = vsub.s32 0, %v667
    %v669 = vrot.slane %v664, %v668
    %v682 = vunpack.c.l.b16 %v653
    %v683 = vunpack.c.l.b16 %v654
    %v684 = vunpack.c.l.b16 %v655
    %v685 = vunpack.c.l.b16 %v656
    %v686 = vunpack.c.l.b16 %v657
    %v687 = vunpack.c.l.b16 %v658
    %v688 = vunpack.c.l.b16 %v659
    %v689 = vunpack.c.l.b16 %v660
    %v690 = vunpack.c.l.b16 %v661
    %v691 = vunpack.c.l.b16 %v662
    %v692 = vunpack.c.l.b16 %v663
    %v693 = vpack.c.b16 %v683, %v682
    %v694 = vpack.c.b16 %v685, %v684
    %v695 = vpack.c.b16 %v687, %v686
    %v696 = vpack.c.b16 %v689, %v688
    %v697 = vpack.c.b16 %v691, %v690
    %v698 = vpack.c.b16 %v692, %v692
    %vm704 = vcmask 687104
    %v706 = vsel %vm704, %v651, 0
    %v709 = vsel %vm704, %v652, 0
    %vm711 = vcmask 1041408
    %v713 = vsel %vm711, %v698, 0
    %715 = vmatprep.subr.bf16.mxu0 0
    %716 = vmatpush1.bf16.msra.mxu0 %v693
    %717 = vmatprep.subr.bf16.mxu0 0
    %718 = vmatpush1.bf16.msra.mxu0 %v694
    %719 = vmatprep.subr.bf16.mxu0 0
    %720 = vmatpush1.bf16.msra.mxu0 %v695
    %721 = vmatprep.subr.bf16.mxu0 0
    %722 = vmatpush1.bf16.msra.mxu0 %v696
    %723 = vmatprep.subr.bf16.mxu0 0
    %724 = vmatpush1.bf16.msra.mxu0 %v697
    %725 = vmatprep.subr.bf16.mxu0 0
    %726 = vmatpush1.bf16.msra.mxu0 %v713
    %727 = vmatprep.subr.bf16.mxu0 0
    %728 = vmatpush1.bf16.msra.mxu0 0
    %729 = vmatprep.subr.bf16.mxu0 0
    %730 = vmatpush1.bf16.msra.mxu0 0
    %731 = vmatprep.subr.bf16.mxu0 0
    %732 = vmatpush1.bf16.msra.mxu0 0
    %733 = vmatprep.subr.bf16.mxu0 0
    %734 = vmatpush1.bf16.msra.mxu0 0
    %735 = vmatprep.subr.bf16.mxu0 0
    %736 = vmatpush1.bf16.msra.mxu0 0
    %737 = vmatprep.subr.bf16.mxu0 0
    %738 = vmatpush1.bf16.msra.mxu0 0
    %739 = vmatprep.subr.bf16.mxu0 0
    %740 = vmatpush1.bf16.msra.mxu0 0
    %741 = vmatprep.subr.bf16.mxu0 0
    %742 = vmatpush1.bf16.msra.mxu0 0
    %743 = vmatprep.subr.bf16.mxu0 0
    %744 = vmatpush1.bf16.msra.mxu0 0
    %745 = vmatprep.subr.bf16.mxu0 0
    %746 = vmatpush1.bf16.msra.mxu0 0
    %747 = vmatprep.mubr.bf16.mxu0 0
    %748 = vmatmul.mubr.bf16.gmra.mrb[0].mxu0 %v706
    %v749 = vpop.f32.mrb[0].mxu0
    %v750 = vadd.f32 %v669, %v749
    %v751 = vpop.f32.mrb[0].mxu0
    %v752 = vpop.f32.mrb[0].mxu0
    %v753 = vadd.f32 %v669, %v752
    %v754 = vpop.f32.mrb[0].mxu0
    %755 = vmatprep.mubr.bf16.mxu0 0
    %756 = vmatmul.mubr.bf16.gmra.mrb[0].mxu0 %v709
    %v757 = vpop.f32.mrb[0].mxu0
    %v758 = vadd.f32 %v669, %v757
    %v759 = vpop.f32.mrb[0].mxu0
    %v760 = vpop.f32.mrb[0].mxu0
    %v761 = vadd.f32 %v669, %v760
    %v762 = vpop.f32.mrb[0].mxu0
    %763 = vdwg.mxu0
    %vm764 = vcmask 80896
    %v765 = vsel %vm764, %v750, -inf
    %766 = vmax.xlane.f32.xlu0 %v765
    %v767 = vpop.xlane.xlu0 %766
    %v768 = vsel %vm764, %v753, -inf
    %769 = vmax.xlane.f32.xlu0 %v768
    %v770 = vpop.xlane.xlu0 %769
    %v771 = vsel %vm764, %v758, -inf
    %772 = vmax.xlane.f32.xlu0 %v771
    %v773 = vpop.xlane.xlu0 %772
    %v774 = vsel %vm764, %v761, -inf
    %775 = vmax.xlane.f32.xlu0 %v774
    %v776 = vpop.xlane.xlu0 %775
    %v777 = vsub.f32 %v750, %v767
    %v778 = vsub.f32 %v753, %v770
    %v779 = vsub.f32 %v758, %v773
    %v780 = vsub.f32 %v761, %v776
    %v781 = vmul.f32 %v777, 1.442695
    %v782 = vpow.pop %v781
    %v783 = vmul.f32 %v778, 1.442695
    %v784 = vpow.pop %v783
    %v785 = vmul.f32 %v779, 1.442695
    %v786 = vpow.pop %v785
    %v787 = vmul.f32 %v780, 1.442695
    %v788 = vpow.pop %v787
    %v789 = vsel %vm764, %v782, 0.0
    %790 = vadd.xlane.f32.xlu0 %v789
    %v791 = vpop.xlane.xlu0 %790
    %v792 = vsel %vm764, %v784, 0.0
    %793 = vadd.xlane.f32.xlu0 %v792
    %v794 = vpop.xlane.xlu0 %793
    %v795 = vsel %vm764, %v786, 0.0
    %796 = vadd.xlane.f32.xlu0 %v795
    %v797 = vpop.xlane.xlu0 %796
    %v798 = vsel %vm764, %v788, 0.0
    %799 = vadd.xlane.f32.xlu0 %v798
    %v800 = vpop.xlane.xlu0 %799
    %v801 = vlog2.pop %v791
    %v802 = vmul.f32 %v801, 0.6931472
    %v803 = vlog2.pop %v794
    %v804 = vmul.f32 %v803, 0.6931472
    %v805 = vlog2.pop %v797
    %v806 = vmul.f32 %v805, 0.6931472
    %v807 = vlog2.pop %v800
    %v808 = vmul.f32 %v807, 0.6931472
    %v809 = vsub.f32 %v777, %v802
    %v810 = vsub.f32 %v778, %v804
    %v811 = vsub.f32 %v779, %v806
    %v812 = vsub.f32 %v780, %v808
    %813 = vst.msk [vmem:[#allocation2] sm:$0xff] %vm764, %v809
    %814 = vst.msk [vmem:[#allocation2 + $0x8] sm:$0xff] %vm764, %v810
    %815 = vst.msk [vmem:[#allocation2 + $0x10] sm:$0xff] %vm764, %v811
    %816 = vst.msk [vmem:[#allocation2 + $0x18] sm:$0xff] %vm764, %v812
    // Predicated region
    $region30: #{cnn_cifar_forward.5} parent=1 // pred_check
      _
    $region31: #{cnn_cifar_forward.5} parent=1 // pred_check_branch
      %818 = sbr.rel (0) target = $region33
    $region32: #{cnn_cifar_forward.5} parent=1 // pred_region
      %s820 = ssub.s32 512, 32
      %821 = vsyncadd [#allocation3], %s820
      %s822 = sshll.u32 [#allocation2], 4
      %s823 = int_to_ptr.vmem [resolvable:$true] %s822
      %828 = dma.vmem_to_hbm [thread:$0]  %s823, 32, %s7, [#allocation3], 32, 32, 2
    $region33: #{cnn_cifar_forward.5} parent=1 // pred_fallthru
      _
    // Predicated region
    $region34: #{cnn_cifar_forward.5} parent=1 // pred_check
      _
    $region35: #{cnn_cifar_forward.5} parent=1 // pred_check_branch
      %830 = sbr.rel (0) target = $region37
    $region36: #{cnn_cifar_forward.5} parent=1 // pred_region
      %831 = dma.done [#allocation3], 512
    $region37: #{cnn_cifar_forward.5} parent=1 // pred_fallthru
      _
    %832 = vsyncpa [#allocation3], 1

</llo_original>
